<compile_context>
chip_gen: v7x
topology: tpu7x:2x2x1
jax: 0.10.0
libtpu: 0.0.40
codegen_flags: <defaults>
</compile_context>

<pallas_src>
import numpy as np
import jax
import jax.numpy as jnp
from jax import lax
from jax.experimental import pallas as pl
from jax.experimental.pallas import tpu as pltpu

# ----------------------- model hyper-parameters (small) -----------------------
N_STATS = 11            # number of statistical features (length column is index 11)
VOCAB = 50
VOCAB_PAD = 64          # gather-table rows per direction (8-aligned, >= VOCAB)
EMB_DIM = 32            # emb_dim
HIDDEN_DIM = 32         # GRU hidden dim (per direction)
HIDDEN_LAYER_DIM = 16   # final dense hidden
STAT_LAYERS = (16, 8)   # stat_dense layer sizes
T_MAX = 8               # max sequence length
BATCH = 8

H = HIDDEN_DIM
H2 = 2 * HIDDEN_DIM     # 64
G6 = 6 * HIDDEN_DIM     # 192

# ---- packed gru-parameter buffer layout (8-row aligned) ----
GRU_BHN_ROW = H2        # row 64 : n-gate recurrent bias [bhn_f | bhn_b] in cols 0:2H
GRU_WATT_ROW = H2 + 8   # row 72 : attention weights in cols 0:2H
GRU_ROWS = H2 + 16      # 80


def _head_layout():
    """8-row-aligned packing of all dense-head weights into one (rows, 16) buffer."""
    s_in = N_STATS + 1
    s1, s2 = STAT_LAYERS
    hl = HIDDEN_LAYER_DIM
    d2 = 2 * HIDDEN_DIM
    shapes = [('ws1', (s_in, s1)), ('bs1', (1, s1)),
              ('ws2', (s1, s2)), ('bs2', (1, s2)),
              ('wf1', (d2 + s2, hl)),           # [wf1a ; wf1b] stacked contiguously
              ('bf1', (1, hl)),
              ('wf2', (hl, 1)), ('bf2', (1, 1))]
    width = max(c for _, (_, c) in shapes)
    layout, off = {}, 0
    for name, (r, c) in shapes:
        layout[name] = (off, r, c)
        off += ((r + 7) // 8) * 8               # next block starts 8-row aligned
    return width, layout, off


HEAD_W, HEAD_LAYOUT, HEAD_ROWS = _head_layout()


# ------------------------------- fused Pallas kernel -------------------------------
def quora_fused_kernel(x_ref, hid_ref, tab_ref, gru_ref, head_ref, out_ref):
    """Fully fused forward pass: token gather + bi-GRU + masked attention + head.

    x_ref   : (B, N_STATS+1+T) int32  — stats, length, token ids
    hid_ref : (2, B, H) f32           — initial hidden [fwd; bwd]
    tab_ref : (2*VOCAB_PAD, 6H) f32   — fwd/bwd one-hot gather table (see prepare_packed)
    gru_ref : (GRU_ROWS, 6H) f32      — recurrent weights / n-bias / attention weights
    head_ref: (HEAD_ROWS, 16) f32     — packed dense-head weights (see HEAD_LAYOUT)
    out_ref : (B, 1) f32
    """
    B = x_ref.shape[0]
    T = T_MAX

    xi = x_ref[...]                                           # (B, 12+T) int32
    x_stat = xi[:, 0:N_STATS + 1].astype(jnp.float32)         # (B, 12)
    lens = x_stat[:, N_STATS:N_STATS + 1]                     # (B, 1) float lengths
    toks = xi[:, N_STATS + 1:N_STATS + 1 + T]                 # (B, T) token ids

    tab = tab_ref[...]                                        # (2*VP, 6H)
    whh = gru_ref[0:H2, :]                                    # (2H, 6H) block-diag, interleaved cols
    bhn = gru_ref[GRU_BHN_ROW:GRU_BHN_ROW + 1, 0:H2]          # (1, 2H) n-gate recurrent bias
    watt = gru_ref[GRU_WATT_ROW:GRU_WATT_ROW + 1, 0:H2]       # (1, 2H) attention weights
    bhn_bc = jnp.broadcast_to(bhn, (B, H2))                   # hoisted broadcasts
    wf_bc = jnp.broadcast_to(watt[:, 0:H], (B, H))
    wb_bc = jnp.broadcast_to(watt[:, H:H2], (B, H))
    i2v = lax.broadcasted_iota(jnp.int32, (B, 2 * VOCAB_PAD), 1)

    # ---- merged fwd/bwd GRU recurrence, fully unrolled (T static) ----
    # TODO(synk): could hold `whh` MXU-resident via pltpu.matmul_push_rhs across
    # the 8 dependent steps; kept as jnp.dot for lowering robustness.
    h = jnp.concatenate([hid_ref[0], hid_ref[1]], axis=-1)    # (B, 2H) = [h_f | h_b]
    hs = []                                                   # hs[i] = [h_f(i) | h_b(T-1-i)]
    for i in range(T):
        # one-hot gather: token i feeds the fwd gate lanes, token T-1-i the bwd lanes
        oh = ((i2v == toks[:, i:i + 1]) |
              (i2v == toks[:, T - 1 - i:T - i] + VOCAB_PAD)).astype(jnp.float32)
        gi = jnp.dot(oh, tab, preferred_element_type=jnp.float32)        # (B, 6H)
        gh = jnp.dot(h, whh, preferred_element_type=jnp.float32)         # (B, 6H)
        rz = jax.nn.sigmoid(gi[:, 0:2 * H2] + gh[:, 0:2 * H2])           # fused r|z, 128 lanes
        r, z = rz[:, 0:H2], rz[:, H2:2 * H2]
        n = jnp.tanh(gi[:, 2 * H2:G6] + r * (gh[:, 2 * H2:G6] + bhn_bc))
        h = (1.0 - z) * n + z * h
        hs.append(h)

    # ---- masked self-attention (softmax -> mask -> renorm == single normalization) ----
    sf = [jnp.sum(hs[t][:, 0:H] * wf_bc, axis=1, keepdims=True) for t in range(T)]
    sb = [jnp.sum(hs[t][:, H:H2] * wb_bc, axis=1, keepdims=True) for t in range(T)]
    s = [jnp.tanh(sf[t] + sb[T - 1 - t]) for t in range(T)]   # score at time t
    m = s[0]
    for t in range(1, T):
        m = jnp.maximum(m, s[t])
    # keep position t iff t >= T - len; driver guarantees len >= 1, so the
    # normalizer below can never be zero (matches the PyTorch reference).
    e = [jnp.exp(s[t] - m) * (lens >= jnp.float32(T - t)).astype(jnp.float32)
         for t in range(T)]
    den = e[0]
    for t in range(1, T):
        den = den + e[t]
    inv = pl.reciprocal(den, approx=True)                     # (B, 1)
    w = [e[t] * inv for t in range(T)]
    rep_f = w[0] * hs[0][:, 0:H]
    rep_b = w[T - 1] * hs[0][:, H:H2]                         # bwd half of hs[0] is time T-1
    for t in range(1, T):
        rep_f = rep_f + w[t] * hs[t][:, 0:H]
        rep_b = rep_b + w[T - 1 - t] * hs[t][:, H:H2]

    # ---- stat dense + final dense + sigmoid (dropout = identity in eval) ----
    def blk(name):
        off, r, c = HEAD_LAYOUT[name]
        return head_ref[off:off + r, 0:c]

    h1 = jnp.maximum(jnp.dot(x_stat, blk('ws1'),
                             preferred_element_type=jnp.float32) + blk('bs1'), 0.0)
    h2 = jnp.maximum(jnp.dot(h1, blk('ws2'),
                             preferred_element_type=jnp.float32) + blk('bs2'), 0.0)
    cat = jnp.concatenate([rep_f, rep_b, h2], axis=-1)        # (B, 2H + S2)
    z1 = jnp.maximum(jnp.dot(cat, blk('wf1'),
                             preferred_element_type=jnp.float32) + blk('bf1'), 0.0)
    z2 = jnp.dot(z1, blk('wf2'), preferred_element_type=jnp.float32) + blk('bf2')
    out_ref[...] = jax.nn.sigmoid(z2)


# ------------------------------- parameter packing -------------------------------
def prepare_packed(params):
    """One-time host-side packing of all parameters for the fused kernel."""
    emb = np.asarray(params['emb'], np.float32)
    base_f = emb @ np.asarray(params['wih_f'], np.float32) + np.asarray(params['bih_f'], np.float32)
    base_b = emb @ np.asarray(params['wih_b'], np.float32) + np.asarray(params['bih_b'], np.float32)
    bhh_f = np.asarray(params['bhh_f'], np.float32).reshape(3 * H)
    bhh_b = np.asarray(params['bhh_b'], np.float32).reshape(3 * H)
    # Fold the r/z recurrent biases into the per-token projections (same sigmoid);
    # the n-gate recurrent bias must stay separate (multiplied by r inside tanh).
    base_f[:, 0:2 * H] += bhh_f[0:2 * H]
    base_b[:, 0:2 * H] += bhh_b[0:2 * H]

    # Combined fwd/bwd gather table, gate-interleaved columns [r_f r_b z_f z_b n_f n_b]:
    # rows 0:VOCAB_PAD populate only the fwd columns, rows VOCAB_PAD:2*VOCAB_PAD only
    # the bwd columns, so a single one-hot matmul (hot lanes tok_fwd and
    # VOCAB_PAD + tok_bwd) builds one merged step input.
    tab = np.zeros((2 * VOCAB_PAD, G6), np.float32)
    for g in range(3):
        tab[0:VOCAB, (2 * g) * H:(2 * g + 1) * H] = base_f[:, g * H:(g + 1) * H]
        tab[VOCAB_PAD:VOCAB_PAD + VOCAB, (2 * g + 1) * H:(2 * g + 2) * H] = base_b[:, g * H:(g + 1) * H]

    # Block-diagonal recurrent weights (gate-interleaved cols), n-gate bias, attention w.
    gru = np.zeros((GRU_ROWS, G6), np.float32)
    whh_f = np.asarray(params['whh_f'], np.float32)
    whh_b = np.asarray(params['whh_b'], np.float32)
    for g in range(3):
        gru[0:H, (2 * g) * H:(2 * g + 1) * H] = whh_f[:, g * H:(g + 1) * H]
        gru[H:H2, (2 * g + 1) * H:(2 * g + 2) * H] = whh_b[:, g * H:(g + 1) * H]
    gru[GRU_BHN_ROW, 0:H] = bhh_f[2 * H:3 * H]
    gru[GRU_BHN_ROW, H:H2] = bhh_b[2 * H:3 * H]
    gru[GRU_WATT_ROW, 0:H2] = np.asarray(params['w_att'], np.float32).reshape(H2)

    # Dense head: wf1a/wf1b packed contiguously so z1 is a single matmul.
    head = np.zeros((HEAD_ROWS, HEAD_W), np.float32)
    head_vals = {
        'ws1': params['ws1'], 'bs1': params['bs1'],
        'ws2': params['ws2'], 'bs2': params['bs2'],
        'wf1': np.concatenate([np.asarray(params['wf1a'], np.float32),
                               np.asarray(params['wf1b'], np.float32)], axis=0),
        'bf1': params['bf1'], 'wf2': params['wf2'], 'bf2': params['bf2'],
    }
    for name, (off, r, c) in HEAD_LAYOUT.items():
        head[off:off + r, 0:c] = np.asarray(head_vals[name], np.float32).reshape(r, c)

    return {'tab': jnp.asarray(tab), 'gru_pack': jnp.asarray(gru),
            'head_pack': jnp.asarray(head)}


# ------------------------------- host-side glue (jittable) -------------------------------
@jax.jit
def quora_forward_pallas(x, hidden, packed):
    """x: (B, N_STATS+1+T_MAX) int32; hidden: (2, B, H) f32; packed: prepare_packed()."""
    B = x.shape[0]
    return pl.pallas_call(
        quora_fused_kernel,
        out_shape=jax.ShapeDtypeStruct((B, 1), jnp.float32),
        in_specs=[pl.BlockSpec(memory_space=pltpu.MemorySpace.VMEM)] * 5,
        out_specs=pl.BlockSpec(memory_space=pltpu.MemorySpace.VMEM),
    )(x, hidden, packed['tab'], packed['gru_pack'], packed['head_pack'])


# ----------------------------- pure-JAX reference -----------------------------
def quora_forward_ref(x, params):
    B = x.shape[0]
    lengths = np.asarray(x[:, N_STATS]).astype(np.int32)
    T = int(lengths.max())
    x_text = x[:, -T:]
    x_stat = jnp.asarray(x[:, :N_STATS + 1], jnp.float32)
    emb = params['emb'][x_text]                               # (B, T, E)
    Hd = params['whh_f'].shape[0]

    def run_dir(wih, whh, bih, bhh, reverse):
        h = jnp.zeros((B, Hd), jnp.float32)
        outs = [None] * T
        order = range(T - 1, -1, -1) if reverse else range(T)
        for t in order:
            x_t = emb[:, t, :]
            gi = x_t @ wih + bih
            gh = h @ whh + bhh
            r = jax.nn.sigmoid(gi[:, :Hd] + gh[:, :Hd])
            z = jax.nn.sigmoid(gi[:, Hd:2 * Hd] + gh[:, Hd:2 * Hd])
            n = jnp.tanh(gi[:, 2 * Hd:] + r * gh[:, 2 * Hd:])
            h = (1.0 - z) * n + z * h
            outs[t] = h
        return jnp.stack(outs, axis=1)                        # (B, T, H)

    of = run_dir(params['wih_f'], params['whh_f'], params['bih_f'], params['bhh_f'], False)
    ob = run_dir(params['wih_b'], params['whh_b'], params['bih_b'], params['bhh_b'], True)
    grub = jnp.concatenate([of, ob], axis=-1)                 # (B, T, 2H)

    scores = jnp.tanh(jnp.einsum('btd,d->bt', grub, params['w_att'][0, 0]))
    sm = jax.nn.softmax(scores, axis=-1)
    mask = (np.arange(T)[None, :] >= (T - lengths[:, None])).astype(np.float32)
    masked = sm * mask
    norm = masked / masked.sum(-1, keepdims=True)
    rep = jnp.einsum('bt,btd->bd', norm, grub)

    h1 = jax.nn.relu(x_stat @ params['ws1'] + params['bs1'])
    h2 = jax.nn.relu(h1 @ params['ws2'] + params['bs2'])
    z1 = jax.nn.relu(rep @ params['wf1a'] + h2 @ params['wf1b'] + params['bf1'])
    return jax.nn.sigmoid(z1 @ params['wf2'] + params['bf2'])


# --------------------------------- parameters ---------------------------------
def make_params(key):
    ks = jax.random.split(key, 24)
    E, Hd, D2 = EMB_DIM, HIDDEN_DIM, 2 * HIDDEN_DIM
    S_IN = N_STATS + 1
    S1, S2 = STAT_LAYERS
    HL = HIDDEN_LAYER_DIM
    k = 1.0 / np.sqrt(Hd)
    u = lambda kk, shape, lo, hi: jax.random.uniform(kk, shape, jnp.float32, lo, hi)
    return {
        'emb':   jax.random.normal(ks[0], (VOCAB, E), jnp.float32) * 0.1,
        'wih_f': u(ks[1], (E, 3 * Hd), -k, k), 'whh_f': u(ks[2], (Hd, 3 * Hd), -k, k),
        'bih_f': u(ks[3], (1, 3 * Hd), -k, k), 'bhh_f': u(ks[4], (1, 3 * Hd), -k, k),
        'wih_b': u(ks[5], (E, 3 * Hd), -k, k), 'whh_b': u(ks[6], (Hd, 3 * Hd), -k, k),
        'bih_b': u(ks[7], (1, 3 * Hd), -k, k), 'bhh_b': u(ks[8], (1, 3 * Hd), -k, k),
        'w_att': u(ks[9], (1, 1, D2), -0.005, 0.005),
        'ws1':   u(ks[10], (S_IN, S1), -0.3, 0.3), 'bs1': u(ks[11], (1, S1), -0.1, 0.1),
        'ws2':   u(ks[12], (S1, S2), -0.3, 0.3),   'bs2': u(ks[13], (1, S2), -0.1, 0.1),
        'wf1a':  u(ks[14], (D2, HL), -0.1, 0.1),   'wf1b': u(ks[15], (S2, HL), -0.1, 0.1),
        'bf1':   u(ks[16], (1, HL), -0.1, 0.1),
        'wf2':   u(ks[17], (HL, 1), -0.3, 0.3),    'bf2': u(ks[18], (1, 1), -0.1, 0.1),
    }


if __name__ == "__main__":
    key = jax.random.PRNGKey(0)
    k_par, k_stat, k_len, k_tok = jax.random.split(key, 4)
    params = make_params(k_par)
    packed = prepare_packed(params)

    stats = jax.random.randint(k_stat, (BATCH, N_STATS), 0, 10, jnp.int32)
    lengths = jax.random.randint(k_len, (BATCH,), 1, T_MAX + 1, jnp.int32)
    lengths = lengths.at[0].set(T_MAX)           # ensure max length == T_MAX (matches original seq_len slicing)
    tokens = jax.random.randint(k_tok, (BATCH, T_MAX), 1, VOCAB, jnp.int32)
    x = jnp.concatenate([stats, lengths[:, None], tokens], axis=1).astype(jnp.int32)

    hidden = jnp.zeros((2 * 1, BATCH, HIDDEN_DIM), jnp.float32)   # init_hidden

    out = quora_forward_pallas(x, hidden, packed)
    out = jax.block_until_ready(out)

    ref = jax.block_until_ready(quora_forward_ref(x, params))
    assert out.shape == (BATCH, 1)
    assert np.allclose(np.asarray(out), np.asarray(ref), rtol=1e-3, atol=1e-3), (
        f"mismatch: pallas={np.asarray(out).ravel()} ref={np.asarray(ref).ravel()}")

    print("KERNEL_OK")
</pallas_src>

<mosaic_0001>
module attributes {stable_mosaic.version = 11 : i64} {
  func.func @quora_fused_kernel(%arg0: memref<8x20xi32, #tpu.memory_space<vmem>>, %arg1: memref<2x8x32xf32, #tpu.memory_space<vmem>>, %arg2: memref<128x192xf32, #tpu.memory_space<vmem>>, %arg3: memref<80x192xf32, #tpu.memory_space<vmem>>, %arg4: memref<152x16xf32, #tpu.memory_space<vmem>>, %arg5: memref<8x1xf32, #tpu.memory_space<vmem>>) attributes {dimension_semantics = [], scalar_prefetch = 0 : i64, scratch_operands = 0 : i64, tpu.core_type = #tpu.core_type<tc>} {
    %c0 = arith.constant 0 : index
    %c0_0 = arith.constant 0 : index
    %0 = vector.load %arg0[%c0, %c0_0] : memref<8x20xi32, #tpu.memory_space<vmem>>, vector<8x20xi32>
    %1 = vector.extract_strided_slice %0 {offsets = [0, 0], sizes = [8, 12], strides = [1, 1]} : vector<8x20xi32> to vector<8x12xi32>
    %2 = arith.sitofp %1 : vector<8x12xi32> to vector<8x12xf32>
    %3 = vector.extract_strided_slice %2 {offsets = [0, 11], sizes = [8, 1], strides = [1, 1]} : vector<8x12xf32> to vector<8x1xf32>
    %4 = vector.extract_strided_slice %0 {offsets = [0, 12], sizes = [8, 8], strides = [1, 1]} : vector<8x20xi32> to vector<8x8xi32>
    %c0_1 = arith.constant 0 : index
    %c0_2 = arith.constant 0 : index
    %5 = vector.load %arg2[%c0_1, %c0_2] : memref<128x192xf32, #tpu.memory_space<vmem>>, vector<128x192xf32>
    %c0_3 = arith.constant 0 : index
    %c0_4 = arith.constant 0 : index
    %6 = vector.load %arg3[%c0_3, %c0_4] : memref<80x192xf32, #tpu.memory_space<vmem>>, vector<64x192xf32>
    %c64 = arith.constant 64 : index
    %c0_5 = arith.constant 0 : index
    %7 = vector.load %arg3[%c64, %c0_5] : memref<80x192xf32, #tpu.memory_space<vmem>>, vector<1x64xf32>
    %c72 = arith.constant 72 : index
    %c0_6 = arith.constant 0 : index
    %8 = vector.load %arg3[%c72, %c0_6] : memref<80x192xf32, #tpu.memory_space<vmem>>, vector<1x64xf32>
    %9 = vector.shape_cast %7 : vector<1x64xf32> to vector<1x64xf32>
    %10 = vector.broadcast %9 : vector<1x64xf32> to vector<8x64xf32>
    %11 = vector.extract_strided_slice %8 {offsets = [0, 0], sizes = [1, 32], strides = [1, 1]} : vector<1x64xf32> to vector<1x32xf32>
    %12 = vector.shape_cast %11 : vector<1x32xf32> to vector<1x32xf32>
    %13 = vector.broadcast %12 : vector<1x32xf32> to vector<8x32xf32>
    %14 = vector.extract_strided_slice %8 {offsets = [0, 32], sizes = [1, 32], strides = [1, 1]} : vector<1x64xf32> to vector<1x32xf32>
    %15 = vector.shape_cast %14 : vector<1x32xf32> to vector<1x32xf32>
    %16 = vector.broadcast %15 : vector<1x32xf32> to vector<8x32xf32>
    %17 = tpu.iota {dimensions = array<i32: 1>} : vector<8x128xi32>
    %c0_7 = arith.constant 0 : index
    %c0_8 = arith.constant 0 : index
    %c0_9 = arith.constant 0 : index
    %18 = vector.load %arg1[%c0_7, %c0_8, %c0_9] : memref<2x8x32xf32, #tpu.memory_space<vmem>>, vector<1x8x32xf32>
    %19 = vector.shape_cast %18 : vector<1x8x32xf32> to vector<8x32xf32>
    %c1 = arith.constant 1 : index
    %c0_10 = arith.constant 0 : index
    %c0_11 = arith.constant 0 : index
    %20 = vector.load %arg1[%c1, %c0_10, %c0_11] : memref<2x8x32xf32, #tpu.memory_space<vmem>>, vector<1x8x32xf32>
    %21 = vector.shape_cast %20 : vector<1x8x32xf32> to vector<8x32xf32>
    %22 = tpu.concatenate %19, %21 in 1 : vector<8x32xf32>, vector<8x32xf32> -> vector<8x64xf32>
    %23 = vector.extract_strided_slice %4 {offsets = [0, 0], sizes = [8, 1], strides = [1, 1]} : vector<8x8xi32> to vector<8x1xi32>
    %24 = vector.broadcast %23 : vector<8x1xi32> to vector<8x128xi32>
    %25 = arith.cmpi eq, %17, %24 : vector<8x128xi32>
    %26 = vector.extract_strided_slice %4 {offsets = [0, 7], sizes = [8, 1], strides = [1, 1]} : vector<8x8xi32> to vector<8x1xi32>
    %c64_i32 = arith.constant 64 : i32
    %27 = vector.broadcast %c64_i32 : i32 to vector<8x1xi32>
    %28 = arith.addi %26, %27 : vector<8x1xi32>
    %29 = vector.broadcast %28 : vector<8x1xi32> to vector<8x128xi32>
    %30 = arith.cmpi eq, %17, %29 : vector<8x128xi32>
    %31 = arith.ori %25, %30 : vector<8x128xi1>
    %32 = arith.extui %31 : vector<8x128xi1> to vector<8x128xi32>
    %33 = arith.sitofp %32 : vector<8x128xi32> to vector<8x128xf32>
    %cst = arith.constant dense<0.000000e+00> : vector<8x192xf32>
    %34 = tpu.matmul %33, %5, %cst {dimension_numbers = #tpu.dot_dimension_numbers<[1], [0], [0], [1], [0, 0, 1, 1], [], []>} : vector<8x128xf32>, vector<128x192xf32>, vector<8x192xf32> -> vector<8x192xf32>
    %cst_12 = arith.constant dense<0.000000e+00> : vector<8x192xf32>
    %35 = tpu.matmul %22, %6, %cst_12 {dimension_numbers = #tpu.dot_dimension_numbers<[1], [0], [0], [1], [0, 0, 1, 1], [], []>} : vector<8x64xf32>, vector<64x192xf32>, vector<8x192xf32> -> vector<8x192xf32>
    %36 = vector.extract_strided_slice %34 {offsets = [0, 0], sizes = [8, 128], strides = [1, 1]} : vector<8x192xf32> to vector<8x128xf32>
    %37 = vector.extract_strided_slice %35 {offsets = [0, 0], sizes = [8, 128], strides = [1, 1]} : vector<8x192xf32> to vector<8x128xf32>
    %38 = arith.addf %36, %37 : vector<8x128xf32>
    %39 = arith.negf %38 : vector<8x128xf32>
    %40 = math.exp %39 : vector<8x128xf32>
    %cst_13 = arith.constant 1.000000e+00 : f32
    %41 = vector.broadcast %cst_13 : f32 to vector<8x128xf32>
    %42 = arith.addf %41, %40 : vector<8x128xf32>
    %43 = arith.divf %41, %42 : vector<8x128xf32>
    %44 = vector.extract_strided_slice %43 {offsets = [0, 0], sizes = [8, 64], strides = [1, 1]} : vector<8x128xf32> to vector<8x64xf32>
    %45 = vector.extract_strided_slice %43 {offsets = [0, 64], sizes = [8, 64], strides = [1, 1]} : vector<8x128xf32> to vector<8x64xf32>
    %46 = vector.extract_strided_slice %34 {offsets = [0, 128], sizes = [8, 64], strides = [1, 1]} : vector<8x192xf32> to vector<8x64xf32>
    %47 = vector.extract_strided_slice %35 {offsets = [0, 128], sizes = [8, 64], strides = [1, 1]} : vector<8x192xf32> to vector<8x64xf32>
    %48 = arith.addf %47, %10 : vector<8x64xf32>
    %49 = arith.mulf %44, %48 : vector<8x64xf32>
    %50 = arith.addf %46, %49 : vector<8x64xf32>
    %51 = math.tanh %50 : vector<8x64xf32>
    %cst_14 = arith.constant 1.000000e+00 : f32
    %52 = vector.broadcast %cst_14 : f32 to vector<8x64xf32>
    %53 = arith.subf %52, %45 : vector<8x64xf32>
    %54 = arith.mulf %53, %51 : vector<8x64xf32>
    %55 = arith.mulf %45, %22 : vector<8x64xf32>
    %56 = arith.addf %54, %55 : vector<8x64xf32>
    %57 = vector.extract_strided_slice %4 {offsets = [0, 1], sizes = [8, 1], strides = [1, 1]} : vector<8x8xi32> to vector<8x1xi32>
    %58 = vector.broadcast %57 : vector<8x1xi32> to vector<8x128xi32>
    %59 = arith.cmpi eq, %17, %58 : vector<8x128xi32>
    %60 = vector.extract_strided_slice %4 {offsets = [0, 6], sizes = [8, 1], strides = [1, 1]} : vector<8x8xi32> to vector<8x1xi32>
    %c64_i32_15 = arith.constant 64 : i32
    %61 = vector.broadcast %c64_i32_15 : i32 to vector<8x1xi32>
    %62 = arith.addi %60, %61 : vector<8x1xi32>
    %63 = vector.broadcast %62 : vector<8x1xi32> to vector<8x128xi32>
    %64 = arith.cmpi eq, %17, %63 : vector<8x128xi32>
    %65 = arith.ori %59, %64 : vector<8x128xi1>
    %66 = arith.extui %65 : vector<8x128xi1> to vector<8x128xi32>
    %67 = arith.sitofp %66 : vector<8x128xi32> to vector<8x128xf32>
    %cst_16 = arith.constant dense<0.000000e+00> : vector<8x192xf32>
    %68 = tpu.matmul %67, %5, %cst_16 {dimension_numbers = #tpu.dot_dimension_numbers<[1], [0], [0], [1], [0, 0, 1, 1], [], []>} : vector<8x128xf32>, vector<128x192xf32>, vector<8x192xf32> -> vector<8x192xf32>
    %cst_17 = arith.constant dense<0.000000e+00> : vector<8x192xf32>
    %69 = tpu.matmul %56, %6, %cst_17 {dimension_numbers = #tpu.dot_dimension_numbers<[1], [0], [0], [1], [0, 0, 1, 1], [], []>} : vector<8x64xf32>, vector<64x192xf32>, vector<8x192xf32> -> vector<8x192xf32>
    %70 = vector.extract_strided_slice %68 {offsets = [0, 0], sizes = [8, 128], strides = [1, 1]} : vector<8x192xf32> to vector<8x128xf32>
    %71 = vector.extract_strided_slice %69 {offsets = [0, 0], sizes = [8, 128], strides = [1, 1]} : vector<8x192xf32> to vector<8x128xf32>
    %72 = arith.addf %70, %71 : vector<8x128xf32>
    %73 = arith.negf %72 : vector<8x128xf32>
    %74 = math.exp %73 : vector<8x128xf32>
    %cst_18 = arith.constant 1.000000e+00 : f32
    %75 = vector.broadcast %cst_18 : f32 to vector<8x128xf32>
    %76 = arith.addf %75, %74 : vector<8x128xf32>
    %77 = arith.divf %75, %76 : vector<8x128xf32>
    %78 = vector.extract_strided_slice %77 {offsets = [0, 0], sizes = [8, 64], strides = [1, 1]} : vector<8x128xf32> to vector<8x64xf32>
    %79 = vector.extract_strided_slice %77 {offsets = [0, 64], sizes = [8, 64], strides = [1, 1]} : vector<8x128xf32> to vector<8x64xf32>
    %80 = vector.extract_strided_slice %68 {offsets = [0, 128], sizes = [8, 64], strides = [1, 1]} : vector<8x192xf32> to vector<8x64xf32>
    %81 = vector.extract_strided_slice %69 {offsets = [0, 128], sizes = [8, 64], strides = [1, 1]} : vector<8x192xf32> to vector<8x64xf32>
    %82 = arith.addf %81, %10 : vector<8x64xf32>
    %83 = arith.mulf %78, %82 : vector<8x64xf32>
    %84 = arith.addf %80, %83 : vector<8x64xf32>
    %85 = math.tanh %84 : vector<8x64xf32>
    %cst_19 = arith.constant 1.000000e+00 : f32
    %86 = vector.broadcast %cst_19 : f32 to vector<8x64xf32>
    %87 = arith.subf %86, %79 : vector<8x64xf32>
    %88 = arith.mulf %87, %85 : vector<8x64xf32>
    %89 = arith.mulf %79, %56 : vector<8x64xf32>
    %90 = arith.addf %88, %89 : vector<8x64xf32>
    %91 = vector.extract_strided_slice %4 {offsets = [0, 2], sizes = [8, 1], strides = [1, 1]} : vector<8x8xi32> to vector<8x1xi32>
    %92 = vector.broadcast %91 : vector<8x1xi32> to vector<8x128xi32>
    %93 = arith.cmpi eq, %17, %92 : vector<8x128xi32>
    %94 = vector.extract_strided_slice %4 {offsets = [0, 5], sizes = [8, 1], strides = [1, 1]} : vector<8x8xi32> to vector<8x1xi32>
    %c64_i32_20 = arith.constant 64 : i32
    %95 = vector.broadcast %c64_i32_20 : i32 to vector<8x1xi32>
    %96 = arith.addi %94, %95 : vector<8x1xi32>
    %97 = vector.broadcast %96 : vector<8x1xi32> to vector<8x128xi32>
    %98 = arith.cmpi eq, %17, %97 : vector<8x128xi32>
    %99 = arith.ori %93, %98 : vector<8x128xi1>
    %100 = arith.extui %99 : vector<8x128xi1> to vector<8x128xi32>
    %101 = arith.sitofp %100 : vector<8x128xi32> to vector<8x128xf32>
    %cst_21 = arith.constant dense<0.000000e+00> : vector<8x192xf32>
    %102 = tpu.matmul %101, %5, %cst_21 {dimension_numbers = #tpu.dot_dimension_numbers<[1], [0], [0], [1], [0, 0, 1, 1], [], []>} : vector<8x128xf32>, vector<128x192xf32>, vector<8x192xf32> -> vector<8x192xf32>
    %cst_22 = arith.constant dense<0.000000e+00> : vector<8x192xf32>
    %103 = tpu.matmul %90, %6, %cst_22 {dimension_numbers = #tpu.dot_dimension_numbers<[1], [0], [0], [1], [0, 0, 1, 1], [], []>} : vector<8x64xf32>, vector<64x192xf32>, vector<8x192xf32> -> vector<8x192xf32>
    %104 = vector.extract_strided_slice %102 {offsets = [0, 0], sizes = [8, 128], strides = [1, 1]} : vector<8x192xf32> to vector<8x128xf32>
    %105 = vector.extract_strided_slice %103 {offsets = [0, 0], sizes = [8, 128], strides = [1, 1]} : vector<8x192xf32> to vector<8x128xf32>
    %106 = arith.addf %104, %105 : vector<8x128xf32>
    %107 = arith.negf %106 : vector<8x128xf32>
    %108 = math.exp %107 : vector<8x128xf32>
    %cst_23 = arith.constant 1.000000e+00 : f32
    %109 = vector.broadcast %cst_23 : f32 to vector<8x128xf32>
    %110 = arith.addf %109, %108 : vector<8x128xf32>
    %111 = arith.divf %109, %110 : vector<8x128xf32>
    %112 = vector.extract_strided_slice %111 {offsets = [0, 0], sizes = [8, 64], strides = [1, 1]} : vector<8x128xf32> to vector<8x64xf32>
    %113 = vector.extract_strided_slice %111 {offsets = [0, 64], sizes = [8, 64], strides = [1, 1]} : vector<8x128xf32> to vector<8x64xf32>
    %114 = vector.extract_strided_slice %102 {offsets = [0, 128], sizes = [8, 64], strides = [1, 1]} : vector<8x192xf32> to vector<8x64xf32>
    %115 = vector.extract_strided_slice %103 {offsets = [0, 128], sizes = [8, 64], strides = [1, 1]} : vector<8x192xf32> to vector<8x64xf32>
    %116 = arith.addf %115, %10 : vector<8x64xf32>
    %117 = arith.mulf %112, %116 : vector<8x64xf32>
    %118 = arith.addf %114, %117 : vector<8x64xf32>
    %119 = math.tanh %118 : vector<8x64xf32>
    %cst_24 = arith.constant 1.000000e+00 : f32
    %120 = vector.broadcast %cst_24 : f32 to vector<8x64xf32>
    %121 = arith.subf %120, %113 : vector<8x64xf32>
    %122 = arith.mulf %121, %119 : vector<8x64xf32>
    %123 = arith.mulf %113, %90 : vector<8x64xf32>
    %124 = arith.addf %122, %123 : vector<8x64xf32>
    %125 = vector.extract_strided_slice %4 {offsets = [0, 3], sizes = [8, 1], strides = [1, 1]} : vector<8x8xi32> to vector<8x1xi32>
    %126 = vector.broadcast %125 : vector<8x1xi32> to vector<8x128xi32>
    %127 = arith.cmpi eq, %17, %126 : vector<8x128xi32>
    %128 = vector.extract_strided_slice %4 {offsets = [0, 4], sizes = [8, 1], strides = [1, 1]} : vector<8x8xi32> to vector<8x1xi32>
    %c64_i32_25 = arith.constant 64 : i32
    %129 = vector.broadcast %c64_i32_25 : i32 to vector<8x1xi32>
    %130 = arith.addi %128, %129 : vector<8x1xi32>
    %131 = vector.broadcast %130 : vector<8x1xi32> to vector<8x128xi32>
    %132 = arith.cmpi eq, %17, %131 : vector<8x128xi32>
    %133 = arith.ori %127, %132 : vector<8x128xi1>
    %134 = arith.extui %133 : vector<8x128xi1> to vector<8x128xi32>
    %135 = arith.sitofp %134 : vector<8x128xi32> to vector<8x128xf32>
    %cst_26 = arith.constant dense<0.000000e+00> : vector<8x192xf32>
    %136 = tpu.matmul %135, %5, %cst_26 {dimension_numbers = #tpu.dot_dimension_numbers<[1], [0], [0], [1], [0, 0, 1, 1], [], []>} : vector<8x128xf32>, vector<128x192xf32>, vector<8x192xf32> -> vector<8x192xf32>
    %cst_27 = arith.constant dense<0.000000e+00> : vector<8x192xf32>
    %137 = tpu.matmul %124, %6, %cst_27 {dimension_numbers = #tpu.dot_dimension_numbers<[1], [0], [0], [1], [0, 0, 1, 1], [], []>} : vector<8x64xf32>, vector<64x192xf32>, vector<8x192xf32> -> vector<8x192xf32>
    %138 = vector.extract_strided_slice %136 {offsets = [0, 0], sizes = [8, 128], strides = [1, 1]} : vector<8x192xf32> to vector<8x128xf32>
    %139 = vector.extract_strided_slice %137 {offsets = [0, 0], sizes = [8, 128], strides = [1, 1]} : vector<8x192xf32> to vector<8x128xf32>
    %140 = arith.addf %138, %139 : vector<8x128xf32>
    %141 = arith.negf %140 : vector<8x128xf32>
    %142 = math.exp %141 : vector<8x128xf32>
    %cst_28 = arith.constant 1.000000e+00 : f32
    %143 = vector.broadcast %cst_28 : f32 to vector<8x128xf32>
    %144 = arith.addf %143, %142 : vector<8x128xf32>
    %145 = arith.divf %143, %144 : vector<8x128xf32>
    %146 = vector.extract_strided_slice %145 {offsets = [0, 0], sizes = [8, 64], strides = [1, 1]} : vector<8x128xf32> to vector<8x64xf32>
    %147 = vector.extract_strided_slice %145 {offsets = [0, 64], sizes = [8, 64], strides = [1, 1]} : vector<8x128xf32> to vector<8x64xf32>
    %148 = vector.extract_strided_slice %136 {offsets = [0, 128], sizes = [8, 64], strides = [1, 1]} : vector<8x192xf32> to vector<8x64xf32>
    %149 = vector.extract_strided_slice %137 {offsets = [0, 128], sizes = [8, 64], strides = [1, 1]} : vector<8x192xf32> to vector<8x64xf32>
    %150 = arith.addf %149, %10 : vector<8x64xf32>
    %151 = arith.mulf %146, %150 : vector<8x64xf32>
    %152 = arith.addf %148, %151 : vector<8x64xf32>
    %153 = math.tanh %152 : vector<8x64xf32>
    %cst_29 = arith.constant 1.000000e+00 : f32
    %154 = vector.broadcast %cst_29 : f32 to vector<8x64xf32>
    %155 = arith.subf %154, %147 : vector<8x64xf32>
    %156 = arith.mulf %155, %153 : vector<8x64xf32>
    %157 = arith.mulf %147, %124 : vector<8x64xf32>
    %158 = arith.addf %156, %157 : vector<8x64xf32>
    %159 = vector.extract_strided_slice %4 {offsets = [0, 4], sizes = [8, 1], strides = [1, 1]} : vector<8x8xi32> to vector<8x1xi32>
    %160 = vector.broadcast %159 : vector<8x1xi32> to vector<8x128xi32>
    %161 = arith.cmpi eq, %17, %160 : vector<8x128xi32>
    %162 = vector.extract_strided_slice %4 {offsets = [0, 3], sizes = [8, 1], strides = [1, 1]} : vector<8x8xi32> to vector<8x1xi32>
    %c64_i32_30 = arith.constant 64 : i32
    %163 = vector.broadcast %c64_i32_30 : i32 to vector<8x1xi32>
    %164 = arith.addi %162, %163 : vector<8x1xi32>
    %165 = vector.broadcast %164 : vector<8x1xi32> to vector<8x128xi32>
    %166 = arith.cmpi eq, %17, %165 : vector<8x128xi32>
    %167 = arith.ori %161, %166 : vector<8x128xi1>
    %168 = arith.extui %167 : vector<8x128xi1> to vector<8x128xi32>
    %169 = arith.sitofp %168 : vector<8x128xi32> to vector<8x128xf32>
    %cst_31 = arith.constant dense<0.000000e+00> : vector<8x192xf32>
    %170 = tpu.matmul %169, %5, %cst_31 {dimension_numbers = #tpu.dot_dimension_numbers<[1], [0], [0], [1], [0, 0, 1, 1], [], []>} : vector<8x128xf32>, vector<128x192xf32>, vector<8x192xf32> -> vector<8x192xf32>
    %cst_32 = arith.constant dense<0.000000e+00> : vector<8x192xf32>
    %171 = tpu.matmul %158, %6, %cst_32 {dimension_numbers = #tpu.dot_dimension_numbers<[1], [0], [0], [1], [0, 0, 1, 1], [], []>} : vector<8x64xf32>, vector<64x192xf32>, vector<8x192xf32> -> vector<8x192xf32>
    %172 = vector.extract_strided_slice %170 {offsets = [0, 0], sizes = [8, 128], strides = [1, 1]} : vector<8x192xf32> to vector<8x128xf32>
    %173 = vector.extract_strided_slice %171 {offsets = [0, 0], sizes = [8, 128], strides = [1, 1]} : vector<8x192xf32> to vector<8x128xf32>
    %174 = arith.addf %172, %173 : vector<8x128xf32>
    %175 = arith.negf %174 : vector<8x128xf32>
    %176 = math.exp %175 : vector<8x128xf32>
    %cst_33 = arith.constant 1.000000e+00 : f32
    %177 = vector.broadcast %cst_33 : f32 to vector<8x128xf32>
    %178 = arith.addf %177, %176 : vector<8x128xf32>
    %179 = arith.divf %177, %178 : vector<8x128xf32>
    %180 = vector.extract_strided_slice %179 {offsets = [0, 0], sizes = [8, 64], strides = [1, 1]} : vector<8x128xf32> to vector<8x64xf32>
    %181 = vector.extract_strided_slice %179 {offsets = [0, 64], sizes = [8, 64], strides = [1, 1]} : vector<8x128xf32> to vector<8x64xf32>
    %182 = vector.extract_strided_slice %170 {offsets = [0, 128], sizes = [8, 64], strides = [1, 1]} : vector<8x192xf32> to vector<8x64xf32>
    %183 = vector.extract_strided_slice %171 {offsets = [0, 128], sizes = [8, 64], strides = [1, 1]} : vector<8x192xf32> to vector<8x64xf32>
    %184 = arith.addf %183, %10 : vector<8x64xf32>
    %185 = arith.mulf %180, %184 : vector<8x64xf32>
    %186 = arith.addf %182, %185 : vector<8x64xf32>
    %187 = math.tanh %186 : vector<8x64xf32>
    %cst_34 = arith.constant 1.000000e+00 : f32
    %188 = vector.broadcast %cst_34 : f32 to vector<8x64xf32>
    %189 = arith.subf %188, %181 : vector<8x64xf32>
    %190 = arith.mulf %189, %187 : vector<8x64xf32>
    %191 = arith.mulf %181, %158 : vector<8x64xf32>
    %192 = arith.addf %190, %191 : vector<8x64xf32>
    %193 = vector.extract_strided_slice %4 {offsets = [0, 5], sizes = [8, 1], strides = [1, 1]} : vector<8x8xi32> to vector<8x1xi32>
    %194 = vector.broadcast %193 : vector<8x1xi32> to vector<8x128xi32>
    %195 = arith.cmpi eq, %17, %194 : vector<8x128xi32>
    %196 = vector.extract_strided_slice %4 {offsets = [0, 2], sizes = [8, 1], strides = [1, 1]} : vector<8x8xi32> to vector<8x1xi32>
    %c64_i32_35 = arith.constant 64 : i32
    %197 = vector.broadcast %c64_i32_35 : i32 to vector<8x1xi32>
    %198 = arith.addi %196, %197 : vector<8x1xi32>
    %199 = vector.broadcast %198 : vector<8x1xi32> to vector<8x128xi32>
    %200 = arith.cmpi eq, %17, %199 : vector<8x128xi32>
    %201 = arith.ori %195, %200 : vector<8x128xi1>
    %202 = arith.extui %201 : vector<8x128xi1> to vector<8x128xi32>
    %203 = arith.sitofp %202 : vector<8x128xi32> to vector<8x128xf32>
    %cst_36 = arith.constant dense<0.000000e+00> : vector<8x192xf32>
    %204 = tpu.matmul %203, %5, %cst_36 {dimension_numbers = #tpu.dot_dimension_numbers<[1], [0], [0], [1], [0, 0, 1, 1], [], []>} : vector<8x128xf32>, vector<128x192xf32>, vector<8x192xf32> -> vector<8x192xf32>
    %cst_37 = arith.constant dense<0.000000e+00> : vector<8x192xf32>
    %205 = tpu.matmul %192, %6, %cst_37 {dimension_numbers = #tpu.dot_dimension_numbers<[1], [0], [0], [1], [0, 0, 1, 1], [], []>} : vector<8x64xf32>, vector<64x192xf32>, vector<8x192xf32> -> vector<8x192xf32>
    %206 = vector.extract_strided_slice %204 {offsets = [0, 0], sizes = [8, 128], strides = [1, 1]} : vector<8x192xf32> to vector<8x128xf32>
    %207 = vector.extract_strided_slice %205 {offsets = [0, 0], sizes = [8, 128], strides = [1, 1]} : vector<8x192xf32> to vector<8x128xf32>
    %208 = arith.addf %206, %207 : vector<8x128xf32>
    %209 = arith.negf %208 : vector<8x128xf32>
    %210 = math.exp %209 : vector<8x128xf32>
    %cst_38 = arith.constant 1.000000e+00 : f32
    %211 = vector.broadcast %cst_38 : f32 to vector<8x128xf32>
    %212 = arith.addf %211, %210 : vector<8x128xf32>
    %213 = arith.divf %211, %212 : vector<8x128xf32>
    %214 = vector.extract_strided_slice %213 {offsets = [0, 0], sizes = [8, 64], strides = [1, 1]} : vector<8x128xf32> to vector<8x64xf32>
    %215 = vector.extract_strided_slice %213 {offsets = [0, 64], sizes = [8, 64], strides = [1, 1]} : vector<8x128xf32> to vector<8x64xf32>
    %216 = vector.extract_strided_slice %204 {offsets = [0, 128], sizes = [8, 64], strides = [1, 1]} : vector<8x192xf32> to vector<8x64xf32>
    %217 = vector.extract_strided_slice %205 {offsets = [0, 128], sizes = [8, 64], strides = [1, 1]} : vector<8x192xf32> to vector<8x64xf32>
    %218 = arith.addf %217, %10 : vector<8x64xf32>
    %219 = arith.mulf %214, %218 : vector<8x64xf32>
    %220 = arith.addf %216, %219 : vector<8x64xf32>
    %221 = math.tanh %220 : vector<8x64xf32>
    %cst_39 = arith.constant 1.000000e+00 : f32
    %222 = vector.broadcast %cst_39 : f32 to vector<8x64xf32>
    %223 = arith.subf %222, %215 : vector<8x64xf32>
    %224 = arith.mulf %223, %221 : vector<8x64xf32>
    %225 = arith.mulf %215, %192 : vector<8x64xf32>
    %226 = arith.addf %224, %225 : vector<8x64xf32>
    %227 = vector.extract_strided_slice %4 {offsets = [0, 6], sizes = [8, 1], strides = [1, 1]} : vector<8x8xi32> to vector<8x1xi32>
    %228 = vector.broadcast %227 : vector<8x1xi32> to vector<8x128xi32>
    %229 = arith.cmpi eq, %17, %228 : vector<8x128xi32>
    %230 = vector.extract_strided_slice %4 {offsets = [0, 1], sizes = [8, 1], strides = [1, 1]} : vector<8x8xi32> to vector<8x1xi32>
    %c64_i32_40 = arith.constant 64 : i32
    %231 = vector.broadcast %c64_i32_40 : i32 to vector<8x1xi32>
    %232 = arith.addi %230, %231 : vector<8x1xi32>
    %233 = vector.broadcast %232 : vector<8x1xi32> to vector<8x128xi32>
    %234 = arith.cmpi eq, %17, %233 : vector<8x128xi32>
    %235 = arith.ori %229, %234 : vector<8x128xi1>
    %236 = arith.extui %235 : vector<8x128xi1> to vector<8x128xi32>
    %237 = arith.sitofp %236 : vector<8x128xi32> to vector<8x128xf32>
    %cst_41 = arith.constant dense<0.000000e+00> : vector<8x192xf32>
    %238 = tpu.matmul %237, %5, %cst_41 {dimension_numbers = #tpu.dot_dimension_numbers<[1], [0], [0], [1], [0, 0, 1, 1], [], []>} : vector<8x128xf32>, vector<128x192xf32>, vector<8x192xf32> -> vector<8x192xf32>
    %cst_42 = arith.constant dense<0.000000e+00> : vector<8x192xf32>
    %239 = tpu.matmul %226, %6, %cst_42 {dimension_numbers = #tpu.dot_dimension_numbers<[1], [0], [0], [1], [0, 0, 1, 1], [], []>} : vector<8x64xf32>, vector<64x192xf32>, vector<8x192xf32> -> vector<8x192xf32>
    %240 = vector.extract_strided_slice %238 {offsets = [0, 0], sizes = [8, 128], strides = [1, 1]} : vector<8x192xf32> to vector<8x128xf32>
    %241 = vector.extract_strided_slice %239 {offsets = [0, 0], sizes = [8, 128], strides = [1, 1]} : vector<8x192xf32> to vector<8x128xf32>
    %242 = arith.addf %240, %241 : vector<8x128xf32>
    %243 = arith.negf %242 : vector<8x128xf32>
    %244 = math.exp %243 : vector<8x128xf32>
    %cst_43 = arith.constant 1.000000e+00 : f32
    %245 = vector.broadcast %cst_43 : f32 to vector<8x128xf32>
    %246 = arith.addf %245, %244 : vector<8x128xf32>
    %247 = arith.divf %245, %246 : vector<8x128xf32>
    %248 = vector.extract_strided_slice %247 {offsets = [0, 0], sizes = [8, 64], strides = [1, 1]} : vector<8x128xf32> to vector<8x64xf32>
    %249 = vector.extract_strided_slice %247 {offsets = [0, 64], sizes = [8, 64], strides = [1, 1]} : vector<8x128xf32> to vector<8x64xf32>
    %250 = vector.extract_strided_slice %238 {offsets = [0, 128], sizes = [8, 64], strides = [1, 1]} : vector<8x192xf32> to vector<8x64xf32>
    %251 = vector.extract_strided_slice %239 {offsets = [0, 128], sizes = [8, 64], strides = [1, 1]} : vector<8x192xf32> to vector<8x64xf32>
    %252 = arith.addf %251, %10 : vector<8x64xf32>
    %253 = arith.mulf %248, %252 : vector<8x64xf32>
    %254 = arith.addf %250, %253 : vector<8x64xf32>
    %255 = math.tanh %254 : vector<8x64xf32>
    %cst_44 = arith.constant 1.000000e+00 : f32
    %256 = vector.broadcast %cst_44 : f32 to vector<8x64xf32>
    %257 = arith.subf %256, %249 : vector<8x64xf32>
    %258 = arith.mulf %257, %255 : vector<8x64xf32>
    %259 = arith.mulf %249, %226 : vector<8x64xf32>
    %260 = arith.addf %258, %259 : vector<8x64xf32>
    %261 = vector.extract_strided_slice %4 {offsets = [0, 7], sizes = [8, 1], strides = [1, 1]} : vector<8x8xi32> to vector<8x1xi32>
    %262 = vector.broadcast %261 : vector<8x1xi32> to vector<8x128xi32>
    %263 = arith.cmpi eq, %17, %262 : vector<8x128xi32>
    %264 = vector.extract_strided_slice %4 {offsets = [0, 0], sizes = [8, 1], strides = [1, 1]} : vector<8x8xi32> to vector<8x1xi32>
    %c64_i32_45 = arith.constant 64 : i32
    %265 = vector.broadcast %c64_i32_45 : i32 to vector<8x1xi32>
    %266 = arith.addi %264, %265 : vector<8x1xi32>
    %267 = vector.broadcast %266 : vector<8x1xi32> to vector<8x128xi32>
    %268 = arith.cmpi eq, %17, %267 : vector<8x128xi32>
    %269 = arith.ori %263, %268 : vector<8x128xi1>
    %270 = arith.extui %269 : vector<8x128xi1> to vector<8x128xi32>
    %271 = arith.sitofp %270 : vector<8x128xi32> to vector<8x128xf32>
    %cst_46 = arith.constant dense<0.000000e+00> : vector<8x192xf32>
    %272 = tpu.matmul %271, %5, %cst_46 {dimension_numbers = #tpu.dot_dimension_numbers<[1], [0], [0], [1], [0, 0, 1, 1], [], []>} : vector<8x128xf32>, vector<128x192xf32>, vector<8x192xf32> -> vector<8x192xf32>
    %cst_47 = arith.constant dense<0.000000e+00> : vector<8x192xf32>
    %273 = tpu.matmul %260, %6, %cst_47 {dimension_numbers = #tpu.dot_dimension_numbers<[1], [0], [0], [1], [0, 0, 1, 1], [], []>} : vector<8x64xf32>, vector<64x192xf32>, vector<8x192xf32> -> vector<8x192xf32>
    %274 = vector.extract_strided_slice %272 {offsets = [0, 0], sizes = [8, 128], strides = [1, 1]} : vector<8x192xf32> to vector<8x128xf32>
    %275 = vector.extract_strided_slice %273 {offsets = [0, 0], sizes = [8, 128], strides = [1, 1]} : vector<8x192xf32> to vector<8x128xf32>
    %276 = arith.addf %274, %275 : vector<8x128xf32>
    %277 = arith.negf %276 : vector<8x128xf32>
    %278 = math.exp %277 : vector<8x128xf32>
    %cst_48 = arith.constant 1.000000e+00 : f32
    %279 = vector.broadcast %cst_48 : f32 to vector<8x128xf32>
    %280 = arith.addf %279, %278 : vector<8x128xf32>
    %281 = arith.divf %279, %280 : vector<8x128xf32>
    %282 = vector.extract_strided_slice %281 {offsets = [0, 0], sizes = [8, 64], strides = [1, 1]} : vector<8x128xf32> to vector<8x64xf32>
    %283 = vector.extract_strided_slice %281 {offsets = [0, 64], sizes = [8, 64], strides = [1, 1]} : vector<8x128xf32> to vector<8x64xf32>
    %284 = vector.extract_strided_slice %272 {offsets = [0, 128], sizes = [8, 64], strides = [1, 1]} : vector<8x192xf32> to vector<8x64xf32>
    %285 = vector.extract_strided_slice %273 {offsets = [0, 128], sizes = [8, 64], strides = [1, 1]} : vector<8x192xf32> to vector<8x64xf32>
    %286 = arith.addf %285, %10 : vector<8x64xf32>
    %287 = arith.mulf %282, %286 : vector<8x64xf32>
    %288 = arith.addf %284, %287 : vector<8x64xf32>
    %289 = math.tanh %288 : vector<8x64xf32>
    %cst_49 = arith.constant 1.000000e+00 : f32
    %290 = vector.broadcast %cst_49 : f32 to vector<8x64xf32>
    %291 = arith.subf %290, %283 : vector<8x64xf32>
    %292 = arith.mulf %291, %289 : vector<8x64xf32>
    %293 = arith.mulf %283, %260 : vector<8x64xf32>
    %294 = arith.addf %292, %293 : vector<8x64xf32>
    %295 = vector.extract_strided_slice %56 {offsets = [0, 0], sizes = [8, 32], strides = [1, 1]} : vector<8x64xf32> to vector<8x32xf32>
    %296 = arith.mulf %295, %13 : vector<8x32xf32>
    %cst_50 = arith.constant dense<0.000000e+00> : vector<8xf32>
    %297 = vector.multi_reduction <add>, %296, %cst_50 [1] : vector<8x32xf32> to vector<8xf32>
    %298 = vector.shape_cast %297 : vector<8xf32> to vector<8x1xf32>
    %299 = vector.extract_strided_slice %90 {offsets = [0, 0], sizes = [8, 32], strides = [1, 1]} : vector<8x64xf32> to vector<8x32xf32>
    %300 = arith.mulf %299, %13 : vector<8x32xf32>
    %cst_51 = arith.constant dense<0.000000e+00> : vector<8xf32>
    %301 = vector.multi_reduction <add>, %300, %cst_51 [1] : vector<8x32xf32> to vector<8xf32>
    %302 = vector.shape_cast %301 : vector<8xf32> to vector<8x1xf32>
    %303 = vector.extract_strided_slice %124 {offsets = [0, 0], sizes = [8, 32], strides = [1, 1]} : vector<8x64xf32> to vector<8x32xf32>
    %304 = arith.mulf %303, %13 : vector<8x32xf32>
    %cst_52 = arith.constant dense<0.000000e+00> : vector<8xf32>
    %305 = vector.multi_reduction <add>, %304, %cst_52 [1] : vector<8x32xf32> to vector<8xf32>
    %306 = vector.shape_cast %305 : vector<8xf32> to vector<8x1xf32>
    %307 = vector.extract_strided_slice %158 {offsets = [0, 0], sizes = [8, 32], strides = [1, 1]} : vector<8x64xf32> to vector<8x32xf32>
    %308 = arith.mulf %307, %13 : vector<8x32xf32>
    %cst_53 = arith.constant dense<0.000000e+00> : vector<8xf32>
    %309 = vector.multi_reduction <add>, %308, %cst_53 [1] : vector<8x32xf32> to vector<8xf32>
    %310 = vector.shape_cast %309 : vector<8xf32> to vector<8x1xf32>
    %311 = vector.extract_strided_slice %192 {offsets = [0, 0], sizes = [8, 32], strides = [1, 1]} : vector<8x64xf32> to vector<8x32xf32>
    %312 = arith.mulf %311, %13 : vector<8x32xf32>
    %cst_54 = arith.constant dense<0.000000e+00> : vector<8xf32>
    %313 = vector.multi_reduction <add>, %312, %cst_54 [1] : vector<8x32xf32> to vector<8xf32>
    %314 = vector.shape_cast %313 : vector<8xf32> to vector<8x1xf32>
    %315 = vector.extract_strided_slice %226 {offsets = [0, 0], sizes = [8, 32], strides = [1, 1]} : vector<8x64xf32> to vector<8x32xf32>
    %316 = arith.mulf %315, %13 : vector<8x32xf32>
    %cst_55 = arith.constant dense<0.000000e+00> : vector<8xf32>
    %317 = vector.multi_reduction <add>, %316, %cst_55 [1] : vector<8x32xf32> to vector<8xf32>
    %318 = vector.shape_cast %317 : vector<8xf32> to vector<8x1xf32>
    %319 = vector.extract_strided_slice %260 {offsets = [0, 0], sizes = [8, 32], strides = [1, 1]} : vector<8x64xf32> to vector<8x32xf32>
    %320 = arith.mulf %319, %13 : vector<8x32xf32>
    %cst_56 = arith.constant dense<0.000000e+00> : vector<8xf32>
    %321 = vector.multi_reduction <add>, %320, %cst_56 [1] : vector<8x32xf32> to vector<8xf32>
    %322 = vector.shape_cast %321 : vector<8xf32> to vector<8x1xf32>
    %323 = vector.extract_strided_slice %294 {offsets = [0, 0], sizes = [8, 32], strides = [1, 1]} : vector<8x64xf32> to vector<8x32xf32>
    %324 = arith.mulf %323, %13 : vector<8x32xf32>
    %cst_57 = arith.constant dense<0.000000e+00> : vector<8xf32>
    %325 = vector.multi_reduction <add>, %324, %cst_57 [1] : vector<8x32xf32> to vector<8xf32>
    %326 = vector.shape_cast %325 : vector<8xf32> to vector<8x1xf32>
    %327 = vector.extract_strided_slice %56 {offsets = [0, 32], sizes = [8, 32], strides = [1, 1]} : vector<8x64xf32> to vector<8x32xf32>
    %328 = arith.mulf %327, %16 : vector<8x32xf32>
    %cst_58 = arith.constant dense<0.000000e+00> : vector<8xf32>
    %329 = vector.multi_reduction <add>, %328, %cst_58 [1] : vector<8x32xf32> to vector<8xf32>
    %330 = vector.shape_cast %329 : vector<8xf32> to vector<8x1xf32>
    %331 = vector.extract_strided_slice %90 {offsets = [0, 32], sizes = [8, 32], strides = [1, 1]} : vector<8x64xf32> to vector<8x32xf32>
    %332 = arith.mulf %331, %16 : vector<8x32xf32>
    %cst_59 = arith.constant dense<0.000000e+00> : vector<8xf32>
    %333 = vector.multi_reduction <add>, %332, %cst_59 [1] : vector<8x32xf32> to vector<8xf32>
    %334 = vector.shape_cast %333 : vector<8xf32> to vector<8x1xf32>
    %335 = vector.extract_strided_slice %124 {offsets = [0, 32], sizes = [8, 32], strides = [1, 1]} : vector<8x64xf32> to vector<8x32xf32>
    %336 = arith.mulf %335, %16 : vector<8x32xf32>
    %cst_60 = arith.constant dense<0.000000e+00> : vector<8xf32>
    %337 = vector.multi_reduction <add>, %336, %cst_60 [1] : vector<8x32xf32> to vector<8xf32>
    %338 = vector.shape_cast %337 : vector<8xf32> to vector<8x1xf32>
    %339 = vector.extract_strided_slice %158 {offsets = [0, 32], sizes = [8, 32], strides = [1, 1]} : vector<8x64xf32> to vector<8x32xf32>
    %340 = arith.mulf %339, %16 : vector<8x32xf32>
    %cst_61 = arith.constant dense<0.000000e+00> : vector<8xf32>
    %341 = vector.multi_reduction <add>, %340, %cst_61 [1] : vector<8x32xf32> to vector<8xf32>
    %342 = vector.shape_cast %341 : vector<8xf32> to vector<8x1xf32>
    %343 = vector.extract_strided_slice %192 {offsets = [0, 32], sizes = [8, 32], strides = [1, 1]} : vector<8x64xf32> to vector<8x32xf32>
    %344 = arith.mulf %343, %16 : vector<8x32xf32>
    %cst_62 = arith.constant dense<0.000000e+00> : vector<8xf32>
    %345 = vector.multi_reduction <add>, %344, %cst_62 [1] : vector<8x32xf32> to vector<8xf32>
    %346 = vector.shape_cast %345 : vector<8xf32> to vector<8x1xf32>
    %347 = vector.extract_strided_slice %226 {offsets = [0, 32], sizes = [8, 32], strides = [1, 1]} : vector<8x64xf32> to vector<8x32xf32>
    %348 = arith.mulf %347, %16 : vector<8x32xf32>
    %cst_63 = arith.constant dense<0.000000e+00> : vector<8xf32>
    %349 = vector.multi_reduction <add>, %348, %cst_63 [1] : vector<8x32xf32> to vector<8xf32>
    %350 = vector.shape_cast %349 : vector<8xf32> to vector<8x1xf32>
    %351 = vector.extract_strided_slice %260 {offsets = [0, 32], sizes = [8, 32], strides = [1, 1]} : vector<8x64xf32> to vector<8x32xf32>
    %352 = arith.mulf %351, %16 : vector<8x32xf32>
    %cst_64 = arith.constant dense<0.000000e+00> : vector<8xf32>
    %353 = vector.multi_reduction <add>, %352, %cst_64 [1] : vector<8x32xf32> to vector<8xf32>
    %354 = vector.shape_cast %353 : vector<8xf32> to vector<8x1xf32>
    %355 = vector.extract_strided_slice %294 {offsets = [0, 32], sizes = [8, 32], strides = [1, 1]} : vector<8x64xf32> to vector<8x32xf32>
    %356 = arith.mulf %355, %16 : vector<8x32xf32>
    %cst_65 = arith.constant dense<0.000000e+00> : vector<8xf32>
    %357 = vector.multi_reduction <add>, %356, %cst_65 [1] : vector<8x32xf32> to vector<8xf32>
    %358 = vector.shape_cast %357 : vector<8xf32> to vector<8x1xf32>
    %359 = arith.addf %298, %358 : vector<8x1xf32>
    %360 = math.tanh %359 : vector<8x1xf32>
    %361 = arith.addf %302, %354 : vector<8x1xf32>
    %362 = math.tanh %361 : vector<8x1xf32>
    %363 = arith.addf %306, %350 : vector<8x1xf32>
    %364 = math.tanh %363 : vector<8x1xf32>
    %365 = arith.addf %310, %346 : vector<8x1xf32>
    %366 = math.tanh %365 : vector<8x1xf32>
    %367 = arith.addf %314, %342 : vector<8x1xf32>
    %368 = math.tanh %367 : vector<8x1xf32>
    %369 = arith.addf %318, %338 : vector<8x1xf32>
    %370 = math.tanh %369 : vector<8x1xf32>
    %371 = arith.addf %322, %334 : vector<8x1xf32>
    %372 = math.tanh %371 : vector<8x1xf32>
    %373 = arith.addf %326, %330 : vector<8x1xf32>
    %374 = math.tanh %373 : vector<8x1xf32>
    %375 = arith.maximumf %360, %362 : vector<8x1xf32>
    %376 = arith.maximumf %375, %364 : vector<8x1xf32>
    %377 = arith.maximumf %376, %366 : vector<8x1xf32>
    %378 = arith.maximumf %377, %368 : vector<8x1xf32>
    %379 = arith.maximumf %378, %370 : vector<8x1xf32>
    %380 = arith.maximumf %379, %372 : vector<8x1xf32>
    %381 = arith.maximumf %380, %374 : vector<8x1xf32>
    %382 = arith.subf %360, %381 : vector<8x1xf32>
    %383 = math.exp %382 : vector<8x1xf32>
    %cst_66 = arith.constant 8.000000e+00 : f32
    %384 = vector.broadcast %cst_66 : f32 to vector<8x1xf32>
    %385 = arith.cmpf oge, %3, %384 : vector<8x1xf32>
    %386 = arith.extui %385 : vector<8x1xi1> to vector<8x1xi32>
    %387 = arith.sitofp %386 : vector<8x1xi32> to vector<8x1xf32>
    %388 = arith.mulf %383, %387 : vector<8x1xf32>
    %389 = arith.subf %362, %381 : vector<8x1xf32>
    %390 = math.exp %389 : vector<8x1xf32>
    %cst_67 = arith.constant 7.000000e+00 : f32
    %391 = vector.broadcast %cst_67 : f32 to vector<8x1xf32>
    %392 = arith.cmpf oge, %3, %391 : vector<8x1xf32>
    %393 = arith.extui %392 : vector<8x1xi1> to vector<8x1xi32>
    %394 = arith.sitofp %393 : vector<8x1xi32> to vector<8x1xf32>
    %395 = arith.mulf %390, %394 : vector<8x1xf32>
    %396 = arith.subf %364, %381 : vector<8x1xf32>
    %397 = math.exp %396 : vector<8x1xf32>
    %cst_68 = arith.constant 6.000000e+00 : f32
    %398 = vector.broadcast %cst_68 : f32 to vector<8x1xf32>
    %399 = arith.cmpf oge, %3, %398 : vector<8x1xf32>
    %400 = arith.extui %399 : vector<8x1xi1> to vector<8x1xi32>
    %401 = arith.sitofp %400 : vector<8x1xi32> to vector<8x1xf32>
    %402 = arith.mulf %397, %401 : vector<8x1xf32>
    %403 = arith.subf %366, %381 : vector<8x1xf32>
    %404 = math.exp %403 : vector<8x1xf32>
    %cst_69 = arith.constant 5.000000e+00 : f32
    %405 = vector.broadcast %cst_69 : f32 to vector<8x1xf32>
    %406 = arith.cmpf oge, %3, %405 : vector<8x1xf32>
    %407 = arith.extui %406 : vector<8x1xi1> to vector<8x1xi32>
    %408 = arith.sitofp %407 : vector<8x1xi32> to vector<8x1xf32>
    %409 = arith.mulf %404, %408 : vector<8x1xf32>
    %410 = arith.subf %368, %381 : vector<8x1xf32>
    %411 = math.exp %410 : vector<8x1xf32>
    %cst_70 = arith.constant 4.000000e+00 : f32
    %412 = vector.broadcast %cst_70 : f32 to vector<8x1xf32>
    %413 = arith.cmpf oge, %3, %412 : vector<8x1xf32>
    %414 = arith.extui %413 : vector<8x1xi1> to vector<8x1xi32>
    %415 = arith.sitofp %414 : vector<8x1xi32> to vector<8x1xf32>
    %416 = arith.mulf %411, %415 : vector<8x1xf32>
    %417 = arith.subf %370, %381 : vector<8x1xf32>
    %418 = math.exp %417 : vector<8x1xf32>
    %cst_71 = arith.constant 3.000000e+00 : f32
    %419 = vector.broadcast %cst_71 : f32 to vector<8x1xf32>
    %420 = arith.cmpf oge, %3, %419 : vector<8x1xf32>
    %421 = arith.extui %420 : vector<8x1xi1> to vector<8x1xi32>
    %422 = arith.sitofp %421 : vector<8x1xi32> to vector<8x1xf32>
    %423 = arith.mulf %418, %422 : vector<8x1xf32>
    %424 = arith.subf %372, %381 : vector<8x1xf32>
    %425 = math.exp %424 : vector<8x1xf32>
    %cst_72 = arith.constant 2.000000e+00 : f32
    %426 = vector.broadcast %cst_72 : f32 to vector<8x1xf32>
    %427 = arith.cmpf oge, %3, %426 : vector<8x1xf32>
    %428 = arith.extui %427 : vector<8x1xi1> to vector<8x1xi32>
    %429 = arith.sitofp %428 : vector<8x1xi32> to vector<8x1xf32>
    %430 = arith.mulf %425, %429 : vector<8x1xf32>
    %431 = arith.subf %374, %381 : vector<8x1xf32>
    %432 = math.exp %431 : vector<8x1xf32>
    %cst_73 = arith.constant 1.000000e+00 : f32
    %433 = vector.broadcast %cst_73 : f32 to vector<8x1xf32>
    %434 = arith.cmpf oge, %3, %433 : vector<8x1xf32>
    %435 = arith.extui %434 : vector<8x1xi1> to vector<8x1xi32>
    %436 = arith.sitofp %435 : vector<8x1xi32> to vector<8x1xf32>
    %437 = arith.mulf %432, %436 : vector<8x1xf32>
    %438 = arith.addf %388, %395 : vector<8x1xf32>
    %439 = arith.addf %438, %402 : vector<8x1xf32>
    %440 = arith.addf %439, %409 : vector<8x1xf32>
    %441 = arith.addf %440, %416 : vector<8x1xf32>
    %442 = arith.addf %441, %423 : vector<8x1xf32>
    %443 = arith.addf %442, %430 : vector<8x1xf32>
    %444 = arith.addf %443, %437 : vector<8x1xf32>
    %445 = tpu.reciprocal %444 {approx = true} : vector<8x1xf32> -> vector<8x1xf32>
    %446 = arith.mulf %388, %445 : vector<8x1xf32>
    %447 = arith.mulf %395, %445 : vector<8x1xf32>
    %448 = arith.mulf %402, %445 : vector<8x1xf32>
    %449 = arith.mulf %409, %445 : vector<8x1xf32>
    %450 = arith.mulf %416, %445 : vector<8x1xf32>
    %451 = arith.mulf %423, %445 : vector<8x1xf32>
    %452 = arith.mulf %430, %445 : vector<8x1xf32>
    %453 = arith.mulf %437, %445 : vector<8x1xf32>
    %454 = vector.extract_strided_slice %56 {offsets = [0, 0], sizes = [8, 32], strides = [1, 1]} : vector<8x64xf32> to vector<8x32xf32>
    %455 = vector.broadcast %446 : vector<8x1xf32> to vector<8x32xf32>
    %456 = arith.mulf %455, %454 : vector<8x32xf32>
    %457 = vector.extract_strided_slice %56 {offsets = [0, 32], sizes = [8, 32], strides = [1, 1]} : vector<8x64xf32> to vector<8x32xf32>
    %458 = vector.broadcast %453 : vector<8x1xf32> to vector<8x32xf32>
    %459 = arith.mulf %458, %457 : vector<8x32xf32>
    %460 = vector.extract_strided_slice %90 {offsets = [0, 0], sizes = [8, 32], strides = [1, 1]} : vector<8x64xf32> to vector<8x32xf32>
    %461 = vector.broadcast %447 : vector<8x1xf32> to vector<8x32xf32>
    %462 = arith.mulf %461, %460 : vector<8x32xf32>
    %463 = arith.addf %456, %462 : vector<8x32xf32>
    %464 = vector.extract_strided_slice %90 {offsets = [0, 32], sizes = [8, 32], strides = [1, 1]} : vector<8x64xf32> to vector<8x32xf32>
    %465 = vector.broadcast %452 : vector<8x1xf32> to vector<8x32xf32>
    %466 = arith.mulf %465, %464 : vector<8x32xf32>
    %467 = arith.addf %459, %466 : vector<8x32xf32>
    %468 = vector.extract_strided_slice %124 {offsets = [0, 0], sizes = [8, 32], strides = [1, 1]} : vector<8x64xf32> to vector<8x32xf32>
    %469 = vector.broadcast %448 : vector<8x1xf32> to vector<8x32xf32>
    %470 = arith.mulf %469, %468 : vector<8x32xf32>
    %471 = arith.addf %463, %470 : vector<8x32xf32>
    %472 = vector.extract_strided_slice %124 {offsets = [0, 32], sizes = [8, 32], strides = [1, 1]} : vector<8x64xf32> to vector<8x32xf32>
    %473 = vector.broadcast %451 : vector<8x1xf32> to vector<8x32xf32>
    %474 = arith.mulf %473, %472 : vector<8x32xf32>
    %475 = arith.addf %467, %474 : vector<8x32xf32>
    %476 = vector.extract_strided_slice %158 {offsets = [0, 0], sizes = [8, 32], strides = [1, 1]} : vector<8x64xf32> to vector<8x32xf32>
    %477 = vector.broadcast %449 : vector<8x1xf32> to vector<8x32xf32>
    %478 = arith.mulf %477, %476 : vector<8x32xf32>
    %479 = arith.addf %471, %478 : vector<8x32xf32>
    %480 = vector.extract_strided_slice %158 {offsets = [0, 32], sizes = [8, 32], strides = [1, 1]} : vector<8x64xf32> to vector<8x32xf32>
    %481 = vector.broadcast %450 : vector<8x1xf32> to vector<8x32xf32>
    %482 = arith.mulf %481, %480 : vector<8x32xf32>
    %483 = arith.addf %475, %482 : vector<8x32xf32>
    %484 = vector.extract_strided_slice %192 {offsets = [0, 0], sizes = [8, 32], strides = [1, 1]} : vector<8x64xf32> to vector<8x32xf32>
    %485 = vector.broadcast %450 : vector<8x1xf32> to vector<8x32xf32>
    %486 = arith.mulf %485, %484 : vector<8x32xf32>
    %487 = arith.addf %479, %486 : vector<8x32xf32>
    %488 = vector.extract_strided_slice %192 {offsets = [0, 32], sizes = [8, 32], strides = [1, 1]} : vector<8x64xf32> to vector<8x32xf32>
    %489 = vector.broadcast %449 : vector<8x1xf32> to vector<8x32xf32>
    %490 = arith.mulf %489, %488 : vector<8x32xf32>
    %491 = arith.addf %483, %490 : vector<8x32xf32>
    %492 = vector.extract_strided_slice %226 {offsets = [0, 0], sizes = [8, 32], strides = [1, 1]} : vector<8x64xf32> to vector<8x32xf32>
    %493 = vector.broadcast %451 : vector<8x1xf32> to vector<8x32xf32>
    %494 = arith.mulf %493, %492 : vector<8x32xf32>
    %495 = arith.addf %487, %494 : vector<8x32xf32>
    %496 = vector.extract_strided_slice %226 {offsets = [0, 32], sizes = [8, 32], strides = [1, 1]} : vector<8x64xf32> to vector<8x32xf32>
    %497 = vector.broadcast %448 : vector<8x1xf32> to vector<8x32xf32>
    %498 = arith.mulf %497, %496 : vector<8x32xf32>
    %499 = arith.addf %491, %498 : vector<8x32xf32>
    %500 = vector.extract_strided_slice %260 {offsets = [0, 0], sizes = [8, 32], strides = [1, 1]} : vector<8x64xf32> to vector<8x32xf32>
    %501 = vector.broadcast %452 : vector<8x1xf32> to vector<8x32xf32>
    %502 = arith.mulf %501, %500 : vector<8x32xf32>
    %503 = arith.addf %495, %502 : vector<8x32xf32>
    %504 = vector.extract_strided_slice %260 {offsets = [0, 32], sizes = [8, 32], strides = [1, 1]} : vector<8x64xf32> to vector<8x32xf32>
    %505 = vector.broadcast %447 : vector<8x1xf32> to vector<8x32xf32>
    %506 = arith.mulf %505, %504 : vector<8x32xf32>
    %507 = arith.addf %499, %506 : vector<8x32xf32>
    %508 = vector.extract_strided_slice %294 {offsets = [0, 0], sizes = [8, 32], strides = [1, 1]} : vector<8x64xf32> to vector<8x32xf32>
    %509 = vector.broadcast %453 : vector<8x1xf32> to vector<8x32xf32>
    %510 = arith.mulf %509, %508 : vector<8x32xf32>
    %511 = arith.addf %503, %510 : vector<8x32xf32>
    %512 = vector.extract_strided_slice %294 {offsets = [0, 32], sizes = [8, 32], strides = [1, 1]} : vector<8x64xf32> to vector<8x32xf32>
    %513 = vector.broadcast %446 : vector<8x1xf32> to vector<8x32xf32>
    %514 = arith.mulf %513, %512 : vector<8x32xf32>
    %515 = arith.addf %507, %514 : vector<8x32xf32>
    %c0_74 = arith.constant 0 : index
    %c0_75 = arith.constant 0 : index
    %516 = vector.load %arg4[%c0_74, %c0_75] : memref<152x16xf32, #tpu.memory_space<vmem>>, vector<12x16xf32>
    %cst_76 = arith.constant dense<0.000000e+00> : vector<8x16xf32>
    %517 = tpu.matmul %2, %516, %cst_76 {dimension_numbers = #tpu.dot_dimension_numbers<[1], [0], [0], [1], [0, 0, 1, 1], [], []>} : vector<8x12xf32>, vector<12x16xf32>, vector<8x16xf32> -> vector<8x16xf32>
    %c16 = arith.constant 16 : index
    %c0_77 = arith.constant 0 : index
    %518 = vector.load %arg4[%c16, %c0_77] : memref<152x16xf32, #tpu.memory_space<vmem>>, vector<1x16xf32>
    %519 = vector.broadcast %518 : vector<1x16xf32> to vector<8x16xf32>
    %520 = arith.addf %517, %519 : vector<8x16xf32>
    %cst_78 = arith.constant 0.000000e+00 : f32
    %521 = vector.broadcast %cst_78 : f32 to vector<8x16xf32>
    %522 = arith.maximumf %520, %521 : vector<8x16xf32>
    %c24 = arith.constant 24 : index
    %c0_79 = arith.constant 0 : index
    %523 = vector.load %arg4[%c24, %c0_79] : memref<152x16xf32, #tpu.memory_space<vmem>>, vector<16x8xf32>
    %cst_80 = arith.constant dense<0.000000e+00> : vector<8x8xf32>
    %524 = tpu.matmul %522, %523, %cst_80 {dimension_numbers = #tpu.dot_dimension_numbers<[1], [0], [0], [1], [0, 0, 1, 1], [], []>} : vector<8x16xf32>, vector<16x8xf32>, vector<8x8xf32> -> vector<8x8xf32>
    %c40 = arith.constant 40 : index
    %c0_81 = arith.constant 0 : index
    %525 = vector.load %arg4[%c40, %c0_81] : memref<152x16xf32, #tpu.memory_space<vmem>>, vector<1x8xf32>
    %526 = vector.broadcast %525 : vector<1x8xf32> to vector<8x8xf32>
    %527 = arith.addf %524, %526 : vector<8x8xf32>
    %cst_82 = arith.constant 0.000000e+00 : f32
    %528 = vector.broadcast %cst_82 : f32 to vector<8x8xf32>
    %529 = arith.maximumf %527, %528 : vector<8x8xf32>
    %530 = tpu.concatenate %511, %515, %529 in 1 : vector<8x32xf32>, vector<8x32xf32>, vector<8x8xf32> -> vector<8x72xf32>
    %c48 = arith.constant 48 : index
    %c0_83 = arith.constant 0 : index
    %531 = vector.load %arg4[%c48, %c0_83] : memref<152x16xf32, #tpu.memory_space<vmem>>, vector<72x16xf32>
    %cst_84 = arith.constant dense<0.000000e+00> : vector<8x16xf32>
    %532 = tpu.matmul %530, %531, %cst_84 {dimension_numbers = #tpu.dot_dimension_numbers<[1], [0], [0], [1], [0, 0, 1, 1], [], []>} : vector<8x72xf32>, vector<72x16xf32>, vector<8x16xf32> -> vector<8x16xf32>
    %c120 = arith.constant 120 : index
    %c0_85 = arith.constant 0 : index
    %533 = vector.load %arg4[%c120, %c0_85] : memref<152x16xf32, #tpu.memory_space<vmem>>, vector<1x16xf32>
    %534 = vector.broadcast %533 : vector<1x16xf32> to vector<8x16xf32>
    %535 = arith.addf %532, %534 : vector<8x16xf32>
    %cst_86 = arith.constant 0.000000e+00 : f32
    %536 = vector.broadcast %cst_86 : f32 to vector<8x16xf32>
    %537 = arith.maximumf %535, %536 : vector<8x16xf32>
    %c128 = arith.constant 128 : index
    %c0_87 = arith.constant 0 : index
    %538 = vector.load %arg4[%c128, %c0_87] : memref<152x16xf32, #tpu.memory_space<vmem>>, vector<16x1xf32>
    %cst_88 = arith.constant dense<0.000000e+00> : vector<8x1xf32>
    %539 = tpu.matmul %537, %538, %cst_88 {dimension_numbers = #tpu.dot_dimension_numbers<[1], [0], [0], [1], [0, 0, 1, 1], [], []>} : vector<8x16xf32>, vector<16x1xf32>, vector<8x1xf32> -> vector<8x1xf32>
    %c144 = arith.constant 144 : index
    %c0_89 = arith.constant 0 : index
    %540 = vector.load %arg4[%c144, %c0_89] : memref<152x16xf32, #tpu.memory_space<vmem>>, vector<1x1xf32>
    %541 = vector.broadcast %540 : vector<1x1xf32> to vector<8x1xf32>
    %542 = arith.addf %539, %541 : vector<8x1xf32>
    %543 = arith.negf %542 : vector<8x1xf32>
    %544 = math.exp %543 : vector<8x1xf32>
    %cst_90 = arith.constant 1.000000e+00 : f32
    %545 = vector.broadcast %cst_90 : f32 to vector<8x1xf32>
    %546 = arith.addf %545, %544 : vector<8x1xf32>
    %547 = arith.divf %545, %546 : vector<8x1xf32>
    %c0_91 = arith.constant 0 : index
    %c0_92 = arith.constant 0 : index
    %548 = vector.load %arg5[%c0_91, %c0_92] : memref<8x1xf32, #tpu.memory_space<vmem>>, vector<8x1xf32>
    tpu.vector_store %arg5[%c0_91, %c0_92], %547 {strides = array<i32>} : memref<8x1xf32, #tpu.memory_space<vmem>>, vector<8x1xf32>,
    return
  }
}

</mosaic_0001>

<llo_original>
// kernel: quora_forward_pallas.1
$region0: #{quora_forward_pallas.1}
  #allocation0 [shape = 'u32[]', space=smem, size = 0x4, offset = 0x4, fixed_abs, tag = 'smem constant byte address 0x4 - core index']
  #allocation1 [shape = 'u32[144,128]{1,0:T(1,128)}', space=vmem, size = 0x12000, scoped, tag = 'internal scratch']
  %s0 = inlined_call_operand.vmem [shape: s32[8,20], index: 0, kind: input, shape index: {}]
  %s1 = inlined_call_operand.vmem [shape: f32[2,8,32], index: 1, kind: input, shape index: {}]
  %s2 = inlined_call_operand.vmem [shape: f32[128,192], index: 2, kind: input, shape index: {}]
  %s3 = inlined_call_operand.vmem [shape: f32[80,192], index: 3, kind: input, shape index: {}]
  %s4 = inlined_call_operand.vmem [shape: f32[152,16], index: 4, kind: input, shape index: {}]
  %s5 = inlined_call_operand.vmem [shape: f32[8,1], index: 5, kind: output, shape index: {}]
  %s6 = sld [smem:[#allocation0]]
  $region30: #{quora_forward_pallas.1} parent=0
    _
  %s8 = ssub.s32 1, %s6
  %s9 = scalar_select 0, %s8, %s6
  // Predicated region
  $region2: #{quora_forward_pallas.1} parent=0 // pred_check
    _
  $region3: #{quora_forward_pallas.1} parent=0 // pred_check_branch
    %11 = sbr.rel (0) target = $region5
  $region4: #{quora_forward_pallas.1} parent=0 // pred_region
    _
  $region5: #{quora_forward_pallas.1} parent=0 // pred_fallthru
    _
  // Predicated region
  $region6: #{quora_forward_pallas.1} parent=0 // pred_check
    _
  $region7: #{quora_forward_pallas.1} parent=0 // pred_check_branch
    %13 = sbr.rel (0) target = $region9
  $region8: #{quora_forward_pallas.1} parent=0 // pred_region
    _
  $region9: #{quora_forward_pallas.1} parent=0 // pred_fallthru
    _
  // Predicated region
  $region10: #{quora_forward_pallas.1} parent=0 // pred_check
    _
  $region11: #{quora_forward_pallas.1} parent=0 // pred_check_branch
    %15 = sbr.rel (0) target = $region13
  $region12: #{quora_forward_pallas.1} parent=0 // pred_region
    _
  $region13: #{quora_forward_pallas.1} parent=0 // pred_fallthru
    _
  // Predicated region
  $region14: #{quora_forward_pallas.1} parent=0 // pred_check
    _
  $region15: #{quora_forward_pallas.1} parent=0 // pred_check_branch
    %17 = sbr.rel (0) target = $region17
  $region16: #{quora_forward_pallas.1} parent=0 // pred_region
    _
  $region17: #{quora_forward_pallas.1} parent=0 // pred_fallthru
    _
  // Predicated region
  $region18: #{quora_forward_pallas.1} parent=0 // pred_check
    _
  $region19: #{quora_forward_pallas.1} parent=0 // pred_check_branch
    %19 = sbr.rel (0) target = $region21
  $region20: #{quora_forward_pallas.1} parent=0 // pred_region
    _
  $region21: #{quora_forward_pallas.1} parent=0 // pred_fallthru
    _
  %v20 = vld [vmem:[%s0] sm:$0xff]
  %v21 = vcvt.s32.f32 %v20
  %v22 = vld [vmem:[%s2] sm:$0xff]
  %v23 = vld [vmem:[%s2 + $0x8] sm:$0xff]
  %v24 = vld [vmem:[%s2 + $0x10] sm:$0xff]
  %v25 = vld [vmem:[%s2 + $0x18] sm:$0xff]
  %v26 = vld [vmem:[%s2 + $0x20] sm:$0xff]
  %v27 = vld [vmem:[%s2 + $0x28] sm:$0xff]
  %v28 = vld [vmem:[%s2 + $0x30] sm:$0xff]
  %v29 = vld [vmem:[%s2 + $0x38] sm:$0xff]
  %v30 = vld [vmem:[%s2 + $0x40] sm:$0xff]
  %v31 = vld [vmem:[%s2 + $0x48] sm:$0xff]
  %v32 = vld [vmem:[%s2 + $0x50] sm:$0xff]
  %v33 = vld [vmem:[%s2 + $0x58] sm:$0xff]
  %v34 = vld [vmem:[%s2 + $0x60] sm:$0xff]
  %v35 = vld [vmem:[%s2 + $0x68] sm:$0xff]
  %v36 = vld [vmem:[%s2 + $0x70] sm:$0xff]
  %v37 = vld [vmem:[%s2 + $0x78] sm:$0xff]
  %v38 = vld [vmem:[%s2 + $0x80] sm:$0xff]
  %v39 = vld [vmem:[%s2 + $0x88] sm:$0xff]
  %v40 = vld [vmem:[%s2 + $0x90] sm:$0xff]
  %v41 = vld [vmem:[%s2 + $0x98] sm:$0xff]
  %v42 = vld [vmem:[%s2 + $0xa0] sm:$0xff]
  %v43 = vld [vmem:[%s2 + $0xa8] sm:$0xff]
  %v44 = vld [vmem:[%s2 + $0xb0] sm:$0xff]
  %v45 = vld [vmem:[%s2 + $0xb8] sm:$0xff]
  %v46 = vld [vmem:[%s2 + $0xc0] sm:$0xff]
  %v47 = vld [vmem:[%s2 + $0xc8] sm:$0xff]
  %v48 = vld [vmem:[%s2 + $0xd0] sm:$0xff]
  %v49 = vld [vmem:[%s2 + $0xd8] sm:$0xff]
  %v50 = vld [vmem:[%s2 + $0xe0] sm:$0xff]
  %v51 = vld [vmem:[%s2 + $0xe8] sm:$0xff]
  %v52 = vld [vmem:[%s2 + $0xf0] sm:$0xff]
  %v53 = vld [vmem:[%s2 + $0xf8] sm:$0xff]
  %v54 = vld [vmem:[%s3] sm:$0xff]
  %v55 = vld [vmem:[%s3 + $0x8] sm:$0xff]
  %v56 = vld [vmem:[%s3 + $0x10] sm:$0xff]
  %v57 = vld [vmem:[%s3 + $0x18] sm:$0xff]
  %v58 = vld [vmem:[%s3 + $0x20] sm:$0xff]
  %v59 = vld [vmem:[%s3 + $0x28] sm:$0xff]
  %v60 = vld [vmem:[%s3 + $0x30] sm:$0xff]
  %v61 = vld [vmem:[%s3 + $0x38] sm:$0xff]
  %v62 = vld [vmem:[%s3 + $0x40] sm:$0xff]
  %v63 = vld [vmem:[%s3 + $0x48] sm:$0xff]
  %v64 = vld [vmem:[%s3 + $0x50] sm:$0xff]
  %v65 = vld [vmem:[%s3 + $0x58] sm:$0xff]
  %v66 = vld [vmem:[%s3 + $0x60] sm:$0xff]
  %v67 = vld [vmem:[%s3 + $0x68] sm:$0xff]
  %v68 = vld [vmem:[%s3 + $0x70] sm:$0xff]
  %v69 = vld [vmem:[%s3 + $0x78] sm:$0xff]
  %v70 = vld [vmem:[%s3 + $0x80] ss:$0 sm:$0xff]
  %v71 = vld [vmem:[%s3 + $0x90] ss:$0 sm:$0xff]
  %v72 = vlaneseq
  %v73 = vand.u32 %v72, 127
  %v74 = vld [vmem:[%s1] sm:$0xff]
  %s75 = scalar_lea.vmem %s1, 8
  %v76 = vld [vmem:[%s75] sm:$0xff]
  %78 = vrot.lane.b32.xlu0 %v76, 32
  %v79 = vpop.permute.xlu0 %78
  %vm81 = vcmask 261120
  %v82 = vsel %vm81, %v74, %v79
  %83 = vset.pattern.permute.xlu0 12
  %84 = vperm.xlu0 %83, %v20
  %v85 = vpop.permute.xlu0 %84
  %vm86 = vcmp.eq.s32.totalorder %v73, %v85
  %v87 = vadd.s32 %v20, 64
  %88 = vset.pattern.permute.xlu0 19
  %89 = vperm.xlu0 %88, %v87
  %v90 = vpop.permute.xlu0 %89
  %vm91 = vcmp.eq.s32.totalorder %v73, %v90
  %vm92 = vmor %vm86, %vm91
  %v93 = vsel %vm92, 1, 0
  %v94 = vcvt.s32.f32 %v93
  %95 = vmatprep.subr.mxu0 %v23
  %96 = vmatpush1.msra.mxu0 %v22
  %97 = vmatprep.subr.mxu0 %v25
  %98 = vmatpush1.msra.mxu0 %v24
  %99 = vmatprep.subr.mxu0 %v27
  %100 = vmatpush1.msra.mxu0 %v26
  %101 = vmatprep.subr.mxu0 %v29
  %102 = vmatpush1.msra.mxu0 %v28
  %103 = vmatprep.subr.mxu0 %v31
  %104 = vmatpush1.msra.mxu0 %v30
  %105 = vmatprep.subr.mxu0 %v33
  %106 = vmatpush1.msra.mxu0 %v32
  %107 = vmatprep.subr.mxu0 %v35
  %108 = vmatpush1.msra.mxu0 %v34
  %109 = vmatprep.subr.mxu0 %v37
  %110 = vmatpush1.msra.mxu0 %v36
  %111 = vmatprep.subr.mxu0 %v39
  %112 = vmatpush1.msra.mxu0 %v38
  %113 = vmatprep.subr.mxu0 %v41
  %114 = vmatpush1.msra.mxu0 %v40
  %115 = vmatprep.subr.mxu0 %v43
  %116 = vmatpush1.msra.mxu0 %v42
  %117 = vmatprep.subr.mxu0 %v45
  %118 = vmatpush1.msra.mxu0 %v44
  %119 = vmatprep.subr.mxu0 %v47
  %120 = vmatpush1.msra.mxu0 %v46
  %121 = vmatprep.subr.mxu0 %v49
  %122 = vmatpush1.msra.mxu0 %v48
  %123 = vmatprep.subr.mxu0 %v51
  %124 = vmatpush1.msra.mxu0 %v50
  %125 = vmatprep.subr.mxu0 %v53
  %126 = vmatpush1.msra.mxu0 %v52
  %127 = vmatprep.subr.mxu0 0.0
  %128 = vmatpush1.msra.mxu0 0.0
  %129 = vmatprep.subr.mxu0 0.0
  %130 = vmatpush1.msra.mxu0 0.0
  %131 = vmatprep.subr.mxu0 0.0
  %132 = vmatpush1.msra.mxu0 0.0
  %133 = vmatprep.subr.mxu0 0.0
  %134 = vmatpush1.msra.mxu0 0.0
  %135 = vmatprep.subr.mxu0 0.0
  %136 = vmatpush1.msra.mxu0 0.0
  %137 = vmatprep.subr.mxu0 0.0
  %138 = vmatpush1.msra.mxu0 0.0
  %139 = vmatprep.subr.mxu0 0.0
  %140 = vmatpush1.msra.mxu0 0.0
  %141 = vmatprep.subr.mxu0 0.0
  %142 = vmatpush1.msra.mxu0 0.0
  %143 = vmatprep.subr.mxu0 0.0
  %144 = vmatpush1.msra.mxu0 0.0
  %145 = vmatprep.subr.mxu0 0.0
  %146 = vmatpush1.msra.mxu0 0.0
  %147 = vmatprep.subr.mxu0 0.0
  %148 = vmatpush1.msra.mxu0 0.0
  %149 = vmatprep.subr.mxu0 0.0
  %150 = vmatpush1.msra.mxu0 0.0
  %151 = vmatprep.subr.mxu0 0.0
  %152 = vmatpush1.msra.mxu0 0.0
  %153 = vmatprep.subr.mxu0 0.0
  %154 = vmatpush1.msra.mxu0 0.0
  %155 = vmatprep.subr.mxu0 0.0
  %156 = vmatpush1.msra.mxu0 0.0
  %157 = vmatprep.subr.mxu0 0.0
  %158 = vmatpush1.msra.mxu0 0.0
  %159 = vmatprep.mubr.f32.mxu0 0.0
  %160 = vmatmul.mubr.f32.gmra.mrb[0].mxu0 %v94
  %v161 = vpop.f32.mrb[0].mxu0
  %v162 = vadd.f32 0.0, %v161
  %v163 = vpop.f32.mrb[0].mxu0
  %v164 = vadd.f32 0.0, %v163
  %165 = vdwg.mxu0
  %vm166 = vcmask 523264
  %v168 = vsel %vm166, %v82, 0
  %170 = vmatprep.subr.mxu0 %v55
  %171 = vmatpush1.msra.mxu0 %v54
  %172 = vmatprep.subr.mxu0 %v57
  %173 = vmatpush1.msra.mxu0 %v56
  %174 = vmatprep.subr.mxu0 %v59
  %175 = vmatpush1.msra.mxu0 %v58
  %176 = vmatprep.subr.mxu0 %v61
  %177 = vmatpush1.msra.mxu0 %v60
  %178 = vmatprep.subr.mxu0 %v63
  %179 = vmatpush1.msra.mxu0 %v62
  %180 = vmatprep.subr.mxu0 %v65
  %181 = vmatpush1.msra.mxu0 %v64
  %182 = vmatprep.subr.mxu0 %v67
  %183 = vmatpush1.msra.mxu0 %v66
  %184 = vmatprep.subr.mxu0 %v69
  %185 = vmatpush1.msra.mxu0 %v68
  %186 = vmatprep.subr.mxu0 0.0
  %187 = vmatpush1.msra.mxu0 0.0
  %188 = vmatprep.subr.mxu0 0.0
  %189 = vmatpush1.msra.mxu0 0.0
  %190 = vmatprep.subr.mxu0 0.0
  %191 = vmatpush1.msra.mxu0 0.0
  %192 = vmatprep.subr.mxu0 0.0
  %193 = vmatpush1.msra.mxu0 0.0
  %194 = vmatprep.subr.mxu0 0.0
  %195 = vmatpush1.msra.mxu0 0.0
  %196 = vmatprep.subr.mxu0 0.0
  %197 = vmatpush1.msra.mxu0 0.0
  %198 = vmatprep.subr.mxu0 0.0
  %199 = vmatpush1.msra.mxu0 0.0
  %200 = vmatprep.subr.mxu0 0.0
  %201 = vmatpush1.msra.mxu0 0.0
  %202 = vmatprep.subr.mxu0 0.0
  %203 = vmatpush1.msra.mxu0 0.0
  %204 = vmatprep.subr.mxu0 0.0
  %205 = vmatpush1.msra.mxu0 0.0
  %206 = vmatprep.subr.mxu0 0.0
  %207 = vmatpush1.msra.mxu0 0.0
  %208 = vmatprep.subr.mxu0 0.0
  %209 = vmatpush1.msra.mxu0 0.0
  %210 = vmatprep.subr.mxu0 0.0
  %211 = vmatpush1.msra.mxu0 0.0
  %212 = vmatprep.subr.mxu0 0.0
  %213 = vmatpush1.msra.mxu0 0.0
  %214 = vmatprep.subr.mxu0 0.0
  %215 = vmatpush1.msra.mxu0 0.0
  %216 = vmatprep.subr.mxu0 0.0
  %217 = vmatpush1.msra.mxu0 0.0
  %218 = vmatprep.subr.mxu0 0.0
  %219 = vmatpush1.msra.mxu0 0.0
  %220 = vmatprep.subr.mxu0 0.0
  %221 = vmatpush1.msra.mxu0 0.0
  %222 = vmatprep.subr.mxu0 0.0
  %223 = vmatpush1.msra.mxu0 0.0
  %224 = vmatprep.subr.mxu0 0.0
  %225 = vmatpush1.msra.mxu0 0.0
  %226 = vmatprep.subr.mxu0 0.0
  %227 = vmatpush1.msra.mxu0 0.0
  %228 = vmatprep.subr.mxu0 0.0
  %229 = vmatpush1.msra.mxu0 0.0
  %230 = vmatprep.subr.mxu0 0.0
  %231 = vmatpush1.msra.mxu0 0.0
  %232 = vmatprep.subr.mxu0 0.0
  %233 = vmatpush1.msra.mxu0 0.0
  %234 = vmatprep.mubr.f32.mxu0 0.0
  %235 = vmatmul.mubr.f32.gmra.mrb[0].mxu0 %v168
  %v236 = vpop.f32.mrb[0].mxu0
  %v237 = vadd.f32 0.0, %v236
  %v238 = vpop.f32.mrb[0].mxu0
  %v239 = vadd.f32 0.0, %v238
  %240 = vdwg.mxu0
  %v241 = vadd.f32 %v162, %v237
  %v242 = vxor.u32 %v241, 2147483648
  %v243 = vmul.f32 %v242, 1.442695
  %v244 = vpow.pop %v243
  %v245 = vadd.f32 %v244, 1.0
  %v246 = vrcp.pop %v245
  %v247 = vmul.f32 1.0, %v246
  %v248 = vadd.f32 %v239, %v70
  %v249 = vmul.f32 %v247, %v248
  %v250 = vadd.f32 %v164, %v249
  %v251 = vtanh.pop %v250
  %v252 = vsub.f32 1.0, %v247
  %254 = vrot.lane.b32.xlu0 %v251, 64
  %v255 = vpop.permute.xlu0 %254
  %v257 = vmul.f32 %v252, %v255
  %258 = vrot.lane.b32.xlu0 %v82, 64
  %v259 = vpop.permute.xlu0 %258
  %v261 = vmul.f32 %v247, %v259
  %v262 = vadd.f32 %v257, %v261
  %263 = vset.pattern.permute.xlu0 13
  %264 = vperm.xlu0 %263, %v20
  %v265 = vpop.permute.xlu0 %264
  %vm266 = vcmp.eq.s32.totalorder %v73, %v265
  %267 = vset.pattern.permute.xlu0 18
  %268 = vperm.xlu0 %267, %v87
  %v269 = vpop.permute.xlu0 %268
  %vm270 = vcmp.eq.s32.totalorder %v73, %v269
  %vm271 = vmor %vm266, %vm270
  %v272 = vsel %vm271, 1, 0
  %v273 = vcvt.s32.f32 %v272
  %274 = vmatprep.subr.mxu0 %v23
  %275 = vmatpush1.msra.mxu0 %v22
  %276 = vmatprep.subr.mxu0 %v25
  %277 = vmatpush1.msra.mxu0 %v24
  %278 = vmatprep.subr.mxu0 %v27
  %279 = vmatpush1.msra.mxu0 %v26
  %280 = vmatprep.subr.mxu0 %v29
  %281 = vmatpush1.msra.mxu0 %v28
  %282 = vmatprep.subr.mxu0 %v31
  %283 = vmatpush1.msra.mxu0 %v30
  %284 = vmatprep.subr.mxu0 %v33
  %285 = vmatpush1.msra.mxu0 %v32
  %286 = vmatprep.subr.mxu0 %v35
  %287 = vmatpush1.msra.mxu0 %v34
  %288 = vmatprep.subr.mxu0 %v37
  %289 = vmatpush1.msra.mxu0 %v36
  %290 = vmatprep.subr.mxu0 %v39
  %291 = vmatpush1.msra.mxu0 %v38
  %292 = vmatprep.subr.mxu0 %v41
  %293 = vmatpush1.msra.mxu0 %v40
  %294 = vmatprep.subr.mxu0 %v43
  %295 = vmatpush1.msra.mxu0 %v42
  %296 = vmatprep.subr.mxu0 %v45
  %297 = vmatpush1.msra.mxu0 %v44
  %298 = vmatprep.subr.mxu0 %v47
  %299 = vmatpush1.msra.mxu0 %v46
  %300 = vmatprep.subr.mxu0 %v49
  %301 = vmatpush1.msra.mxu0 %v48
  %302 = vmatprep.subr.mxu0 %v51
  %303 = vmatpush1.msra.mxu0 %v50
  %304 = vmatprep.subr.mxu0 %v53
  %305 = vmatpush1.msra.mxu0 %v52
  %306 = vmatprep.subr.mxu0 0.0
  %307 = vmatpush1.msra.mxu0 0.0
  %308 = vmatprep.subr.mxu0 0.0
  %309 = vmatpush1.msra.mxu0 0.0
  %310 = vmatprep.subr.mxu0 0.0
  %311 = vmatpush1.msra.mxu0 0.0
  %312 = vmatprep.subr.mxu0 0.0
  %313 = vmatpush1.msra.mxu0 0.0
  %314 = vmatprep.subr.mxu0 0.0
  %315 = vmatpush1.msra.mxu0 0.0
  %316 = vmatprep.subr.mxu0 0.0
  %317 = vmatpush1.msra.mxu0 0.0
  %318 = vmatprep.subr.mxu0 0.0
  %319 = vmatpush1.msra.mxu0 0.0
  %320 = vmatprep.subr.mxu0 0.0
  %321 = vmatpush1.msra.mxu0 0.0
  %322 = vmatprep.subr.mxu0 0.0
  %323 = vmatpush1.msra.mxu0 0.0
  %324 = vmatprep.subr.mxu0 0.0
  %325 = vmatpush1.msra.mxu0 0.0
  %326 = vmatprep.subr.mxu0 0.0
  %327 = vmatpush1.msra.mxu0 0.0
  %328 = vmatprep.subr.mxu0 0.0
  %329 = vmatpush1.msra.mxu0 0.0
  %330 = vmatprep.subr.mxu0 0.0
  %331 = vmatpush1.msra.mxu0 0.0
  %332 = vmatprep.subr.mxu0 0.0
  %333 = vmatpush1.msra.mxu0 0.0
  %334 = vmatprep.subr.mxu0 0.0
  %335 = vmatpush1.msra.mxu0 0.0
  %336 = vmatprep.subr.mxu0 0.0
  %337 = vmatpush1.msra.mxu0 0.0
  %338 = vmatprep.mubr.f32.mxu0 0.0
  %339 = vmatmul.mubr.f32.gmra.mrb[0].mxu0 %v273
  %v340 = vpop.f32.mrb[0].mxu0
  %v341 = vadd.f32 0.0, %v340
  %v342 = vpop.f32.mrb[0].mxu0
  %v343 = vadd.f32 0.0, %v342
  %344 = vdwg.mxu0
  %346 = vrot.lane.b32.xlu0 %v262, 64
  %v347 = vpop.permute.xlu0 %346
  %v348 = vsel %vm166, %v347, 0
  %350 = vmatprep.subr.mxu0 %v55
  %351 = vmatpush1.msra.mxu0 %v54
  %352 = vmatprep.subr.mxu0 %v57
  %353 = vmatpush1.msra.mxu0 %v56
  %354 = vmatprep.subr.mxu0 %v59
  %355 = vmatpush1.msra.mxu0 %v58
  %356 = vmatprep.subr.mxu0 %v61
  %357 = vmatpush1.msra.mxu0 %v60
  %358 = vmatprep.subr.mxu0 %v63
  %359 = vmatpush1.msra.mxu0 %v62
  %360 = vmatprep.subr.mxu0 %v65
  %361 = vmatpush1.msra.mxu0 %v64
  %362 = vmatprep.subr.mxu0 %v67
  %363 = vmatpush1.msra.mxu0 %v66
  %364 = vmatprep.subr.mxu0 %v69
  %365 = vmatpush1.msra.mxu0 %v68
  %366 = vmatprep.subr.mxu0 0.0
  %367 = vmatpush1.msra.mxu0 0.0
  %368 = vmatprep.subr.mxu0 0.0
  %369 = vmatpush1.msra.mxu0 0.0
  %370 = vmatprep.subr.mxu0 0.0
  %371 = vmatpush1.msra.mxu0 0.0
  %372 = vmatprep.subr.mxu0 0.0
  %373 = vmatpush1.msra.mxu0 0.0
  %374 = vmatprep.subr.mxu0 0.0
  %375 = vmatpush1.msra.mxu0 0.0
  %376 = vmatprep.subr.mxu0 0.0
  %377 = vmatpush1.msra.mxu0 0.0
  %378 = vmatprep.subr.mxu0 0.0
  %379 = vmatpush1.msra.mxu0 0.0
  %380 = vmatprep.subr.mxu0 0.0
  %381 = vmatpush1.msra.mxu0 0.0
  %382 = vmatprep.subr.mxu0 0.0
  %383 = vmatpush1.msra.mxu0 0.0
  %384 = vmatprep.subr.mxu0 0.0
  %385 = vmatpush1.msra.mxu0 0.0
  %386 = vmatprep.subr.mxu0 0.0
  %387 = vmatpush1.msra.mxu0 0.0
  %388 = vmatprep.subr.mxu0 0.0
  %389 = vmatpush1.msra.mxu0 0.0
  %390 = vmatprep.subr.mxu0 0.0
  %391 = vmatpush1.msra.mxu0 0.0
  %392 = vmatprep.subr.mxu0 0.0
  %393 = vmatpush1.msra.mxu0 0.0
  %394 = vmatprep.subr.mxu0 0.0
  %395 = vmatpush1.msra.mxu0 0.0
  %396 = vmatprep.subr.mxu0 0.0
  %397 = vmatpush1.msra.mxu0 0.0
  %398 = vmatprep.subr.mxu0 0.0
  %399 = vmatpush1.msra.mxu0 0.0
  %400 = vmatprep.subr.mxu0 0.0
  %401 = vmatpush1.msra.mxu0 0.0
  %402 = vmatprep.subr.mxu0 0.0
  %403 = vmatpush1.msra.mxu0 0.0
  %404 = vmatprep.subr.mxu0 0.0
  %405 = vmatpush1.msra.mxu0 0.0
  %406 = vmatprep.subr.mxu0 0.0
  %407 = vmatpush1.msra.mxu0 0.0
  %408 = vmatprep.subr.mxu0 0.0
  %409 = vmatpush1.msra.mxu0 0.0
  %410 = vmatprep.subr.mxu0 0.0
  %411 = vmatpush1.msra.mxu0 0.0
  %412 = vmatprep.subr.mxu0 0.0
  %413 = vmatpush1.msra.mxu0 0.0
  %414 = vmatprep.mubr.f32.mxu0 0.0
  %415 = vmatmul.mubr.f32.gmra.mrb[0].mxu0 %v348
  %v416 = vpop.f32.mrb[0].mxu0
  %v417 = vadd.f32 0.0, %v416
  %v418 = vpop.f32.mrb[0].mxu0
  %v419 = vadd.f32 0.0, %v418
  %420 = vdwg.mxu0
  %v421 = vadd.f32 %v341, %v417
  %v422 = vxor.u32 %v421, 2147483648
  %v423 = vmul.f32 %v422, 1.442695
  %v424 = vpow.pop %v423
  %v425 = vadd.f32 %v424, 1.0
  %v426 = vrcp.pop %v425
  %v427 = vmul.f32 1.0, %v426
  %v428 = vadd.f32 %v419, %v70
  %v429 = vmul.f32 %v427, %v428
  %v430 = vadd.f32 %v343, %v429
  %v431 = vtanh.pop %v430
  %v432 = vsub.f32 1.0, %v427
  %434 = vrot.lane.b32.xlu0 %v431, 64
  %v435 = vpop.permute.xlu0 %434
  %v437 = vmul.f32 %v432, %v435
  %v438 = vmul.f32 %v427, %v262
  %v439 = vadd.f32 %v437, %v438
  %440 = vset.pattern.permute.xlu0 14
  %441 = vperm.xlu0 %440, %v20
  %v442 = vpop.permute.xlu0 %441
  %vm443 = vcmp.eq.s32.totalorder %v73, %v442
  %444 = vset.pattern.permute.xlu0 17
  %445 = vperm.xlu0 %444, %v87
  %v446 = vpop.permute.xlu0 %445
  %vm447 = vcmp.eq.s32.totalorder %v73, %v446
  %vm448 = vmor %vm443, %vm447
  %v449 = vsel %vm448, 1, 0
  %v450 = vcvt.s32.f32 %v449
  %451 = vmatprep.subr.mxu0 %v23
  %452 = vmatpush1.msra.mxu0 %v22
  %453 = vmatprep.subr.mxu0 %v25
  %454 = vmatpush1.msra.mxu0 %v24
  %455 = vmatprep.subr.mxu0 %v27
  %456 = vmatpush1.msra.mxu0 %v26
  %457 = vmatprep.subr.mxu0 %v29
  %458 = vmatpush1.msra.mxu0 %v28
  %459 = vmatprep.subr.mxu0 %v31
  %460 = vmatpush1.msra.mxu0 %v30
  %461 = vmatprep.subr.mxu0 %v33
  %462 = vmatpush1.msra.mxu0 %v32
  %463 = vmatprep.subr.mxu0 %v35
  %464 = vmatpush1.msra.mxu0 %v34
  %465 = vmatprep.subr.mxu0 %v37
  %466 = vmatpush1.msra.mxu0 %v36
  %467 = vmatprep.subr.mxu0 %v39
  %468 = vmatpush1.msra.mxu0 %v38
  %469 = vmatprep.subr.mxu0 %v41
  %470 = vmatpush1.msra.mxu0 %v40
  %471 = vmatprep.subr.mxu0 %v43
  %472 = vmatpush1.msra.mxu0 %v42
  %473 = vmatprep.subr.mxu0 %v45
  %474 = vmatpush1.msra.mxu0 %v44
  %475 = vmatprep.subr.mxu0 %v47
  %476 = vmatpush1.msra.mxu0 %v46
  %477 = vmatprep.subr.mxu0 %v49
  %478 = vmatpush1.msra.mxu0 %v48
  %479 = vmatprep.subr.mxu0 %v51
  %480 = vmatpush1.msra.mxu0 %v50
  %481 = vmatprep.subr.mxu0 %v53
  %482 = vmatpush1.msra.mxu0 %v52
  %483 = vmatprep.subr.mxu0 0.0
  %484 = vmatpush1.msra.mxu0 0.0
  %485 = vmatprep.subr.mxu0 0.0
  %486 = vmatpush1.msra.mxu0 0.0
  %487 = vmatprep.subr.mxu0 0.0
  %488 = vmatpush1.msra.mxu0 0.0
  %489 = vmatprep.subr.mxu0 0.0
  %490 = vmatpush1.msra.mxu0 0.0
  %491 = vmatprep.subr.mxu0 0.0
  %492 = vmatpush1.msra.mxu0 0.0
  %493 = vmatprep.subr.mxu0 0.0
  %494 = vmatpush1.msra.mxu0 0.0
  %495 = vmatprep.subr.mxu0 0.0
  %496 = vmatpush1.msra.mxu0 0.0
  %497 = vmatprep.subr.mxu0 0.0
  %498 = vmatpush1.msra.mxu0 0.0
  %499 = vmatprep.subr.mxu0 0.0
  %500 = vmatpush1.msra.mxu0 0.0
  %501 = vmatprep.subr.mxu0 0.0
  %502 = vmatpush1.msra.mxu0 0.0
  %503 = vmatprep.subr.mxu0 0.0
  %504 = vmatpush1.msra.mxu0 0.0
  %505 = vmatprep.subr.mxu0 0.0
  %506 = vmatpush1.msra.mxu0 0.0
  %507 = vmatprep.subr.mxu0 0.0
  %508 = vmatpush1.msra.mxu0 0.0
  %509 = vmatprep.subr.mxu0 0.0
  %510 = vmatpush1.msra.mxu0 0.0
  %511 = vmatprep.subr.mxu0 0.0
  %512 = vmatpush1.msra.mxu0 0.0
  %513 = vmatprep.subr.mxu0 0.0
  %514 = vmatpush1.msra.mxu0 0.0
  %515 = vmatprep.mubr.f32.mxu0 0.0
  %516 = vmatmul.mubr.f32.gmra.mrb[0].mxu0 %v450
  %v517 = vpop.f32.mrb[0].mxu0
  %v518 = vadd.f32 0.0, %v517
  %v519 = vpop.f32.mrb[0].mxu0
  %v520 = vadd.f32 0.0, %v519
  %521 = vdwg.mxu0
  %523 = vrot.lane.b32.xlu0 %v439, 64
  %v524 = vpop.permute.xlu0 %523
  %v525 = vsel %vm166, %v524, 0
  %527 = vmatprep.subr.mxu0 %v55
  %528 = vmatpush1.msra.mxu0 %v54
  %529 = vmatprep.subr.mxu0 %v57
  %530 = vmatpush1.msra.mxu0 %v56
  %531 = vmatprep.subr.mxu0 %v59
  %532 = vmatpush1.msra.mxu0 %v58
  %533 = vmatprep.subr.mxu0 %v61
  %534 = vmatpush1.msra.mxu0 %v60
  %535 = vmatprep.subr.mxu0 %v63
  %536 = vmatpush1.msra.mxu0 %v62
  %537 = vmatprep.subr.mxu0 %v65
  %538 = vmatpush1.msra.mxu0 %v64
  %539 = vmatprep.subr.mxu0 %v67
  %540 = vmatpush1.msra.mxu0 %v66
  %541 = vmatprep.subr.mxu0 %v69
  %542 = vmatpush1.msra.mxu0 %v68
  %543 = vmatprep.subr.mxu0 0.0
  %544 = vmatpush1.msra.mxu0 0.0
  %545 = vmatprep.subr.mxu0 0.0
  %546 = vmatpush1.msra.mxu0 0.0
  %547 = vmatprep.subr.mxu0 0.0
  %548 = vmatpush1.msra.mxu0 0.0
  %549 = vmatprep.subr.mxu0 0.0
  %550 = vmatpush1.msra.mxu0 0.0
  %551 = vmatprep.subr.mxu0 0.0
  %552 = vmatpush1.msra.mxu0 0.0
  %553 = vmatprep.subr.mxu0 0.0
  %554 = vmatpush1.msra.mxu0 0.0
  %555 = vmatprep.subr.mxu0 0.0
  %556 = vmatpush1.msra.mxu0 0.0
  %557 = vmatprep.subr.mxu0 0.0
  %558 = vmatpush1.msra.mxu0 0.0
  %559 = vmatprep.subr.mxu0 0.0
  %560 = vmatpush1.msra.mxu0 0.0
  %561 = vmatprep.subr.mxu0 0.0
  %562 = vmatpush1.msra.mxu0 0.0
  %563 = vmatprep.subr.mxu0 0.0
  %564 = vmatpush1.msra.mxu0 0.0
  %565 = vmatprep.subr.mxu0 0.0
  %566 = vmatpush1.msra.mxu0 0.0
  %567 = vmatprep.subr.mxu0 0.0
  %568 = vmatpush1.msra.mxu0 0.0
  %569 = vmatprep.subr.mxu0 0.0
  %570 = vmatpush1.msra.mxu0 0.0
  %571 = vmatprep.subr.mxu0 0.0
  %572 = vmatpush1.msra.mxu0 0.0
  %573 = vmatprep.subr.mxu0 0.0
  %574 = vmatpush1.msra.mxu0 0.0
  %575 = vmatprep.subr.mxu0 0.0
  %576 = vmatpush1.msra.mxu0 0.0
  %577 = vmatprep.subr.mxu0 0.0
  %578 = vmatpush1.msra.mxu0 0.0
  %579 = vmatprep.subr.mxu0 0.0
  %580 = vmatpush1.msra.mxu0 0.0
  %581 = vmatprep.subr.mxu0 0.0
  %582 = vmatpush1.msra.mxu0 0.0
  %583 = vmatprep.subr.mxu0 0.0
  %584 = vmatpush1.msra.mxu0 0.0
  %585 = vmatprep.subr.mxu0 0.0
  %586 = vmatpush1.msra.mxu0 0.0
  %587 = vmatprep.subr.mxu0 0.0
  %588 = vmatpush1.msra.mxu0 0.0
  %589 = vmatprep.subr.mxu0 0.0
  %590 = vmatpush1.msra.mxu0 0.0
  %591 = vmatprep.mubr.f32.mxu0 0.0
  %592 = vmatmul.mubr.f32.gmra.mrb[0].mxu0 %v525
  %v593 = vpop.f32.mrb[0].mxu0
  %v594 = vadd.f32 0.0, %v593
  %v595 = vpop.f32.mrb[0].mxu0
  %v596 = vadd.f32 0.0, %v595
  %597 = vdwg.mxu0
  %v598 = vadd.f32 %v518, %v594
  %v599 = vxor.u32 %v598, 2147483648
  %v600 = vmul.f32 %v599, 1.442695
  %v601 = vpow.pop %v600
  %v602 = vadd.f32 %v601, 1.0
  %v603 = vrcp.pop %v602
  %v604 = vmul.f32 1.0, %v603
  %v605 = vadd.f32 %v596, %v70
  %v606 = vmul.f32 %v604, %v605
  %v607 = vadd.f32 %v520, %v606
  %v608 = vtanh.pop %v607
  %v609 = vsub.f32 1.0, %v604
  %611 = vrot.lane.b32.xlu0 %v608, 64
  %v612 = vpop.permute.xlu0 %611
  %v614 = vmul.f32 %v609, %v612
  %v615 = vmul.f32 %v604, %v439
  %v616 = vadd.f32 %v614, %v615
  %617 = vset.pattern.permute.xlu0 15
  %618 = vperm.xlu0 %617, %v20
  %v619 = vpop.permute.xlu0 %618
  %vm620 = vcmp.eq.s32.totalorder %v73, %v619
  %621 = vset.pattern.permute.xlu0 16
  %622 = vperm.xlu0 %621, %v87
  %v623 = vpop.permute.xlu0 %622
  %vm624 = vcmp.eq.s32.totalorder %v73, %v623
  %vm625 = vmor %vm620, %vm624
  %v626 = vsel %vm625, 1, 0
  %v627 = vcvt.s32.f32 %v626
  %628 = vmatprep.subr.mxu0 %v23
  %629 = vmatpush1.msra.mxu0 %v22
  %630 = vmatprep.subr.mxu0 %v25
  %631 = vmatpush1.msra.mxu0 %v24
  %632 = vmatprep.subr.mxu0 %v27
  %633 = vmatpush1.msra.mxu0 %v26
  %634 = vmatprep.subr.mxu0 %v29
  %635 = vmatpush1.msra.mxu0 %v28
  %636 = vmatprep.subr.mxu0 %v31
  %637 = vmatpush1.msra.mxu0 %v30
  %638 = vmatprep.subr.mxu0 %v33
  %639 = vmatpush1.msra.mxu0 %v32
  %640 = vmatprep.subr.mxu0 %v35
  %641 = vmatpush1.msra.mxu0 %v34
  %642 = vmatprep.subr.mxu0 %v37
  %643 = vmatpush1.msra.mxu0 %v36
  %644 = vmatprep.subr.mxu0 %v39
  %645 = vmatpush1.msra.mxu0 %v38
  %646 = vmatprep.subr.mxu0 %v41
  %647 = vmatpush1.msra.mxu0 %v40
  %648 = vmatprep.subr.mxu0 %v43
  %649 = vmatpush1.msra.mxu0 %v42
  %650 = vmatprep.subr.mxu0 %v45
  %651 = vmatpush1.msra.mxu0 %v44
  %652 = vmatprep.subr.mxu0 %v47
  %653 = vmatpush1.msra.mxu0 %v46
  %654 = vmatprep.subr.mxu0 %v49
  %655 = vmatpush1.msra.mxu0 %v48
  %656 = vmatprep.subr.mxu0 %v51
  %657 = vmatpush1.msra.mxu0 %v50
  %658 = vmatprep.subr.mxu0 %v53
  %659 = vmatpush1.msra.mxu0 %v52
  %660 = vmatprep.subr.mxu0 0.0
  %661 = vmatpush1.msra.mxu0 0.0
  %662 = vmatprep.subr.mxu0 0.0
  %663 = vmatpush1.msra.mxu0 0.0
  %664 = vmatprep.subr.mxu0 0.0
  %665 = vmatpush1.msra.mxu0 0.0
  %666 = vmatprep.subr.mxu0 0.0
  %667 = vmatpush1.msra.mxu0 0.0
  %668 = vmatprep.subr.mxu0 0.0
  %669 = vmatpush1.msra.mxu0 0.0
  %670 = vmatprep.subr.mxu0 0.0
  %671 = vmatpush1.msra.mxu0 0.0
  %672 = vmatprep.subr.mxu0 0.0
  %673 = vmatpush1.msra.mxu0 0.0
  %674 = vmatprep.subr.mxu0 0.0
  %675 = vmatpush1.msra.mxu0 0.0
  %676 = vmatprep.subr.mxu0 0.0
  %677 = vmatpush1.msra.mxu0 0.0
  %678 = vmatprep.subr.mxu0 0.0
  %679 = vmatpush1.msra.mxu0 0.0
  %680 = vmatprep.subr.mxu0 0.0
  %681 = vmatpush1.msra.mxu0 0.0
  %682 = vmatprep.subr.mxu0 0.0
  %683 = vmatpush1.msra.mxu0 0.0
  %684 = vmatprep.subr.mxu0 0.0
  %685 = vmatpush1.msra.mxu0 0.0
  %686 = vmatprep.subr.mxu0 0.0
  %687 = vmatpush1.msra.mxu0 0.0
  %688 = vmatprep.subr.mxu0 0.0
  %689 = vmatpush1.msra.mxu0 0.0
  %690 = vmatprep.subr.mxu0 0.0
  %691 = vmatpush1.msra.mxu0 0.0
  %692 = vmatprep.mubr.f32.mxu0 0.0
  %693 = vmatmul.mubr.f32.gmra.mrb[0].mxu0 %v627
  %v694 = vpop.f32.mrb[0].mxu0
  %v695 = vadd.f32 0.0, %v694
  %v696 = vpop.f32.mrb[0].mxu0
  %v697 = vadd.f32 0.0, %v696
  %698 = vdwg.mxu0
  %700 = vrot.lane.b32.xlu0 %v616, 64
  %v701 = vpop.permute.xlu0 %700
  %v702 = vsel %vm166, %v701, 0
  %704 = vmatprep.subr.mxu0 %v55
  %705 = vmatpush1.msra.mxu0 %v54
  %706 = vmatprep.subr.mxu0 %v57
  %707 = vmatpush1.msra.mxu0 %v56
  %708 = vmatprep.subr.mxu0 %v59
  %709 = vmatpush1.msra.mxu0 %v58
  %710 = vmatprep.subr.mxu0 %v61
  %711 = vmatpush1.msra.mxu0 %v60
  %712 = vmatprep.subr.mxu0 %v63
  %713 = vmatpush1.msra.mxu0 %v62
  %714 = vmatprep.subr.mxu0 %v65
  %715 = vmatpush1.msra.mxu0 %v64
  %716 = vmatprep.subr.mxu0 %v67
  %717 = vmatpush1.msra.mxu0 %v66
  %718 = vmatprep.subr.mxu0 %v69
  %719 = vmatpush1.msra.mxu0 %v68
  %720 = vmatprep.subr.mxu0 0.0
  %721 = vmatpush1.msra.mxu0 0.0
  %722 = vmatprep.subr.mxu0 0.0
  %723 = vmatpush1.msra.mxu0 0.0
  %724 = vmatprep.subr.mxu0 0.0
  %725 = vmatpush1.msra.mxu0 0.0
  %726 = vmatprep.subr.mxu0 0.0
  %727 = vmatpush1.msra.mxu0 0.0
  %728 = vmatprep.subr.mxu0 0.0
  %729 = vmatpush1.msra.mxu0 0.0
  %730 = vmatprep.subr.mxu0 0.0
  %731 = vmatpush1.msra.mxu0 0.0
  %732 = vmatprep.subr.mxu0 0.0
  %733 = vmatpush1.msra.mxu0 0.0
  %734 = vmatprep.subr.mxu0 0.0
  %735 = vmatpush1.msra.mxu0 0.0
  %736 = vmatprep.subr.mxu0 0.0
  %737 = vmatpush1.msra.mxu0 0.0
  %738 = vmatprep.subr.mxu0 0.0
  %739 = vmatpush1.msra.mxu0 0.0
  %740 = vmatprep.subr.mxu0 0.0
  %741 = vmatpush1.msra.mxu0 0.0
  %742 = vmatprep.subr.mxu0 0.0
  %743 = vmatpush1.msra.mxu0 0.0
  %744 = vmatprep.subr.mxu0 0.0
  %745 = vmatpush1.msra.mxu0 0.0
  %746 = vmatprep.subr.mxu0 0.0
  %747 = vmatpush1.msra.mxu0 0.0
  %748 = vmatprep.subr.mxu0 0.0
  %749 = vmatpush1.msra.mxu0 0.0
  %750 = vmatprep.subr.mxu0 0.0
  %751 = vmatpush1.msra.mxu0 0.0
  %752 = vmatprep.subr.mxu0 0.0
  %753 = vmatpush1.msra.mxu0 0.0
  %754 = vmatprep.subr.mxu0 0.0
  %755 = vmatpush1.msra.mxu0 0.0
  %756 = vmatprep.subr.mxu0 0.0
  %757 = vmatpush1.msra.mxu0 0.0
  %758 = vmatprep.subr.mxu0 0.0
  %759 = vmatpush1.msra.mxu0 0.0
  %760 = vmatprep.subr.mxu0 0.0
  %761 = vmatpush1.msra.mxu0 0.0
  %762 = vmatprep.subr.mxu0 0.0
  %763 = vmatpush1.msra.mxu0 0.0
  %764 = vmatprep.subr.mxu0 0.0
  %765 = vmatpush1.msra.mxu0 0.0
  %766 = vmatprep.subr.mxu0 0.0
  %767 = vmatpush1.msra.mxu0 0.0
  %768 = vmatprep.mubr.f32.mxu0 0.0
  %769 = vmatmul.mubr.f32.gmra.mrb[0].mxu0 %v702
  %v770 = vpop.f32.mrb[0].mxu0
  %v771 = vadd.f32 0.0, %v770
  %v772 = vpop.f32.mrb[0].mxu0
  %v773 = vadd.f32 0.0, %v772
  %774 = vdwg.mxu0
  %v775 = vadd.f32 %v695, %v771
  %v776 = vxor.u32 %v775, 2147483648
  %v777 = vmul.f32 %v776, 1.442695
  %v778 = vpow.pop %v777
  %v779 = vadd.f32 %v778, 1.0
  %v780 = vrcp.pop %v779
  %v781 = vmul.f32 1.0, %v780
  %v782 = vadd.f32 %v773, %v70
  %v783 = vmul.f32 %v781, %v782
  %v784 = vadd.f32 %v697, %v783
  %v785 = vtanh.pop %v784
  %v786 = vsub.f32 1.0, %v781
  %788 = vrot.lane.b32.xlu0 %v785, 64
  %v789 = vpop.permute.xlu0 %788
  %v791 = vmul.f32 %v786, %v789
  %v792 = vmul.f32 %v781, %v616
  %v793 = vadd.f32 %v791, %v792
  %794 = vset.pattern.permute.xlu0 16
  %795 = vperm.xlu0 %794, %v20
  %v796 = vpop.permute.xlu0 %795
  %vm797 = vcmp.eq.s32.totalorder %v73, %v796
  %798 = vset.pattern.permute.xlu0 15
  %799 = vperm.xlu0 %798, %v87
  %v800 = vpop.permute.xlu0 %799
  %vm801 = vcmp.eq.s32.totalorder %v73, %v800
  %vm802 = vmor %vm797, %vm801
  %v803 = vsel %vm802, 1, 0
  %v804 = vcvt.s32.f32 %v803
  %805 = vmatprep.subr.mxu0 %v23
  %806 = vmatpush1.msra.mxu0 %v22
  %807 = vmatprep.subr.mxu0 %v25
  %808 = vmatpush1.msra.mxu0 %v24
  %809 = vmatprep.subr.mxu0 %v27
  %810 = vmatpush1.msra.mxu0 %v26
  %811 = vmatprep.subr.mxu0 %v29
  %812 = vmatpush1.msra.mxu0 %v28
  %813 = vmatprep.subr.mxu0 %v31
  %814 = vmatpush1.msra.mxu0 %v30
  %815 = vmatprep.subr.mxu0 %v33
  %816 = vmatpush1.msra.mxu0 %v32
  %817 = vmatprep.subr.mxu0 %v35
  %818 = vmatpush1.msra.mxu0 %v34
  %819 = vmatprep.subr.mxu0 %v37
  %820 = vmatpush1.msra.mxu0 %v36
  %821 = vmatprep.subr.mxu0 %v39
  %822 = vmatpush1.msra.mxu0 %v38
  %823 = vmatprep.subr.mxu0 %v41
  %824 = vmatpush1.msra.mxu0 %v40
  %825 = vmatprep.subr.mxu0 %v43
  %826 = vmatpush1.msra.mxu0 %v42
  %827 = vmatprep.subr.mxu0 %v45
  %828 = vmatpush1.msra.mxu0 %v44
  %829 = vmatprep.subr.mxu0 %v47
  %830 = vmatpush1.msra.mxu0 %v46
  %831 = vmatprep.subr.mxu0 %v49
  %832 = vmatpush1.msra.mxu0 %v48
  %833 = vmatprep.subr.mxu0 %v51
  %834 = vmatpush1.msra.mxu0 %v50
  %835 = vmatprep.subr.mxu0 %v53
  %836 = vmatpush1.msra.mxu0 %v52
  %837 = vmatprep.subr.mxu0 0.0
  %838 = vmatpush1.msra.mxu0 0.0
  %839 = vmatprep.subr.mxu0 0.0
  %840 = vmatpush1.msra.mxu0 0.0
  %841 = vmatprep.subr.mxu0 0.0
  %842 = vmatpush1.msra.mxu0 0.0
  %843 = vmatprep.subr.mxu0 0.0
  %844 = vmatpush1.msra.mxu0 0.0
  %845 = vmatprep.subr.mxu0 0.0
  %846 = vmatpush1.msra.mxu0 0.0
  %847 = vmatprep.subr.mxu0 0.0
  %848 = vmatpush1.msra.mxu0 0.0
  %849 = vmatprep.subr.mxu0 0.0
  %850 = vmatpush1.msra.mxu0 0.0
  %851 = vmatprep.subr.mxu0 0.0
  %852 = vmatpush1.msra.mxu0 0.0
  %853 = vmatprep.subr.mxu0 0.0
  %854 = vmatpush1.msra.mxu0 0.0
  %855 = vmatprep.subr.mxu0 0.0
  %856 = vmatpush1.msra.mxu0 0.0
  %857 = vmatprep.subr.mxu0 0.0
  %858 = vmatpush1.msra.mxu0 0.0
  %859 = vmatprep.subr.mxu0 0.0
  %860 = vmatpush1.msra.mxu0 0.0
  %861 = vmatprep.subr.mxu0 0.0
  %862 = vmatpush1.msra.mxu0 0.0
  %863 = vmatprep.subr.mxu0 0.0
  %864 = vmatpush1.msra.mxu0 0.0
  %865 = vmatprep.subr.mxu0 0.0
  %866 = vmatpush1.msra.mxu0 0.0
  %867 = vmatprep.subr.mxu0 0.0
  %868 = vmatpush1.msra.mxu0 0.0
  %869 = vmatprep.mubr.f32.mxu0 0.0
  %870 = vmatmul.mubr.f32.gmra.mrb[0].mxu0 %v804
  %v871 = vpop.f32.mrb[0].mxu0
  %v872 = vadd.f32 0.0, %v871
  %v873 = vpop.f32.mrb[0].mxu0
  %v874 = vadd.f32 0.0, %v873
  %875 = vdwg.mxu0
  %877 = vrot.lane.b32.xlu0 %v793, 64
  %v878 = vpop.permute.xlu0 %877
  %v879 = vsel %vm166, %v878, 0
  %881 = vmatprep.subr.mxu0 %v55
  %882 = vmatpush1.msra.mxu0 %v54
  %883 = vmatprep.subr.mxu0 %v57
  %884 = vmatpush1.msra.mxu0 %v56
  %885 = vmatprep.subr.mxu0 %v59
  %886 = vmatpush1.msra.mxu0 %v58
  %887 = vmatprep.subr.mxu0 %v61
  %888 = vmatpush1.msra.mxu0 %v60
  %889 = vmatprep.subr.mxu0 %v63
  %890 = vmatpush1.msra.mxu0 %v62
  %891 = vmatprep.subr.mxu0 %v65
  %892 = vmatpush1.msra.mxu0 %v64
  %893 = vmatprep.subr.mxu0 %v67
  %894 = vmatpush1.msra.mxu0 %v66
  %895 = vmatprep.subr.mxu0 %v69
  %896 = vmatpush1.msra.mxu0 %v68
  %897 = vmatprep.subr.mxu0 0.0
  %898 = vmatpush1.msra.mxu0 0.0
  %899 = vmatprep.subr.mxu0 0.0
  %900 = vmatpush1.msra.mxu0 0.0
  %901 = vmatprep.subr.mxu0 0.0
  %902 = vmatpush1.msra.mxu0 0.0
  %903 = vmatprep.subr.mxu0 0.0
  %904 = vmatpush1.msra.mxu0 0.0
  %905 = vmatprep.subr.mxu0 0.0
  %906 = vmatpush1.msra.mxu0 0.0
  %907 = vmatprep.subr.mxu0 0.0
  %908 = vmatpush1.msra.mxu0 0.0
  %909 = vmatprep.subr.mxu0 0.0
  %910 = vmatpush1.msra.mxu0 0.0
  %911 = vmatprep.subr.mxu0 0.0
  %912 = vmatpush1.msra.mxu0 0.0
  %913 = vmatprep.subr.mxu0 0.0
  %914 = vmatpush1.msra.mxu0 0.0
  %915 = vmatprep.subr.mxu0 0.0
  %916 = vmatpush1.msra.mxu0 0.0
  %917 = vmatprep.subr.mxu0 0.0
  %918 = vmatpush1.msra.mxu0 0.0
  %919 = vmatprep.subr.mxu0 0.0
  %920 = vmatpush1.msra.mxu0 0.0
  %921 = vmatprep.subr.mxu0 0.0
  %922 = vmatpush1.msra.mxu0 0.0
  %923 = vmatprep.subr.mxu0 0.0
  %924 = vmatpush1.msra.mxu0 0.0
  %925 = vmatprep.subr.mxu0 0.0
  %926 = vmatpush1.msra.mxu0 0.0
  %927 = vmatprep.subr.mxu0 0.0
  %928 = vmatpush1.msra.mxu0 0.0
  %929 = vmatprep.subr.mxu0 0.0
  %930 = vmatpush1.msra.mxu0 0.0
  %931 = vmatprep.subr.mxu0 0.0
  %932 = vmatpush1.msra.mxu0 0.0
  %933 = vmatprep.subr.mxu0 0.0
  %934 = vmatpush1.msra.mxu0 0.0
  %935 = vmatprep.subr.mxu0 0.0
  %936 = vmatpush1.msra.mxu0 0.0
  %937 = vmatprep.subr.mxu0 0.0
  %938 = vmatpush1.msra.mxu0 0.0
  %939 = vmatprep.subr.mxu0 0.0
  %940 = vmatpush1.msra.mxu0 0.0
  %941 = vmatprep.subr.mxu0 0.0
  %942 = vmatpush1.msra.mxu0 0.0
  %943 = vmatprep.subr.mxu0 0.0
  %944 = vmatpush1.msra.mxu0 0.0
  %945 = vmatprep.mubr.f32.mxu0 0.0
  %946 = vmatmul.mubr.f32.gmra.mrb[0].mxu0 %v879
  %v947 = vpop.f32.mrb[0].mxu0
  %v948 = vadd.f32 0.0, %v947
  %v949 = vpop.f32.mrb[0].mxu0
  %v950 = vadd.f32 0.0, %v949
  %951 = vdwg.mxu0
  %v952 = vadd.f32 %v872, %v948
  %v953 = vxor.u32 %v952, 2147483648
  %v954 = vmul.f32 %v953, 1.442695
  %v955 = vpow.pop %v954
  %v956 = vadd.f32 %v955, 1.0
  %v957 = vrcp.pop %v956
  %v958 = vmul.f32 1.0, %v957
  %v959 = vadd.f32 %v950, %v70
  %v960 = vmul.f32 %v958, %v959
  %v961 = vadd.f32 %v874, %v960
  %v962 = vtanh.pop %v961
  %v963 = vsub.f32 1.0, %v958
  %965 = vrot.lane.b32.xlu0 %v962, 64
  %v966 = vpop.permute.xlu0 %965
  %v968 = vmul.f32 %v963, %v966
  %v969 = vmul.f32 %v958, %v793
  %v970 = vadd.f32 %v968, %v969
  %971 = vset.pattern.permute.xlu0 17
  %972 = vperm.xlu0 %971, %v20
  %v973 = vpop.permute.xlu0 %972
  %vm974 = vcmp.eq.s32.totalorder %v73, %v973
  %975 = vset.pattern.permute.xlu0 14
  %976 = vperm.xlu0 %975, %v87
  %v977 = vpop.permute.xlu0 %976
  %vm978 = vcmp.eq.s32.totalorder %v73, %v977
  %vm979 = vmor %vm974, %vm978
  %v980 = vsel %vm979, 1, 0
  %v981 = vcvt.s32.f32 %v980
  %982 = vmatprep.subr.mxu0 %v23
  %983 = vmatpush1.msra.mxu0 %v22
  %984 = vmatprep.subr.mxu0 %v25
  %985 = vmatpush1.msra.mxu0 %v24
  %986 = vmatprep.subr.mxu0 %v27
  %987 = vmatpush1.msra.mxu0 %v26
  %988 = vmatprep.subr.mxu0 %v29
  %989 = vmatpush1.msra.mxu0 %v28
  %990 = vmatprep.subr.mxu0 %v31
  %991 = vmatpush1.msra.mxu0 %v30
  %992 = vmatprep.subr.mxu0 %v33
  %993 = vmatpush1.msra.mxu0 %v32
  %994 = vmatprep.subr.mxu0 %v35
  %995 = vmatpush1.msra.mxu0 %v34
  %996 = vmatprep.subr.mxu0 %v37
  %997 = vmatpush1.msra.mxu0 %v36
  %998 = vmatprep.subr.mxu0 %v39
  %999 = vmatpush1.msra.mxu0 %v38
  %1000 = vmatprep.subr.mxu0 %v41
  %1001 = vmatpush1.msra.mxu0 %v40
  %1002 = vmatprep.subr.mxu0 %v43
  %1003 = vmatpush1.msra.mxu0 %v42
  %1004 = vmatprep.subr.mxu0 %v45
  %1005 = vmatpush1.msra.mxu0 %v44
  %1006 = vmatprep.subr.mxu0 %v47
  %1007 = vmatpush1.msra.mxu0 %v46
  %1008 = vmatprep.subr.mxu0 %v49
  %1009 = vmatpush1.msra.mxu0 %v48
  %1010 = vmatprep.subr.mxu0 %v51
  %1011 = vmatpush1.msra.mxu0 %v50
  %1012 = vmatprep.subr.mxu0 %v53
  %1013 = vmatpush1.msra.mxu0 %v52
  %1014 = vmatprep.subr.mxu0 0.0
  %1015 = vmatpush1.msra.mxu0 0.0
  %1016 = vmatprep.subr.mxu0 0.0
  %1017 = vmatpush1.msra.mxu0 0.0
  %1018 = vmatprep.subr.mxu0 0.0
  %1019 = vmatpush1.msra.mxu0 0.0
  %1020 = vmatprep.subr.mxu0 0.0
  %1021 = vmatpush1.msra.mxu0 0.0
  %1022 = vmatprep.subr.mxu0 0.0
  %1023 = vmatpush1.msra.mxu0 0.0
  %1024 = vmatprep.subr.mxu0 0.0
  %1025 = vmatpush1.msra.mxu0 0.0
  %1026 = vmatprep.subr.mxu0 0.0
  %1027 = vmatpush1.msra.mxu0 0.0
  %1028 = vmatprep.subr.mxu0 0.0
  %1029 = vmatpush1.msra.mxu0 0.0
  %1030 = vmatprep.subr.mxu0 0.0
  %1031 = vmatpush1.msra.mxu0 0.0
  %1032 = vmatprep.subr.mxu0 0.0
  %1033 = vmatpush1.msra.mxu0 0.0
  %1034 = vmatprep.subr.mxu0 0.0
  %1035 = vmatpush1.msra.mxu0 0.0
  %1036 = vmatprep.subr.mxu0 0.0
  %1037 = vmatpush1.msra.mxu0 0.0
  %1038 = vmatprep.subr.mxu0 0.0
  %1039 = vmatpush1.msra.mxu0 0.0
  %1040 = vmatprep.subr.mxu0 0.0
  %1041 = vmatpush1.msra.mxu0 0.0
  %1042 = vmatprep.subr.mxu0 0.0
  %1043 = vmatpush1.msra.mxu0 0.0
  %1044 = vmatprep.subr.mxu0 0.0
  %1045 = vmatpush1.msra.mxu0 0.0
  %1046 = vmatprep.mubr.f32.mxu0 0.0
  %1047 = vmatmul.mubr.f32.gmra.mrb[0].mxu0 %v981
  %v1048 = vpop.f32.mrb[0].mxu0
  %v1049 = vadd.f32 0.0, %v1048
  %v1050 = vpop.f32.mrb[0].mxu0
  %v1051 = vadd.f32 0.0, %v1050
  %1052 = vdwg.mxu0
  %1054 = vrot.lane.b32.xlu0 %v970, 64
  %v1055 = vpop.permute.xlu0 %1054
  %v1056 = vsel %vm166, %v1055, 0
  %1058 = vmatprep.subr.mxu0 %v55
  %1059 = vmatpush1.msra.mxu0 %v54
  %1060 = vmatprep.subr.mxu0 %v57
  %1061 = vmatpush1.msra.mxu0 %v56
  %1062 = vmatprep.subr.mxu0 %v59
  %1063 = vmatpush1.msra.mxu0 %v58
  %1064 = vmatprep.subr.mxu0 %v61
  %1065 = vmatpush1.msra.mxu0 %v60
  %1066 = vmatprep.subr.mxu0 %v63
  %1067 = vmatpush1.msra.mxu0 %v62
  %1068 = vmatprep.subr.mxu0 %v65
  %1069 = vmatpush1.msra.mxu0 %v64
  %1070 = vmatprep.subr.mxu0 %v67
  %1071 = vmatpush1.msra.mxu0 %v66
  %1072 = vmatprep.subr.mxu0 %v69
  %1073 = vmatpush1.msra.mxu0 %v68
  %1074 = vmatprep.subr.mxu0 0.0
  %1075 = vmatpush1.msra.mxu0 0.0
  %1076 = vmatprep.subr.mxu0 0.0
  %1077 = vmatpush1.msra.mxu0 0.0
  %1078 = vmatprep.subr.mxu0 0.0
  %1079 = vmatpush1.msra.mxu0 0.0
  %1080 = vmatprep.subr.mxu0 0.0
  %1081 = vmatpush1.msra.mxu0 0.0
  %1082 = vmatprep.subr.mxu0 0.0
  %1083 = vmatpush1.msra.mxu0 0.0
  %1084 = vmatprep.subr.mxu0 0.0
  %1085 = vmatpush1.msra.mxu0 0.0
  %1086 = vmatprep.subr.mxu0 0.0
  %1087 = vmatpush1.msra.mxu0 0.0
  %1088 = vmatprep.subr.mxu0 0.0
  %1089 = vmatpush1.msra.mxu0 0.0
  %1090 = vmatprep.subr.mxu0 0.0
  %1091 = vmatpush1.msra.mxu0 0.0
  %1092 = vmatprep.subr.mxu0 0.0
  %1093 = vmatpush1.msra.mxu0 0.0
  %1094 = vmatprep.subr.mxu0 0.0
  %1095 = vmatpush1.msra.mxu0 0.0
  %1096 = vmatprep.subr.mxu0 0.0
  %1097 = vmatpush1.msra.mxu0 0.0
  %1098 = vmatprep.subr.mxu0 0.0
  %1099 = vmatpush1.msra.mxu0 0.0
  %1100 = vmatprep.subr.mxu0 0.0
  %1101 = vmatpush1.msra.mxu0 0.0
  %1102 = vmatprep.subr.mxu0 0.0
  %1103 = vmatpush1.msra.mxu0 0.0
  %1104 = vmatprep.subr.mxu0 0.0
  %1105 = vmatpush1.msra.mxu0 0.0
  %1106 = vmatprep.subr.mxu0 0.0
  %1107 = vmatpush1.msra.mxu0 0.0
  %1108 = vmatprep.subr.mxu0 0.0
  %1109 = vmatpush1.msra.mxu0 0.0
  %1110 = vmatprep.subr.mxu0 0.0
  %1111 = vmatpush1.msra.mxu0 0.0
  %1112 = vmatprep.subr.mxu0 0.0
  %1113 = vmatpush1.msra.mxu0 0.0
  %1114 = vmatprep.subr.mxu0 0.0
  %1115 = vmatpush1.msra.mxu0 0.0
  %1116 = vmatprep.subr.mxu0 0.0
  %1117 = vmatpush1.msra.mxu0 0.0
  %1118 = vmatprep.subr.mxu0 0.0
  %1119 = vmatpush1.msra.mxu0 0.0
  %1120 = vmatprep.subr.mxu0 0.0
  %1121 = vmatpush1.msra.mxu0 0.0
  %1122 = vmatprep.mubr.f32.mxu0 0.0
  %1123 = vmatmul.mubr.f32.gmra.mrb[0].mxu0 %v1056
  %v1124 = vpop.f32.mrb[0].mxu0
  %v1125 = vadd.f32 0.0, %v1124
  %v1126 = vpop.f32.mrb[0].mxu0
  %v1127 = vadd.f32 0.0, %v1126
  %1128 = vdwg.mxu0
  %v1129 = vadd.f32 %v1049, %v1125
  %v1130 = vxor.u32 %v1129, 2147483648
  %v1131 = vmul.f32 %v1130, 1.442695
  %v1132 = vpow.pop %v1131
  %v1133 = vadd.f32 %v1132, 1.0
  %v1134 = vrcp.pop %v1133
  %v1135 = vmul.f32 1.0, %v1134
  %v1136 = vadd.f32 %v1127, %v70
  %v1137 = vmul.f32 %v1135, %v1136
  %v1138 = vadd.f32 %v1051, %v1137
  %v1139 = vtanh.pop %v1138
  %v1140 = vsub.f32 1.0, %v1135
  %1142 = vrot.lane.b32.xlu0 %v1139, 64
  %v1143 = vpop.permute.xlu0 %1142
  %v1145 = vmul.f32 %v1140, %v1143
  %v1146 = vmul.f32 %v1135, %v970
  %v1147 = vadd.f32 %v1145, %v1146
  %1148 = vset.pattern.permute.xlu0 18
  %1149 = vperm.xlu0 %1148, %v20
  %v1150 = vpop.permute.xlu0 %1149
  %vm1151 = vcmp.eq.s32.totalorder %v73, %v1150
  %1152 = vset.pattern.permute.xlu0 13
  %1153 = vperm.xlu0 %1152, %v87
  %v1154 = vpop.permute.xlu0 %1153
  %vm1155 = vcmp.eq.s32.totalorder %v73, %v1154
  %vm1156 = vmor %vm1151, %vm1155
  %v1157 = vsel %vm1156, 1, 0
  %v1158 = vcvt.s32.f32 %v1157
  %1159 = vmatprep.subr.mxu0 %v23
  %1160 = vmatpush1.msra.mxu0 %v22
  %1161 = vmatprep.subr.mxu0 %v25
  %1162 = vmatpush1.msra.mxu0 %v24
  %1163 = vmatprep.subr.mxu0 %v27
  %1164 = vmatpush1.msra.mxu0 %v26
  %1165 = vmatprep.subr.mxu0 %v29
  %1166 = vmatpush1.msra.mxu0 %v28
  %1167 = vmatprep.subr.mxu0 %v31
  %1168 = vmatpush1.msra.mxu0 %v30
  %1169 = vmatprep.subr.mxu0 %v33
  %1170 = vmatpush1.msra.mxu0 %v32
  %1171 = vmatprep.subr.mxu0 %v35
  %1172 = vmatpush1.msra.mxu0 %v34
  %1173 = vmatprep.subr.mxu0 %v37
  %1174 = vmatpush1.msra.mxu0 %v36
  %1175 = vmatprep.subr.mxu0 %v39
  %1176 = vmatpush1.msra.mxu0 %v38
  %1177 = vmatprep.subr.mxu0 %v41
  %1178 = vmatpush1.msra.mxu0 %v40
  %1179 = vmatprep.subr.mxu0 %v43
  %1180 = vmatpush1.msra.mxu0 %v42
  %1181 = vmatprep.subr.mxu0 %v45
  %1182 = vmatpush1.msra.mxu0 %v44
  %1183 = vmatprep.subr.mxu0 %v47
  %1184 = vmatpush1.msra.mxu0 %v46
  %1185 = vmatprep.subr.mxu0 %v49
  %1186 = vmatpush1.msra.mxu0 %v48
  %1187 = vmatprep.subr.mxu0 %v51
  %1188 = vmatpush1.msra.mxu0 %v50
  %1189 = vmatprep.subr.mxu0 %v53
  %1190 = vmatpush1.msra.mxu0 %v52
  %1191 = vmatprep.subr.mxu0 0.0
  %1192 = vmatpush1.msra.mxu0 0.0
  %1193 = vmatprep.subr.mxu0 0.0
  %1194 = vmatpush1.msra.mxu0 0.0
  %1195 = vmatprep.subr.mxu0 0.0
  %1196 = vmatpush1.msra.mxu0 0.0
  %1197 = vmatprep.subr.mxu0 0.0
  %1198 = vmatpush1.msra.mxu0 0.0
  %1199 = vmatprep.subr.mxu0 0.0
  %1200 = vmatpush1.msra.mxu0 0.0
  %1201 = vmatprep.subr.mxu0 0.0
  %1202 = vmatpush1.msra.mxu0 0.0
  %1203 = vmatprep.subr.mxu0 0.0
  %1204 = vmatpush1.msra.mxu0 0.0
  %1205 = vmatprep.subr.mxu0 0.0
  %1206 = vmatpush1.msra.mxu0 0.0
  %1207 = vmatprep.subr.mxu0 0.0
  %1208 = vmatpush1.msra.mxu0 0.0
  %1209 = vmatprep.subr.mxu0 0.0
  %1210 = vmatpush1.msra.mxu0 0.0
  %1211 = vmatprep.subr.mxu0 0.0
  %1212 = vmatpush1.msra.mxu0 0.0
  %1213 = vmatprep.subr.mxu0 0.0
  %1214 = vmatpush1.msra.mxu0 0.0
  %1215 = vmatprep.subr.mxu0 0.0
  %1216 = vmatpush1.msra.mxu0 0.0
  %1217 = vmatprep.subr.mxu0 0.0
  %1218 = vmatpush1.msra.mxu0 0.0
  %1219 = vmatprep.subr.mxu0 0.0
  %1220 = vmatpush1.msra.mxu0 0.0
  %1221 = vmatprep.subr.mxu0 0.0
  %1222 = vmatpush1.msra.mxu0 0.0
  %1223 = vmatprep.mubr.f32.mxu0 0.0
  %1224 = vmatmul.mubr.f32.gmra.mrb[0].mxu0 %v1158
  %v1225 = vpop.f32.mrb[0].mxu0
  %v1226 = vadd.f32 0.0, %v1225
  %v1227 = vpop.f32.mrb[0].mxu0
  %v1228 = vadd.f32 0.0, %v1227
  %1229 = vdwg.mxu0
  %1231 = vrot.lane.b32.xlu0 %v1147, 64
  %v1232 = vpop.permute.xlu0 %1231
  %v1233 = vsel %vm166, %v1232, 0
  %1235 = vmatprep.subr.mxu0 %v55
  %1236 = vmatpush1.msra.mxu0 %v54
  %1237 = vmatprep.subr.mxu0 %v57
  %1238 = vmatpush1.msra.mxu0 %v56
  %1239 = vmatprep.subr.mxu0 %v59
  %1240 = vmatpush1.msra.mxu0 %v58
  %1241 = vmatprep.subr.mxu0 %v61
  %1242 = vmatpush1.msra.mxu0 %v60
  %1243 = vmatprep.subr.mxu0 %v63
  %1244 = vmatpush1.msra.mxu0 %v62
  %1245 = vmatprep.subr.mxu0 %v65
  %1246 = vmatpush1.msra.mxu0 %v64
  %1247 = vmatprep.subr.mxu0 %v67
  %1248 = vmatpush1.msra.mxu0 %v66
  %1249 = vmatprep.subr.mxu0 %v69
  %1250 = vmatpush1.msra.mxu0 %v68
  %1251 = vmatprep.subr.mxu0 0.0
  %1252 = vmatpush1.msra.mxu0 0.0
  %1253 = vmatprep.subr.mxu0 0.0
  %1254 = vmatpush1.msra.mxu0 0.0
  %1255 = vmatprep.subr.mxu0 0.0
  %1256 = vmatpush1.msra.mxu0 0.0
  %1257 = vmatprep.subr.mxu0 0.0
  %1258 = vmatpush1.msra.mxu0 0.0
  %1259 = vmatprep.subr.mxu0 0.0
  %1260 = vmatpush1.msra.mxu0 0.0
  %1261 = vmatprep.subr.mxu0 0.0
  %1262 = vmatpush1.msra.mxu0 0.0
  %1263 = vmatprep.subr.mxu0 0.0
  %1264 = vmatpush1.msra.mxu0 0.0
  %1265 = vmatprep.subr.mxu0 0.0
  %1266 = vmatpush1.msra.mxu0 0.0
  %1267 = vmatprep.subr.mxu0 0.0
  %1268 = vmatpush1.msra.mxu0 0.0
  %1269 = vmatprep.subr.mxu0 0.0
  %1270 = vmatpush1.msra.mxu0 0.0
  %1271 = vmatprep.subr.mxu0 0.0
  %1272 = vmatpush1.msra.mxu0 0.0
  %1273 = vmatprep.subr.mxu0 0.0
  %1274 = vmatpush1.msra.mxu0 0.0
  %1275 = vmatprep.subr.mxu0 0.0
  %1276 = vmatpush1.msra.mxu0 0.0
  %1277 = vmatprep.subr.mxu0 0.0
  %1278 = vmatpush1.msra.mxu0 0.0
  %1279 = vmatprep.subr.mxu0 0.0
  %1280 = vmatpush1.msra.mxu0 0.0
  %1281 = vmatprep.subr.mxu0 0.0
  %1282 = vmatpush1.msra.mxu0 0.0
  %1283 = vmatprep.subr.mxu0 0.0
  %1284 = vmatpush1.msra.mxu0 0.0
  %1285 = vmatprep.subr.mxu0 0.0
  %1286 = vmatpush1.msra.mxu0 0.0
  %1287 = vmatprep.subr.mxu0 0.0
  %1288 = vmatpush1.msra.mxu0 0.0
  %1289 = vmatprep.subr.mxu0 0.0
  %1290 = vmatpush1.msra.mxu0 0.0
  %1291 = vmatprep.subr.mxu0 0.0
  %1292 = vmatpush1.msra.mxu0 0.0
  %1293 = vmatprep.subr.mxu0 0.0
  %1294 = vmatpush1.msra.mxu0 0.0
  %1295 = vmatprep.subr.mxu0 0.0
  %1296 = vmatpush1.msra.mxu0 0.0
  %1297 = vmatprep.subr.mxu0 0.0
  %1298 = vmatpush1.msra.mxu0 0.0
  %1299 = vmatprep.mubr.f32.mxu0 0.0
  %1300 = vmatmul.mubr.f32.gmra.mrb[0].mxu0 %v1233
  %v1301 = vpop.f32.mrb[0].mxu0
  %v1302 = vadd.f32 0.0, %v1301
  %v1303 = vpop.f32.mrb[0].mxu0
  %v1304 = vadd.f32 0.0, %v1303
  %1305 = vdwg.mxu0
  %v1306 = vadd.f32 %v1226, %v1302
  %v1307 = vxor.u32 %v1306, 2147483648
  %v1308 = vmul.f32 %v1307, 1.442695
  %v1309 = vpow.pop %v1308
  %v1310 = vadd.f32 %v1309, 1.0
  %v1311 = vrcp.pop %v1310
  %v1312 = vmul.f32 1.0, %v1311
  %v1313 = vadd.f32 %v1304, %v70
  %v1314 = vmul.f32 %v1312, %v1313
  %v1315 = vadd.f32 %v1228, %v1314
  %v1316 = vtanh.pop %v1315
  %v1317 = vsub.f32 1.0, %v1312
  %1319 = vrot.lane.b32.xlu0 %v1316, 64
  %v1320 = vpop.permute.xlu0 %1319
  %v1322 = vmul.f32 %v1317, %v1320
  %v1323 = vmul.f32 %v1312, %v1147
  %v1324 = vadd.f32 %v1322, %v1323
  %1325 = vset.pattern.permute.xlu0 19
  %1326 = vperm.xlu0 %1325, %v20
  %v1327 = vpop.permute.xlu0 %1326
  %vm1328 = vcmp.eq.s32.totalorder %v73, %v1327
  %1329 = vset.pattern.permute.xlu0 12
  %1330 = vperm.xlu0 %1329, %v87
  %v1331 = vpop.permute.xlu0 %1330
  %vm1332 = vcmp.eq.s32.totalorder %v73, %v1331
  %vm1333 = vmor %vm1328, %vm1332
  %v1334 = vsel %vm1333, 1, 0
  %v1335 = vcvt.s32.f32 %v1334
  %1336 = vmatprep.subr.mxu0 %v23
  %1337 = vmatpush1.msra.mxu0 %v22
  %1338 = vmatprep.subr.mxu0 %v25
  %1339 = vmatpush1.msra.mxu0 %v24
  %1340 = vmatprep.subr.mxu0 %v27
  %1341 = vmatpush1.msra.mxu0 %v26
  %1342 = vmatprep.subr.mxu0 %v29
  %1343 = vmatpush1.msra.mxu0 %v28
  %1344 = vmatprep.subr.mxu0 %v31
  %1345 = vmatpush1.msra.mxu0 %v30
  %1346 = vmatprep.subr.mxu0 %v33
  %1347 = vmatpush1.msra.mxu0 %v32
  %1348 = vmatprep.subr.mxu0 %v35
  %1349 = vmatpush1.msra.mxu0 %v34
  %1350 = vmatprep.subr.mxu0 %v37
  %1351 = vmatpush1.msra.mxu0 %v36
  %1352 = vmatprep.subr.mxu0 %v39
  %1353 = vmatpush1.msra.mxu0 %v38
  %1354 = vmatprep.subr.mxu0 %v41
  %1355 = vmatpush1.msra.mxu0 %v40
  %1356 = vmatprep.subr.mxu0 %v43
  %1357 = vmatpush1.msra.mxu0 %v42
  %1358 = vmatprep.subr.mxu0 %v45
  %1359 = vmatpush1.msra.mxu0 %v44
  %1360 = vmatprep.subr.mxu0 %v47
  %1361 = vmatpush1.msra.mxu0 %v46
  %1362 = vmatprep.subr.mxu0 %v49
  %1363 = vmatpush1.msra.mxu0 %v48
  %1364 = vmatprep.subr.mxu0 %v51
  %1365 = vmatpush1.msra.mxu0 %v50
  %1366 = vmatprep.subr.mxu0 %v53
  %1367 = vmatpush1.msra.mxu0 %v52
  %1368 = vmatprep.subr.mxu0 0.0
  %1369 = vmatpush1.msra.mxu0 0.0
  %1370 = vmatprep.subr.mxu0 0.0
  %1371 = vmatpush1.msra.mxu0 0.0
  %1372 = vmatprep.subr.mxu0 0.0
  %1373 = vmatpush1.msra.mxu0 0.0
  %1374 = vmatprep.subr.mxu0 0.0
  %1375 = vmatpush1.msra.mxu0 0.0
  %1376 = vmatprep.subr.mxu0 0.0
  %1377 = vmatpush1.msra.mxu0 0.0
  %1378 = vmatprep.subr.mxu0 0.0
  %1379 = vmatpush1.msra.mxu0 0.0
  %1380 = vmatprep.subr.mxu0 0.0
  %1381 = vmatpush1.msra.mxu0 0.0
  %1382 = vmatprep.subr.mxu0 0.0
  %1383 = vmatpush1.msra.mxu0 0.0
  %1384 = vmatprep.subr.mxu0 0.0
  %1385 = vmatpush1.msra.mxu0 0.0
  %1386 = vmatprep.subr.mxu0 0.0
  %1387 = vmatpush1.msra.mxu0 0.0
  %1388 = vmatprep.subr.mxu0 0.0
  %1389 = vmatpush1.msra.mxu0 0.0
  %1390 = vmatprep.subr.mxu0 0.0
  %1391 = vmatpush1.msra.mxu0 0.0
  %1392 = vmatprep.subr.mxu0 0.0
  %1393 = vmatpush1.msra.mxu0 0.0
  %1394 = vmatprep.subr.mxu0 0.0
  %1395 = vmatpush1.msra.mxu0 0.0
  %1396 = vmatprep.subr.mxu0 0.0
  %1397 = vmatpush1.msra.mxu0 0.0
  %1398 = vmatprep.subr.mxu0 0.0
  %1399 = vmatpush1.msra.mxu0 0.0
  %1400 = vmatprep.mubr.f32.mxu0 0.0
  %1401 = vmatmul.mubr.f32.gmra.mrb[0].mxu0 %v1335
  %v1402 = vpop.f32.mrb[0].mxu0
  %v1403 = vadd.f32 0.0, %v1402
  %v1404 = vpop.f32.mrb[0].mxu0
  %v1405 = vadd.f32 0.0, %v1404
  %1406 = vdwg.mxu0
  %1408 = vrot.lane.b32.xlu0 %v1324, 64
  %v1409 = vpop.permute.xlu0 %1408
  %v1410 = vsel %vm166, %v1409, 0
  %1412 = vmatprep.subr.mxu0 %v55
  %1413 = vmatpush1.msra.mxu0 %v54
  %1414 = vmatprep.subr.mxu0 %v57
  %1415 = vmatpush1.msra.mxu0 %v56
  %1416 = vmatprep.subr.mxu0 %v59
  %1417 = vmatpush1.msra.mxu0 %v58
  %1418 = vmatprep.subr.mxu0 %v61
  %1419 = vmatpush1.msra.mxu0 %v60
  %1420 = vmatprep.subr.mxu0 %v63
  %1421 = vmatpush1.msra.mxu0 %v62
  %1422 = vmatprep.subr.mxu0 %v65
  %1423 = vmatpush1.msra.mxu0 %v64
  %1424 = vmatprep.subr.mxu0 %v67
  %1425 = vmatpush1.msra.mxu0 %v66
  %1426 = vmatprep.subr.mxu0 %v69
  %1427 = vmatpush1.msra.mxu0 %v68
  %1428 = vmatprep.subr.mxu0 0.0
  %1429 = vmatpush1.msra.mxu0 0.0
  %1430 = vmatprep.subr.mxu0 0.0
  %1431 = vmatpush1.msra.mxu0 0.0
  %1432 = vmatprep.subr.mxu0 0.0
  %1433 = vmatpush1.msra.mxu0 0.0
  %1434 = vmatprep.subr.mxu0 0.0
  %1435 = vmatpush1.msra.mxu0 0.0
  %1436 = vmatprep.subr.mxu0 0.0
  %1437 = vmatpush1.msra.mxu0 0.0
  %1438 = vmatprep.subr.mxu0 0.0
  %1439 = vmatpush1.msra.mxu0 0.0
  %1440 = vmatprep.subr.mxu0 0.0
  %1441 = vmatpush1.msra.mxu0 0.0
  %1442 = vmatprep.subr.mxu0 0.0
  %1443 = vmatpush1.msra.mxu0 0.0
  %1444 = vmatprep.subr.mxu0 0.0
  %1445 = vmatpush1.msra.mxu0 0.0
  %1446 = vmatprep.subr.mxu0 0.0
  %1447 = vmatpush1.msra.mxu0 0.0
  %1448 = vmatprep.subr.mxu0 0.0
  %1449 = vmatpush1.msra.mxu0 0.0
  %1450 = vmatprep.subr.mxu0 0.0
  %1451 = vmatpush1.msra.mxu0 0.0
  %1452 = vmatprep.subr.mxu0 0.0
  %1453 = vmatpush1.msra.mxu0 0.0
  %1454 = vmatprep.subr.mxu0 0.0
  %1455 = vmatpush1.msra.mxu0 0.0
  %1456 = vmatprep.subr.mxu0 0.0
  %1457 = vmatpush1.msra.mxu0 0.0
  %1458 = vmatprep.subr.mxu0 0.0
  %1459 = vmatpush1.msra.mxu0 0.0
  %1460 = vmatprep.subr.mxu0 0.0
  %1461 = vmatpush1.msra.mxu0 0.0
  %1462 = vmatprep.subr.mxu0 0.0
  %1463 = vmatpush1.msra.mxu0 0.0
  %1464 = vmatprep.subr.mxu0 0.0
  %1465 = vmatpush1.msra.mxu0 0.0
  %1466 = vmatprep.subr.mxu0 0.0
  %1467 = vmatpush1.msra.mxu0 0.0
  %1468 = vmatprep.subr.mxu0 0.0
  %1469 = vmatpush1.msra.mxu0 0.0
  %1470 = vmatprep.subr.mxu0 0.0
  %1471 = vmatpush1.msra.mxu0 0.0
  %1472 = vmatprep.subr.mxu0 0.0
  %1473 = vmatpush1.msra.mxu0 0.0
  %1474 = vmatprep.subr.mxu0 0.0
  %1475 = vmatpush1.msra.mxu0 0.0
  %1476 = vmatprep.mubr.f32.mxu0 0.0
  %1477 = vmatmul.mubr.f32.gmra.mrb[0].mxu0 %v1410
  %v1478 = vpop.f32.mrb[0].mxu0
  %v1479 = vadd.f32 0.0, %v1478
  %v1480 = vpop.f32.mrb[0].mxu0
  %v1481 = vadd.f32 0.0, %v1480
  %1482 = vdwg.mxu0
  %v1483 = vadd.f32 %v1403, %v1479
  %v1484 = vxor.u32 %v1483, 2147483648
  %v1485 = vmul.f32 %v1484, 1.442695
  %v1486 = vpow.pop %v1485
  %v1487 = vadd.f32 %v1486, 1.0
  %v1488 = vrcp.pop %v1487
  %v1489 = vmul.f32 1.0, %v1488
  %v1490 = vadd.f32 %v1481, %v70
  %v1491 = vmul.f32 %v1489, %v1490
  %v1492 = vadd.f32 %v1405, %v1491
  %v1493 = vtanh.pop %v1492
  %v1494 = vsub.f32 1.0, %v1489
  %1496 = vrot.lane.b32.xlu0 %v1493, 64
  %v1497 = vpop.permute.xlu0 %1496
  %v1499 = vmul.f32 %v1494, %v1497
  %v1500 = vmul.f32 %v1489, %v1324
  %v1501 = vadd.f32 %v1499, %v1500
  %1503 = vrot.lane.b32.xlu0 %v71, 64
  %v1504 = vpop.permute.xlu0 %1503
  %v1506 = vmul.f32 %v262, %v1504
  %1508 = vrot.lane.b32.xlu0 %v1506, 64
  %v1509 = vpop.permute.xlu0 %1508
  %v1511 = vsel %vm81, %v1509, 0.0
  %1512 = vadd.xlane.f32.xlu0 %v1511
  %v1513 = vpop.xlane.xlu0 %1512
  %v1514 = vmul.f32 %v439, %v1504
  %1516 = vrot.lane.b32.xlu0 %v1514, 64
  %v1517 = vpop.permute.xlu0 %1516
  %v1519 = vsel %vm81, %v1517, 0.0
  %1520 = vadd.xlane.f32.xlu0 %v1519
  %v1521 = vpop.xlane.xlu0 %1520
  %v1522 = vmul.f32 %v616, %v1504
  %1524 = vrot.lane.b32.xlu0 %v1522, 64
  %v1525 = vpop.permute.xlu0 %1524
  %v1527 = vsel %vm81, %v1525, 0.0
  %1528 = vadd.xlane.f32.xlu0 %v1527
  %v1529 = vpop.xlane.xlu0 %1528
  %v1530 = vmul.f32 %v793, %v1504
  %1532 = vrot.lane.b32.xlu0 %v1530, 64
  %v1533 = vpop.permute.xlu0 %1532
  %v1535 = vsel %vm81, %v1533, 0.0
  %1536 = vadd.xlane.f32.xlu0 %v1535
  %v1537 = vpop.xlane.xlu0 %1536
  %v1538 = vmul.f32 %v970, %v1504
  %1540 = vrot.lane.b32.xlu0 %v1538, 64
  %v1541 = vpop.permute.xlu0 %1540
  %v1543 = vsel %vm81, %v1541, 0.0
  %1544 = vadd.xlane.f32.xlu0 %v1543
  %v1545 = vpop.xlane.xlu0 %1544
  %v1546 = vmul.f32 %v1147, %v1504
  %1548 = vrot.lane.b32.xlu0 %v1546, 64
  %v1549 = vpop.permute.xlu0 %1548
  %v1551 = vsel %vm81, %v1549, 0.0
  %1552 = vadd.xlane.f32.xlu0 %v1551
  %v1553 = vpop.xlane.xlu0 %1552
  %v1554 = vmul.f32 %v1324, %v1504
  %1556 = vrot.lane.b32.xlu0 %v1554, 64
  %v1557 = vpop.permute.xlu0 %1556
  %v1559 = vsel %vm81, %v1557, 0.0
  %1560 = vadd.xlane.f32.xlu0 %v1559
  %v1561 = vpop.xlane.xlu0 %1560
  %v1562 = vmul.f32 %v1501, %v1504
  %1564 = vrot.lane.b32.xlu0 %v1562, 64
  %v1565 = vpop.permute.xlu0 %1564
  %v1567 = vsel %vm81, %v1565, 0.0
  %1568 = vadd.xlane.f32.xlu0 %v1567
  %v1569 = vpop.xlane.xlu0 %1568
  %1570 = vrot.lane.b32.xlu0 %v1506, 32
  %v1571 = vpop.permute.xlu0 %1570
  %v1573 = vsel %vm81, %v1571, 0.0
  %1574 = vadd.xlane.f32.xlu0 %v1573
  %v1575 = vpop.xlane.xlu0 %1574
  %1576 = vrot.lane.b32.xlu0 %v1514, 32
  %v1577 = vpop.permute.xlu0 %1576
  %v1579 = vsel %vm81, %v1577, 0.0
  %1580 = vadd.xlane.f32.xlu0 %v1579
  %v1581 = vpop.xlane.xlu0 %1580
  %1582 = vrot.lane.b32.xlu0 %v1522, 32
  %v1583 = vpop.permute.xlu0 %1582
  %v1585 = vsel %vm81, %v1583, 0.0
  %1586 = vadd.xlane.f32.xlu0 %v1585
  %v1587 = vpop.xlane.xlu0 %1586
  %1588 = vrot.lane.b32.xlu0 %v1530, 32
  %v1589 = vpop.permute.xlu0 %1588
  %v1591 = vsel %vm81, %v1589, 0.0
  %1592 = vadd.xlane.f32.xlu0 %v1591
  %v1593 = vpop.xlane.xlu0 %1592
  %1594 = vrot.lane.b32.xlu0 %v1538, 32
  %v1595 = vpop.permute.xlu0 %1594
  %v1597 = vsel %vm81, %v1595, 0.0
  %1598 = vadd.xlane.f32.xlu0 %v1597
  %v1599 = vpop.xlane.xlu0 %1598
  %1600 = vrot.lane.b32.xlu0 %v1546, 32
  %v1601 = vpop.permute.xlu0 %1600
  %v1603 = vsel %vm81, %v1601, 0.0
  %1604 = vadd.xlane.f32.xlu0 %v1603
  %v1605 = vpop.xlane.xlu0 %1604
  %1606 = vrot.lane.b32.xlu0 %v1554, 32
  %v1607 = vpop.permute.xlu0 %1606
  %v1609 = vsel %vm81, %v1607, 0.0
  %1610 = vadd.xlane.f32.xlu0 %v1609
  %v1611 = vpop.xlane.xlu0 %1610
  %1612 = vrot.lane.b32.xlu0 %v1562, 32
  %v1613 = vpop.permute.xlu0 %1612
  %v1615 = vsel %vm81, %v1613, 0.0
  %1616 = vadd.xlane.f32.xlu0 %v1615
  %v1617 = vpop.xlane.xlu0 %1616
  %v1618 = vadd.f32 %v1513, %v1617
  %v1619 = vtanh.pop %v1618
  %v1620 = vadd.f32 %v1521, %v1611
  %v1621 = vtanh.pop %v1620
  %v1622 = vadd.f32 %v1529, %v1605
  %v1623 = vtanh.pop %v1622
  %v1624 = vadd.f32 %v1537, %v1599
  %v1625 = vtanh.pop %v1624
  %v1626 = vadd.f32 %v1545, %v1593
  %v1627 = vtanh.pop %v1626
  %v1628 = vadd.f32 %v1553, %v1587
  %v1629 = vtanh.pop %v1628
  %v1630 = vadd.f32 %v1561, %v1581
  %v1631 = vtanh.pop %v1630
  %v1632 = vadd.f32 %v1569, %v1575
  %v1633 = vtanh.pop %v1632
  %v1634 = vmax.f32 %v1619, %v1621
  %v1635 = vmax.f32 %v1634, %v1623
  %v1636 = vmax.f32 %v1635, %v1625
  %v1637 = vmax.f32 %v1636, %v1627
  %v1638 = vmax.f32 %v1637, %v1629
  %v1639 = vmax.f32 %v1638, %v1631
  %v1640 = vmax.f32 %v1639, %v1633
  %v1641 = vsub.f32 %v1619, %v1640
  %v1642 = vmul.f32 %v1641, 1.442695
  %v1643 = vpow.pop %v1642
  %vm1644 = vcmp.ge.f32.partialorder %v21, 8.0
  %v1645 = vsel %vm1644, 1, 0
  %v1646 = vcvt.s32.f32 %v1645
  %v1647 = vmul.f32 %v1643, %v1646
  %v1648 = vsub.f32 %v1621, %v1640
  %v1649 = vmul.f32 %v1648, 1.442695
  %v1650 = vpow.pop %v1649
  %vm1651 = vcmp.ge.f32.partialorder %v21, 7.0
  %v1652 = vsel %vm1651, 1, 0
  %v1653 = vcvt.s32.f32 %v1652
  %v1654 = vmul.f32 %v1650, %v1653
  %v1655 = vsub.f32 %v1623, %v1640
  %v1656 = vmul.f32 %v1655, 1.442695
  %v1657 = vpow.pop %v1656
  %vm1658 = vcmp.ge.f32.partialorder %v21, 6.0
  %v1659 = vsel %vm1658, 1, 0
  %v1660 = vcvt.s32.f32 %v1659
  %v1661 = vmul.f32 %v1657, %v1660
  %v1662 = vsub.f32 %v1625, %v1640
  %v1663 = vmul.f32 %v1662, 1.442695
  %v1664 = vpow.pop %v1663
  %vm1665 = vcmp.ge.f32.partialorder %v21, 5.0
  %v1666 = vsel %vm1665, 1, 0
  %v1667 = vcvt.s32.f32 %v1666
  %v1668 = vmul.f32 %v1664, %v1667
  %v1669 = vsub.f32 %v1627, %v1640
  %v1670 = vmul.f32 %v1669, 1.442695
  %v1671 = vpow.pop %v1670
  %vm1672 = vcmp.ge.f32.partialorder %v21, 4.0
  %v1673 = vsel %vm1672, 1, 0
  %v1674 = vcvt.s32.f32 %v1673
  %v1675 = vmul.f32 %v1671, %v1674
  %v1676 = vsub.f32 %v1629, %v1640
  %v1677 = vmul.f32 %v1676, 1.442695
  %v1678 = vpow.pop %v1677
  %vm1679 = vcmp.ge.f32.partialorder %v21, 3.0
  %v1680 = vsel %vm1679, 1, 0
  %v1681 = vcvt.s32.f32 %v1680
  %v1682 = vmul.f32 %v1678, %v1681
  %v1683 = vsub.f32 %v1631, %v1640
  %v1684 = vmul.f32 %v1683, 1.442695
  %v1685 = vpow.pop %v1684
  %vm1686 = vcmp.ge.f32.partialorder %v21, 2.0
  %v1687 = vsel %vm1686, 1, 0
  %v1688 = vcvt.s32.f32 %v1687
  %v1689 = vmul.f32 %v1685, %v1688
  %v1690 = vsub.f32 %v1633, %v1640
  %v1691 = vmul.f32 %v1690, 1.442695
  %v1692 = vpow.pop %v1691
  %vm1693 = vcmp.ge.f32.partialorder %v21, 1.0
  %v1694 = vsel %vm1693, 1, 0
  %v1695 = vcvt.s32.f32 %v1694
  %v1696 = vmul.f32 %v1692, %v1695
  %v1697 = vadd.f32 %v1647, %v1654
  %v1698 = vadd.f32 %v1697, %v1661
  %v1699 = vadd.f32 %v1698, %v1668
  %v1700 = vadd.f32 %v1699, %v1675
  %v1701 = vadd.f32 %v1700, %v1682
  %v1702 = vadd.f32 %v1701, %v1689
  %v1703 = vadd.f32 %v1702, %v1696
  %v1704 = vrcp.pop %v1703
  %v1705 = vmul.f32 %v1647, %v1704
  %v1706 = vmul.f32 %v1654, %v1704
  %v1707 = vmul.f32 %v1661, %v1704
  %v1708 = vmul.f32 %v1668, %v1704
  %v1709 = vmul.f32 %v1675, %v1704
  %v1710 = vmul.f32 %v1682, %v1704
  %v1711 = vmul.f32 %v1689, %v1704
  %v1712 = vmul.f32 %v1696, %v1704
  %1714 = vset.pattern.permute.xlu0 11
  %1715 = vperm.xlu0 %1714, %v1705
  %v1716 = vpop.permute.xlu0 %1715
  %v1718 = vmul.f32 %v1716, %v262
  %1720 = vset.pattern.permute.xlu0 11
  %1721 = vperm.xlu0 %1720, %v1712
  %v1722 = vpop.permute.xlu0 %1721
  %v1724 = vmul.f32 %v1722, %v262
  %1726 = vset.pattern.permute.xlu0 11
  %1727 = vperm.xlu0 %1726, %v1706
  %v1728 = vpop.permute.xlu0 %1727
  %v1730 = vmul.f32 %v1728, %v439
  %v1731 = vadd.f32 %v1718, %v1730
  %1733 = vset.pattern.permute.xlu0 11
  %1734 = vperm.xlu0 %1733, %v1711
  %v1735 = vpop.permute.xlu0 %1734
  %v1737 = vmul.f32 %v1735, %v439
  %v1738 = vadd.f32 %v1724, %v1737
  %1740 = vset.pattern.permute.xlu0 11
  %1741 = vperm.xlu0 %1740, %v1707
  %v1742 = vpop.permute.xlu0 %1741
  %v1744 = vmul.f32 %v1742, %v616
  %v1745 = vadd.f32 %v1731, %v1744
  %1747 = vset.pattern.permute.xlu0 11
  %1748 = vperm.xlu0 %1747, %v1710
  %v1749 = vpop.permute.xlu0 %1748
  %v1751 = vmul.f32 %v1749, %v616
  %v1752 = vadd.f32 %v1738, %v1751
  %1754 = vset.pattern.permute.xlu0 11
  %1755 = vperm.xlu0 %1754, %v1708
  %v1756 = vpop.permute.xlu0 %1755
  %v1758 = vmul.f32 %v1756, %v793
  %v1759 = vadd.f32 %v1745, %v1758
  %1761 = vset.pattern.permute.xlu0 11
  %1762 = vperm.xlu0 %1761, %v1709
  %v1763 = vpop.permute.xlu0 %1762
  %v1765 = vmul.f32 %v1763, %v793
  %v1766 = vadd.f32 %v1752, %v1765
  %v1767 = vmul.f32 %v1763, %v970
  %v1768 = vadd.f32 %v1759, %v1767
  %v1769 = vmul.f32 %v1756, %v970
  %v1770 = vadd.f32 %v1766, %v1769
  %v1771 = vmul.f32 %v1749, %v1147
  %v1772 = vadd.f32 %v1768, %v1771
  %v1773 = vmul.f32 %v1742, %v1147
  %v1774 = vadd.f32 %v1770, %v1773
  %v1775 = vmul.f32 %v1735, %v1324
  %v1776 = vadd.f32 %v1772, %v1775
  %v1777 = vmul.f32 %v1728, %v1324
  %v1778 = vadd.f32 %v1774, %v1777
  %v1779 = vmul.f32 %v1722, %v1501
  %v1780 = vadd.f32 %v1776, %v1779
  %v1781 = vmul.f32 %v1716, %v1501
  %v1782 = vadd.f32 %v1778, %v1781
  %v1783 = vld [vmem:[%s4] sm:$0xff]
  %v1784 = vld [vmem:[%s4 + $0x8] sm:$0xf]
  %v1785 = vld [vmem:[%s4 + $0x10] sm:$0x1]
  %v1786 = vlaneseq
  %v1787 = vshrl.u32 %v1786, 7
  %v1788 = vsub.s32 0, %v1787
  %v1789 = vrot.slane %v1785, %v1788
  %vm1790 = vcmask 97280
  %v1792 = vsel %vm1790, %v21, 0
  %vm1794 = vcmask 1043456
  %v1796 = vsel %vm1794, %v1784, 0
  %1798 = vmatprep.subr.mxu0 0.0
  %1799 = vmatpush1.msra.mxu0 %v1783
  %1800 = vmatprep.subr.mxu0 0.0
  %1801 = vmatpush1.msra.mxu0 %v1796
  %1802 = vmatprep.subr.mxu0 0.0
  %1803 = vmatpush1.msra.mxu0 0.0
  %1804 = vmatprep.subr.mxu0 0.0
  %1805 = vmatpush1.msra.mxu0 0.0
  %1806 = vmatprep.subr.mxu0 0.0
  %1807 = vmatpush1.msra.mxu0 0.0
  %1808 = vmatprep.subr.mxu0 0.0
  %1809 = vmatpush1.msra.mxu0 0.0
  %1810 = vmatprep.subr.mxu0 0.0
  %1811 = vmatpush1.msra.mxu0 0.0
  %1812 = vmatprep.subr.mxu0 0.0
  %1813 = vmatpush1.msra.mxu0 0.0
  %1814 = vmatprep.subr.mxu0 0.0
  %1815 = vmatpush1.msra.mxu0 0.0
  %1816 = vmatprep.subr.mxu0 0.0
  %1817 = vmatpush1.msra.mxu0 0.0
  %1818 = vmatprep.subr.mxu0 0.0
  %1819 = vmatpush1.msra.mxu0 0.0
  %1820 = vmatprep.subr.mxu0 0.0
  %1821 = vmatpush1.msra.mxu0 0.0
  %1822 = vmatprep.subr.mxu0 0.0
  %1823 = vmatpush1.msra.mxu0 0.0
  %1824 = vmatprep.subr.mxu0 0.0
  %1825 = vmatpush1.msra.mxu0 0.0
  %1826 = vmatprep.subr.mxu0 0.0
  %1827 = vmatpush1.msra.mxu0 0.0
  %1828 = vmatprep.subr.mxu0 0.0
  %1829 = vmatpush1.msra.mxu0 0.0
  %1830 = vmatprep.subr.mxu0 0.0
  %1831 = vmatpush1.msra.mxu0 0.0
  %1832 = vmatprep.subr.mxu0 0.0
  %1833 = vmatpush1.msra.mxu0 0.0
  %1834 = vmatprep.subr.mxu0 0.0
  %1835 = vmatpush1.msra.mxu0 0.0
  %1836 = vmatprep.subr.mxu0 0.0
  %1837 = vmatpush1.msra.mxu0 0.0
  %1838 = vmatprep.subr.mxu0 0.0
  %1839 = vmatpush1.msra.mxu0 0.0
  %1840 = vmatprep.subr.mxu0 0.0
  %1841 = vmatpush1.msra.mxu0 0.0
  %1842 = vmatprep.subr.mxu0 0.0
  %1843 = vmatpush1.msra.mxu0 0.0
  %1844 = vmatprep.subr.mxu0 0.0
  %1845 = vmatpush1.msra.mxu0 0.0
  %1846 = vmatprep.subr.mxu0 0.0
  %1847 = vmatpush1.msra.mxu0 0.0
  %1848 = vmatprep.subr.mxu0 0.0
  %1849 = vmatpush1.msra.mxu0 0.0
  %1850 = vmatprep.subr.mxu0 0.0
  %1851 = vmatpush1.msra.mxu0 0.0
  %1852 = vmatprep.subr.mxu0 0.0
  %1853 = vmatpush1.msra.mxu0 0.0
  %1854 = vmatprep.subr.mxu0 0.0
  %1855 = vmatpush1.msra.mxu0 0.0
  %1856 = vmatprep.subr.mxu0 0.0
  %1857 = vmatpush1.msra.mxu0 0.0
  %1858 = vmatprep.subr.mxu0 0.0
  %1859 = vmatpush1.msra.mxu0 0.0
  %1860 = vmatprep.subr.mxu0 0.0
  %1861 = vmatpush1.msra.mxu0 0.0
  %1862 = vmatprep.mubr.f32.mxu0 0.0
  %1863 = vmatmul.mubr.f32.gmra.mrb[0].mxu0 %v1792
  %v1864 = vpop.f32.mrb[0].mxu0
  %v1865 = vadd.f32 %v1789, %v1864
  %v1866 = vpop.f32.mrb[0].mxu0
  %1867 = vdwg.mxu0
  %v1868 = vmax.f32 %v1865, 0.0
  %v1869 = vld [vmem:[%s4 + $0x18] sm:$0xff]
  %v1870 = vld [vmem:[%s4 + $0x20] sm:$0xff]
  %v1871 = vld [vmem:[%s4 + $0x28] sm:$0x1]
  %v1872 = vlaneseq
  %v1873 = vshrl.u32 %v1872, 7
  %v1874 = vsub.s32 0, %v1873
  %v1875 = vrot.slane %v1871, %v1874
  %vm1876 = vcmask 130048
  %v1878 = vsel %vm1876, %v1868, 0
  %1880 = vmatprep.subr.mxu0 0.0
  %1881 = vmatpush1.msra.mxu0 %v1869
  %1882 = vmatprep.subr.mxu0 0.0
  %1883 = vmatpush1.msra.mxu0 %v1870
  %1884 = vmatprep.subr.mxu0 0.0
  %1885 = vmatpush1.msra.mxu0 0.0
  %1886 = vmatprep.subr.mxu0 0.0
  %1887 = vmatpush1.msra.mxu0 0.0
  %1888 = vmatprep.subr.mxu0 0.0
  %1889 = vmatpush1.msra.mxu0 0.0
  %1890 = vmatprep.subr.mxu0 0.0
  %1891 = vmatpush1.msra.mxu0 0.0
  %1892 = vmatprep.subr.mxu0 0.0
  %1893 = vmatpush1.msra.mxu0 0.0
  %1894 = vmatprep.subr.mxu0 0.0
  %1895 = vmatpush1.msra.mxu0 0.0
  %1896 = vmatprep.subr.mxu0 0.0
  %1897 = vmatpush1.msra.mxu0 0.0
  %1898 = vmatprep.subr.mxu0 0.0
  %1899 = vmatpush1.msra.mxu0 0.0
  %1900 = vmatprep.subr.mxu0 0.0
  %1901 = vmatpush1.msra.mxu0 0.0
  %1902 = vmatprep.subr.mxu0 0.0
  %1903 = vmatpush1.msra.mxu0 0.0
  %1904 = vmatprep.subr.mxu0 0.0
  %1905 = vmatpush1.msra.mxu0 0.0
  %1906 = vmatprep.subr.mxu0 0.0
  %1907 = vmatpush1.msra.mxu0 0.0
  %1908 = vmatprep.subr.mxu0 0.0
  %1909 = vmatpush1.msra.mxu0 0.0
  %1910 = vmatprep.subr.mxu0 0.0
  %1911 = vmatpush1.msra.mxu0 0.0
  %1912 = vmatprep.subr.mxu0 0.0
  %1913 = vmatpush1.msra.mxu0 0.0
  %1914 = vmatprep.subr.mxu0 0.0
  %1915 = vmatpush1.msra.mxu0 0.0
  %1916 = vmatprep.subr.mxu0 0.0
  %1917 = vmatpush1.msra.mxu0 0.0
  %1918 = vmatprep.subr.mxu0 0.0
  %1919 = vmatpush1.msra.mxu0 0.0
  %1920 = vmatprep.subr.mxu0 0.0
  %1921 = vmatpush1.msra.mxu0 0.0
  %1922 = vmatprep.subr.mxu0 0.0
  %1923 = vmatpush1.msra.mxu0 0.0
  %1924 = vmatprep.subr.mxu0 0.0
  %1925 = vmatpush1.msra.mxu0 0.0
  %1926 = vmatprep.subr.mxu0 0.0
  %1927 = vmatpush1.msra.mxu0 0.0
  %1928 = vmatprep.subr.mxu0 0.0
  %1929 = vmatpush1.msra.mxu0 0.0
  %1930 = vmatprep.subr.mxu0 0.0
  %1931 = vmatpush1.msra.mxu0 0.0
  %1932 = vmatprep.subr.mxu0 0.0
  %1933 = vmatpush1.msra.mxu0 0.0
  %1934 = vmatprep.subr.mxu0 0.0
  %1935 = vmatpush1.msra.mxu0 0.0
  %1936 = vmatprep.subr.mxu0 0.0
  %1937 = vmatpush1.msra.mxu0 0.0
  %1938 = vmatprep.subr.mxu0 0.0
  %1939 = vmatpush1.msra.mxu0 0.0
  %1940 = vmatprep.subr.mxu0 0.0
  %1941 = vmatpush1.msra.mxu0 0.0
  %1942 = vmatprep.subr.mxu0 0.0
  %1943 = vmatpush1.msra.mxu0 0.0
  %1944 = vmatprep.mubr.f32.mxu0 0.0
  %1945 = vmatmul.mubr.f32.gmra.mrb[0].mxu0 %v1878
  %v1946 = vpop.f32.mrb[0].mxu0
  %v1947 = vadd.f32 %v1875, %v1946
  %v1948 = vpop.f32.mrb[0].mxu0
  %1949 = vdwg.mxu0
  %v1950 = vmax.f32 %v1947, 0.0
  %1952 = vrot.lane.b32.xlu0 %v1780, 64
  %v1953 = vpop.permute.xlu0 %1952
  %1956 = vrot.lane.b32.xlu0 %v1782, 64
  %v1957 = vpop.permute.xlu0 %1956
  %1960 = vrot.lane.b32.xlu0 %v1950, 64
  %v1961 = vpop.permute.xlu0 %1960
  %v1963 = vsel %vm81, %v1953, %v1957
  %v1964 = vsel %vm166, %v1963, %v1961
  %v1965 = vld [vmem:[%s4 + $0x30] sm:$0xff]
  %v1966 = vld [vmem:[%s4 + $0x38] sm:$0xff]
  %v1967 = vld [vmem:[%s4 + $0x40] sm:$0xff]
  %v1968 = vld [vmem:[%s4 + $0x48] sm:$0xff]
  %v1969 = vld [vmem:[%s4 + $0x50] sm:$0xff]
  %v1970 = vld [vmem:[%s4 + $0x58] sm:$0xff]
  %v1971 = vld [vmem:[%s4 + $0x60] sm:$0xff]
  %v1972 = vld [vmem:[%s4 + $0x68] sm:$0xff]
  %v1973 = vld [vmem:[%s4 + $0x70] sm:$0xff]
  %v1974 = vld [vmem:[%s4 + $0x78] sm:$0x1]
  %v1975 = vlaneseq
  %v1976 = vshrl.u32 %v1975, 7
  %v1977 = vsub.s32 0, %v1976
  %v1978 = vrot.slane %v1974, %v1977
  %vm1979 = vcmask 588800
  %v1981 = vsel %vm1979, %v1964, 0
  %1983 = vmatprep.subr.mxu0 0.0
  %1984 = vmatpush1.msra.mxu0 %v1965
  %1985 = vmatprep.subr.mxu0 0.0
  %1986 = vmatpush1.msra.mxu0 %v1966
  %1987 = vmatprep.subr.mxu0 0.0
  %1988 = vmatpush1.msra.mxu0 %v1967
  %1989 = vmatprep.subr.mxu0 0.0
  %1990 = vmatpush1.msra.mxu0 %v1968
  %1991 = vmatprep.subr.mxu0 0.0
  %1992 = vmatpush1.msra.mxu0 %v1969
  %1993 = vmatprep.subr.mxu0 0.0
  %1994 = vmatpush1.msra.mxu0 %v1970
  %1995 = vmatprep.subr.mxu0 0.0
  %1996 = vmatpush1.msra.mxu0 %v1971
  %1997 = vmatprep.subr.mxu0 0.0
  %1998 = vmatpush1.msra.mxu0 %v1972
  %1999 = vmatprep.subr.mxu0 0.0
  %2000 = vmatpush1.msra.mxu0 %v1973
  %2001 = vmatprep.subr.mxu0 0.0
  %2002 = vmatpush1.msra.mxu0 0.0
  %2003 = vmatprep.subr.mxu0 0.0
  %2004 = vmatpush1.msra.mxu0 0.0
  %2005 = vmatprep.subr.mxu0 0.0
  %2006 = vmatpush1.msra.mxu0 0.0
  %2007 = vmatprep.subr.mxu0 0.0
  %2008 = vmatpush1.msra.mxu0 0.0
  %2009 = vmatprep.subr.mxu0 0.0
  %2010 = vmatpush1.msra.mxu0 0.0
  %2011 = vmatprep.subr.mxu0 0.0
  %2012 = vmatpush1.msra.mxu0 0.0
  %2013 = vmatprep.subr.mxu0 0.0
  %2014 = vmatpush1.msra.mxu0 0.0
  %2015 = vmatprep.subr.mxu0 0.0
  %2016 = vmatpush1.msra.mxu0 0.0
  %2017 = vmatprep.subr.mxu0 0.0
  %2018 = vmatpush1.msra.mxu0 0.0
  %2019 = vmatprep.subr.mxu0 0.0
  %2020 = vmatpush1.msra.mxu0 0.0
  %2021 = vmatprep.subr.mxu0 0.0
  %2022 = vmatpush1.msra.mxu0 0.0
  %2023 = vmatprep.subr.mxu0 0.0
  %2024 = vmatpush1.msra.mxu0 0.0
  %2025 = vmatprep.subr.mxu0 0.0
  %2026 = vmatpush1.msra.mxu0 0.0
  %2027 = vmatprep.subr.mxu0 0.0
  %2028 = vmatpush1.msra.mxu0 0.0
  %2029 = vmatprep.subr.mxu0 0.0
  %2030 = vmatpush1.msra.mxu0 0.0
  %2031 = vmatprep.subr.mxu0 0.0
  %2032 = vmatpush1.msra.mxu0 0.0
  %2033 = vmatprep.subr.mxu0 0.0
  %2034 = vmatpush1.msra.mxu0 0.0
  %2035 = vmatprep.subr.mxu0 0.0
  %2036 = vmatpush1.msra.mxu0 0.0
  %2037 = vmatprep.subr.mxu0 0.0
  %2038 = vmatpush1.msra.mxu0 0.0
  %2039 = vmatprep.subr.mxu0 0.0
  %2040 = vmatpush1.msra.mxu0 0.0
  %2041 = vmatprep.subr.mxu0 0.0
  %2042 = vmatpush1.msra.mxu0 0.0
  %2043 = vmatprep.subr.mxu0 0.0
  %2044 = vmatpush1.msra.mxu0 0.0
  %2045 = vmatprep.subr.mxu0 0.0
  %2046 = vmatpush1.msra.mxu0 0.0
  %2047 = vmatprep.mubr.f32.mxu0 0.0
  %2048 = vmatmul.mubr.f32.gmra.mrb[0].mxu0 %v1981
  %v2049 = vpop.f32.mrb[0].mxu0
  %v2050 = vadd.f32 %v1978, %v2049
  %v2051 = vpop.f32.mrb[0].mxu0
  %2052 = vdwg.mxu0
  %v2053 = vmax.f32 %v2050, 0.0
  %v2054 = vld [vmem:[%s4 + $0x80] sm:$0xff]
  %v2055 = vld [vmem:[%s4 + $0x88] sm:$0xff]
  %v2056 = vld [vmem:[%s4 + $0x90] sm:$0x1]
  %v2057 = vlaneseq
  %v2058 = vshrl.u32 %v2057, 7
  %v2059 = vsub.s32 0, %v2058
  %v2060 = vrot.slane %v2056, %v2059
  %v2062 = vsel %vm1876, %v2053, 0
  %2064 = vmatprep.subr.mxu0 0.0
  %2065 = vmatpush1.msra.mxu0 %v2054
  %2066 = vmatprep.subr.mxu0 0.0
  %2067 = vmatpush1.msra.mxu0 %v2055
  %2068 = vmatprep.subr.mxu0 0.0
  %2069 = vmatpush1.msra.mxu0 0.0
  %2070 = vmatprep.subr.mxu0 0.0
  %2071 = vmatpush1.msra.mxu0 0.0
  %2072 = vmatprep.subr.mxu0 0.0
  %2073 = vmatpush1.msra.mxu0 0.0
  %2074 = vmatprep.subr.mxu0 0.0
  %2075 = vmatpush1.msra.mxu0 0.0
  %2076 = vmatprep.subr.mxu0 0.0
  %2077 = vmatpush1.msra.mxu0 0.0
  %2078 = vmatprep.subr.mxu0 0.0
  %2079 = vmatpush1.msra.mxu0 0.0
  %2080 = vmatprep.subr.mxu0 0.0
  %2081 = vmatpush1.msra.mxu0 0.0
  %2082 = vmatprep.subr.mxu0 0.0
  %2083 = vmatpush1.msra.mxu0 0.0
  %2084 = vmatprep.subr.mxu0 0.0
  %2085 = vmatpush1.msra.mxu0 0.0
  %2086 = vmatprep.subr.mxu0 0.0
  %2087 = vmatpush1.msra.mxu0 0.0
  %2088 = vmatprep.subr.mxu0 0.0
  %2089 = vmatpush1.msra.mxu0 0.0
  %2090 = vmatprep.subr.mxu0 0.0
  %2091 = vmatpush1.msra.mxu0 0.0
  %2092 = vmatprep.subr.mxu0 0.0
  %2093 = vmatpush1.msra.mxu0 0.0
  %2094 = vmatprep.subr.mxu0 0.0
  %2095 = vmatpush1.msra.mxu0 0.0
  %2096 = vmatprep.subr.mxu0 0.0
  %2097 = vmatpush1.msra.mxu0 0.0
  %2098 = vmatprep.subr.mxu0 0.0
  %2099 = vmatpush1.msra.mxu0 0.0
  %2100 = vmatprep.subr.mxu0 0.0
  %2101 = vmatpush1.msra.mxu0 0.0
  %2102 = vmatprep.subr.mxu0 0.0
  %2103 = vmatpush1.msra.mxu0 0.0
  %2104 = vmatprep.subr.mxu0 0.0
  %2105 = vmatpush1.msra.mxu0 0.0
  %2106 = vmatprep.subr.mxu0 0.0
  %2107 = vmatpush1.msra.mxu0 0.0
  %2108 = vmatprep.subr.mxu0 0.0
  %2109 = vmatpush1.msra.mxu0 0.0
  %2110 = vmatprep.subr.mxu0 0.0
  %2111 = vmatpush1.msra.mxu0 0.0
  %2112 = vmatprep.subr.mxu0 0.0
  %2113 = vmatpush1.msra.mxu0 0.0
  %2114 = vmatprep.subr.mxu0 0.0
  %2115 = vmatpush1.msra.mxu0 0.0
  %2116 = vmatprep.subr.mxu0 0.0
  %2117 = vmatpush1.msra.mxu0 0.0
  %2118 = vmatprep.subr.mxu0 0.0
  %2119 = vmatpush1.msra.mxu0 0.0
  %2120 = vmatprep.subr.mxu0 0.0
  %2121 = vmatpush1.msra.mxu0 0.0
  %2122 = vmatprep.subr.mxu0 0.0
  %2123 = vmatpush1.msra.mxu0 0.0
  %2124 = vmatprep.subr.mxu0 0.0
  %2125 = vmatpush1.msra.mxu0 0.0
  %2126 = vmatprep.subr.mxu0 0.0
  %2127 = vmatpush1.msra.mxu0 0.0
  %2128 = vmatprep.mubr.f32.mxu0 0.0
  %2129 = vmatmul.mubr.f32.gmra.mrb[0].mxu0 %v2062
  %v2130 = vpop.f32.mrb[0].mxu0
  %v2131 = vadd.f32 %v2060, %v2130
  %v2132 = vpop.f32.mrb[0].mxu0
  %2133 = vdwg.mxu0
  %v2134 = vxor.u32 %v2131, 2147483648
  %v2135 = vmul.f32 %v2134, 1.442695
  %v2136 = vpow.pop %v2135
  %v2137 = vadd.f32 %v2136, 1.0
  %v2138 = vrcp.pop %v2137
  %v2139 = vmul.f32 1.0, %v2138
  %vm2140 = vcmask 7168
  %2141 = vst.msk [vmem:[%s5] sm:$0xff] %vm2140, %v2139
  // Predicated region
  $region22: #{quora_forward_pallas.1} parent=0 // pred_check
    _
  $region23: #{quora_forward_pallas.1} parent=0 // pred_check_branch
    %2143 = sbr.rel (0) target = $region25
  $region24: #{quora_forward_pallas.1} parent=0 // pred_region
    _
  $region25: #{quora_forward_pallas.1} parent=0 // pred_fallthru
    _
  // Predicated region
  $region26: #{quora_forward_pallas.1} parent=0 // pred_check
    _
  $region27: #{quora_forward_pallas.1} parent=0 // pred_check_branch
    %2145 = sbr.rel (0) target = $region29
  $region28: #{quora_forward_pallas.1} parent=0 // pred_region
    _
  $region29: #{quora_forward_pallas.1} parent=0 // pred_fallthru
    _

</llo_original>
